<compile_context>
chip_gen: v7x
topology: tpu7x:2x2x1
jax: 0.10.0
libtpu: 0.0.40
codegen_flags: <defaults>
</compile_context>

<pallas_src>
import functools

import jax
import jax.numpy as jnp
from jax.experimental import pallas as pl
from jax.experimental.pallas import tpu as pltpu


def _lstm_deep_kernel(g0_ref, wih_ref, whh_ref, b_ref, wlin_ref, blin_ref,
                      out_ref, hbuf_ref, *, n_layers, n_hidden, batch, seq):
    B, T, H, L = batch, seq, n_hidden, n_layers
    G = 4 * H

    # Lane mask selecting the cell ("g") gate lanes [2H, 3H).  Built once, reused
    # by every cell (hoisted out of all loops -- JAX does not CSE broadcasts).
    lane = jax.lax.broadcasted_iota(jnp.int32, (B, G), 1)
    g_mask = (lane >= 2 * H) & (lane < 3 * H)

    h_last = None
    for l in range(L):                       # static unroll over layers (L small)
        # ---- batched input projection for this layer: ONE (T*B, G) MXU matmul,
        # ---- off the serial recurrence path; bias pre-added once per layer.
        if l == 0:
            gates_in = g0_ref[...]                               # (T*B, G), bias folded in
        else:
            gates_in = (jnp.dot(hbuf_ref[...], wih_ref[l - 1],
                                preferred_element_type=jnp.float32)
                        + b_ref[l:l + 1, :])                     # (T*B, G)

        whh_l = whh_ref[l]                   # (G, G), zero rows >= H; hoisted per layer
        is_last = l == L - 1

        # h / c are kept full 128-lane width; lanes >= H carry bounded garbage that
        # only ever multiplies zero weight rows, so it never reaches real lanes.
        h = jnp.zeros((B, G), jnp.float32)
        c = jnp.zeros((B, G), jnp.float32)
        for t in range(T):                   # static unroll over time (T small)
            # Serial path: one MXU op per cell.
            gates = gates_in[t * B:(t + 1) * B, :] + jnp.dot(
                h, whh_l, preferred_element_type=jnp.float32)    # (B, G) = [i|f|g|o]
            # Full-width activations: 1 sigmoid + 1 tanh EUP push instead of 4.
            act = jnp.where(g_mask, jnp.tanh(gates), jax.nn.sigmoid(gates))
            # Align f/g/o gate lanes onto [0, H) with XLU rotates (jnp.roll semantics:
            # result[k] = act[(k - shift) mod G]).
            f_al = pltpu.roll(act, 3 * H, 1)     # forget gate
            g_al = pltpu.roll(act, 2 * H, 1)     # cell   gate
            o_al = pltpu.roll(act, 1 * H, 1)     # output gate
            c = f_al * c + act * g_al            # act lanes [0, H) = input gate
            h = o_al * jnp.tanh(c)
            if not is_last:
                # Stash this layer's hidden states for the next layer's batched
                # projection (lane-dense 128-wide store).
                hbuf_ref[t * B:(t + 1) * B, :] = h
        if is_last:
            h_last = h

    # ---- head: relu(h_T @ W_lin + b) as a VPU multiply + lane reduction (no N=1
    # MXU matmul).  wlin lanes >= H are zero, masking h_last's garbage lanes.
    y = jnp.sum(h_last * wlin_ref[...], axis=1, keepdims=True) + blin_ref[...]
    out_ref[...] = jnp.maximum(y, 0.0)


def lstm_deep_predictor(x, kp, *, n_layers, n_hidden):
    B, T, F = x.shape
    H = n_hidden
    G = 4 * H

    # Layer-0 input projection (no recurrence dependence) as a plain XLA matmul,
    # fused under jit.  Row order is t*B + b, matching the in-kernel buffers.
    xt = jnp.transpose(x, (1, 0, 2)).reshape(T * B, F)
    g0 = jnp.dot(xt, kp["wih0_T"], preferred_element_type=jnp.float32) + kp["b"][0]

    vmem = pl.BlockSpec(memory_space=pltpu.MemorySpace.VMEM)
    kernel = functools.partial(_lstm_deep_kernel, n_layers=n_layers,
                               n_hidden=H, batch=B, seq=T)
    # NOTE: at B=2 a grid would only add per-step overhead; if batch grows (>=16),
    # add a leading batch grid axis with dimension_semantics=("parallel",) so
    # v7x's two TensorCores can split it.
    return pl.pallas_call(
        kernel,
        out_shape=jax.ShapeDtypeStruct((B, 1), jnp.float32),
        in_specs=[vmem] * 6,
        out_specs=vmem,
        scratch_shapes=[pltpu.VMEM((T * B, G), jnp.float32)],
    )(g0, kp["wih_pad"], kp["whh_pad"], kp["b"], kp["wlin_row"], kp["b_lin"])


def init_params(key, n_features, n_hidden, n_layers):
    """Deterministic init mimicking PyTorch's uniform(-1/sqrt(H), 1/sqrt(H))."""
    H, F, L = n_hidden, n_features, n_layers
    bound = 1.0 / (H ** 0.5)
    ks = jax.random.split(key, 4 * L + 2)

    def u(k, shape):
        return jax.random.uniform(k, shape, jnp.float32, -bound, bound)

    wih0 = u(ks[0], (4 * H, F))                                  # layer 0: (4H, F)
    wih_rest = jnp.stack([u(ks[1 + l], (4 * H, H)) for l in range(L - 1)]) \
        if L > 1 else jnp.zeros((0, 4 * H, H), jnp.float32)      # layers 1..L-1
    whh = jnp.stack([u(ks[L + l], (4 * H, H)) for l in range(L)])
    b_ih = jnp.stack([u(ks[2 * L + l], (4 * H,)) for l in range(L)])
    b_hh = jnp.stack([u(ks[3 * L + l], (4 * H,)) for l in range(L)])
    wlin = u(ks[4 * L], (1, H))
    blin = u(ks[4 * L + 1], (1,))

    return {
        "wih0_T": wih0.T,                                # (F, 4H)
        "wih_T": jnp.transpose(wih_rest, (0, 2, 1)),     # (L-1, H, 4H)
        "whh_T": jnp.transpose(whh, (0, 2, 1)),          # (L, H, 4H)
        "b_ih": b_ih,                                    # (L, 4H)
        "b_hh": b_hh,                                    # (L, 4H)
        "wlin_T": wlin.T,                                # (H, 1)
        "b_lin": blin.reshape(1, 1),                     # (1, 1)
    }


def prepare_kernel_params(p, *, n_hidden, n_layers):
    """Pre-add biases and zero-pad weights to (4H, 4H) for the padded-lane kernel."""
    H, L = n_hidden, n_layers
    G = 4 * H

    def pad_rows(w):  # (H, G) -> (G, G), zero rows H..G-1
        return jnp.concatenate([w, jnp.zeros((G - H, G), w.dtype)], axis=0)

    b = p["b_ih"] + p["b_hh"]                                      # (L, G)
    if L > 1:
        wih_pad = jnp.stack([pad_rows(p["wih_T"][l]) for l in range(L - 1)])
    else:
        wih_pad = jnp.zeros((1, G, G), jnp.float32)                # unused dummy
    whh_pad = jnp.stack([pad_rows(p["whh_T"][l]) for l in range(L)])
    wlin_row = jnp.concatenate(
        [p["wlin_T"][:, 0], jnp.zeros((G - H,), jnp.float32)]).reshape(1, G)
    return {
        "wih0_T": p["wih0_T"],          # (F, 4H) -- layer-0 projection in wrapper
        "b": b,                         # (L, 4H) pre-summed biases
        "wih_pad": wih_pad,             # (max(L-1,1), 4H, 4H)
        "whh_pad": whh_pad,             # (L, 4H, 4H)
        "wlin_row": wlin_row,           # (1, 4H) zero-padded head row
        "b_lin": p["b_lin"],            # (1, 1)
    }


def reference_forward(x, p, *, n_layers, n_hidden):
    """Pure-JAX reference with identical math (PyTorch LSTM semantics)."""
    B, T, F = x.shape
    H = n_hidden
    h = [jnp.zeros((B, H), jnp.float32) for _ in range(n_layers)]
    c = [jnp.zeros((B, H), jnp.float32) for _ in range(n_layers)]
    for t in range(T):
        inp = x[:, t, :]
        for l in range(n_layers):
            w_in = p["wih0_T"] if l == 0 else p["wih_T"][l - 1]
            gates = inp @ w_in + h[l] @ p["whh_T"][l] + p["b_ih"][l] + p["b_hh"][l]
            i_g = jax.nn.sigmoid(gates[:, 0 * H:1 * H])
            f_g = jax.nn.sigmoid(gates[:, 1 * H:2 * H])
            g_g = jnp.tanh(gates[:, 2 * H:3 * H])
            o_g = jax.nn.sigmoid(gates[:, 3 * H:4 * H])
            c[l] = f_g * c[l] + i_g * g_g
            h[l] = o_g * jnp.tanh(c[l])
            inp = h[l]
    y = h[-1] @ p["wlin_T"] + p["b_lin"]
    return jnp.maximum(y, 0.0)


if __name__ == "__main__":
    # Small shapes consistent with the module: (batch, n_history, n_features)
    batch, n_history, n_features = 2, 8, 4
    n_hidden, n_layers = 32, 4

    key = jax.random.PRNGKey(0)
    kx, kparam = jax.random.split(key)
    x = jax.random.normal(kx, (batch, n_history, n_features), jnp.float32)

    raw = init_params(kparam, n_features, n_hidden, n_layers)
    kparams = prepare_kernel_params(raw, n_hidden=n_hidden, n_layers=n_layers)

    fwd = jax.jit(functools.partial(lstm_deep_predictor,
                                    n_layers=n_layers, n_hidden=n_hidden))
    out = jax.block_until_ready(fwd(x, kparams))

    ref = reference_forward(x, raw, n_layers=n_layers, n_hidden=n_hidden)
    assert out.shape == (batch, 1), out.shape
    assert jnp.allclose(out, ref, rtol=1e-4, atol=1e-4), (out, ref)

    print("KERNEL_OK")
</pallas_src>

<mosaic_0001>
module attributes {stable_mosaic.version = 11 : i64} {
  func.func @_lstm_deep_kernel(%arg0: memref<16x128xf32, #tpu.memory_space<vmem>>, %arg1: memref<3x128x128xf32, #tpu.memory_space<vmem>>, %arg2: memref<4x128x128xf32, #tpu.memory_space<vmem>>, %arg3: memref<4x128xf32, #tpu.memory_space<vmem>>, %arg4: memref<1x128xf32, #tpu.memory_space<vmem>>, %arg5: memref<1x1xf32, #tpu.memory_space<vmem>>, %arg6: memref<2x1xf32, #tpu.memory_space<vmem>>, %arg7: memref<16x128xf32, #tpu.memory_space<vmem>>) attributes {dimension_semantics = [], scalar_prefetch = 0 : i64, scratch_operands = 1 : i64, tpu.core_type = #tpu.core_type<tc>} {
    %0 = tpu.iota {dimensions = array<i32: 1>} : vector<2x128xi32>
    %c64_i32 = arith.constant 64 : i32
    %1 = vector.broadcast %c64_i32 : i32 to vector<2x128xi32>
    %2 = arith.cmpi sge, %0, %1 : vector<2x128xi32>
    %c96_i32 = arith.constant 96 : i32
    %3 = vector.broadcast %c96_i32 : i32 to vector<2x128xi32>
    %4 = arith.cmpi slt, %0, %3 : vector<2x128xi32>
    %5 = arith.andi %2, %4 : vector<2x128xi1>
    %c0 = arith.constant 0 : index
    %c0_0 = arith.constant 0 : index
    %6 = vector.load %arg0[%c0, %c0_0] : memref<16x128xf32, #tpu.memory_space<vmem>>, vector<16x128xf32>
    %c0_1 = arith.constant 0 : index
    %c0_2 = arith.constant 0 : index
    %c0_3 = arith.constant 0 : index
    %7 = vector.load %arg2[%c0_1, %c0_2, %c0_3] : memref<4x128x128xf32, #tpu.memory_space<vmem>>, vector<1x128x128xf32>
    %8 = vector.shape_cast %7 : vector<1x128x128xf32> to vector<128x128xf32>
    %cst = arith.constant 0.000000e+00 : f32
    %9 = vector.broadcast %cst : f32 to vector<2x128xf32>
    %cst_4 = arith.constant 0.000000e+00 : f32
    %10 = vector.broadcast %cst_4 : f32 to vector<2x128xf32>
    %11 = vector.extract_strided_slice %6 {offsets = [0, 0], sizes = [2, 128], strides = [1, 1]} : vector<16x128xf32> to vector<2x128xf32>
    %cst_5 = arith.constant dense<0.000000e+00> : vector<2x128xf32>
    %12 = tpu.matmul %9, %8, %cst_5 {dimension_numbers = #tpu.dot_dimension_numbers<[1], [0], [0], [1], [0, 0, 1, 1], [], []>} : vector<2x128xf32>, vector<128x128xf32>, vector<2x128xf32> -> vector<2x128xf32>
    %13 = arith.addf %11, %12 : vector<2x128xf32>
    %14 = math.tanh %13 : vector<2x128xf32>
    %15 = arith.negf %13 : vector<2x128xf32>
    %16 = math.exp %15 : vector<2x128xf32>
    %cst_6 = arith.constant 1.000000e+00 : f32
    %17 = vector.broadcast %cst_6 : f32 to vector<2x128xf32>
    %18 = arith.addf %17, %16 : vector<2x128xf32>
    %19 = arith.divf %17, %18 : vector<2x128xf32>
    %20 = arith.select %5, %14, %19 : vector<2x128xi1>, vector<2x128xf32>
    %c96_i32_7 = arith.constant 96 : i32
    %21 = tpu.dynamic_rotate %20 by %c96_i32_7 dim 1 : vector<2x128xf32>, i32 -> vector<2x128xf32>
    %c64_i32_8 = arith.constant 64 : i32
    %22 = tpu.dynamic_rotate %20 by %c64_i32_8 dim 1 : vector<2x128xf32>, i32 -> vector<2x128xf32>
    %c32_i32 = arith.constant 32 : i32
    %23 = tpu.dynamic_rotate %20 by %c32_i32 dim 1 : vector<2x128xf32>, i32 -> vector<2x128xf32>
    %24 = arith.mulf %21, %10 : vector<2x128xf32>
    %25 = arith.mulf %20, %22 : vector<2x128xf32>
    %26 = arith.addf %24, %25 : vector<2x128xf32>
    %27 = math.tanh %26 : vector<2x128xf32>
    %28 = arith.mulf %23, %27 : vector<2x128xf32>
    %c0_9 = arith.constant 0 : index
    %c0_10 = arith.constant 0 : index
    %29 = vector.load %arg7[%c0_9, %c0_10] : memref<16x128xf32, #tpu.memory_space<vmem>>, vector<2x128xf32>
    tpu.vector_store %arg7[%c0_9, %c0_10], %28 {strides = array<i32>} : memref<16x128xf32, #tpu.memory_space<vmem>>, vector<2x128xf32>,
    %30 = vector.extract_strided_slice %6 {offsets = [2, 0], sizes = [2, 128], strides = [1, 1]} : vector<16x128xf32> to vector<2x128xf32>
    %cst_11 = arith.constant dense<0.000000e+00> : vector<2x128xf32>
    %31 = tpu.matmul %28, %8, %cst_11 {dimension_numbers = #tpu.dot_dimension_numbers<[1], [0], [0], [1], [0, 0, 1, 1], [], []>} : vector<2x128xf32>, vector<128x128xf32>, vector<2x128xf32> -> vector<2x128xf32>
    %32 = arith.addf %30, %31 : vector<2x128xf32>
    %33 = math.tanh %32 : vector<2x128xf32>
    %34 = arith.negf %32 : vector<2x128xf32>
    %35 = math.exp %34 : vector<2x128xf32>
    %cst_12 = arith.constant 1.000000e+00 : f32
    %36 = vector.broadcast %cst_12 : f32 to vector<2x128xf32>
    %37 = arith.addf %36, %35 : vector<2x128xf32>
    %38 = arith.divf %36, %37 : vector<2x128xf32>
    %39 = arith.select %5, %33, %38 : vector<2x128xi1>, vector<2x128xf32>
    %c96_i32_13 = arith.constant 96 : i32
    %40 = tpu.dynamic_rotate %39 by %c96_i32_13 dim 1 : vector<2x128xf32>, i32 -> vector<2x128xf32>
    %c64_i32_14 = arith.constant 64 : i32
    %41 = tpu.dynamic_rotate %39 by %c64_i32_14 dim 1 : vector<2x128xf32>, i32 -> vector<2x128xf32>
    %c32_i32_15 = arith.constant 32 : i32
    %42 = tpu.dynamic_rotate %39 by %c32_i32_15 dim 1 : vector<2x128xf32>, i32 -> vector<2x128xf32>
    %43 = arith.mulf %40, %26 : vector<2x128xf32>
    %44 = arith.mulf %39, %41 : vector<2x128xf32>
    %45 = arith.addf %43, %44 : vector<2x128xf32>
    %46 = math.tanh %45 : vector<2x128xf32>
    %47 = arith.mulf %42, %46 : vector<2x128xf32>
    %c2 = arith.constant 2 : index
    %c0_16 = arith.constant 0 : index
    %48 = vector.load %arg7[%c2, %c0_16] : memref<16x128xf32, #tpu.memory_space<vmem>>, vector<2x128xf32>
    tpu.vector_store %arg7[%c2, %c0_16], %47 {strides = array<i32>} : memref<16x128xf32, #tpu.memory_space<vmem>>, vector<2x128xf32>,
    %49 = vector.extract_strided_slice %6 {offsets = [4, 0], sizes = [2, 128], strides = [1, 1]} : vector<16x128xf32> to vector<2x128xf32>
    %cst_17 = arith.constant dense<0.000000e+00> : vector<2x128xf32>
    %50 = tpu.matmul %47, %8, %cst_17 {dimension_numbers = #tpu.dot_dimension_numbers<[1], [0], [0], [1], [0, 0, 1, 1], [], []>} : vector<2x128xf32>, vector<128x128xf32>, vector<2x128xf32> -> vector<2x128xf32>
    %51 = arith.addf %49, %50 : vector<2x128xf32>
    %52 = math.tanh %51 : vector<2x128xf32>
    %53 = arith.negf %51 : vector<2x128xf32>
    %54 = math.exp %53 : vector<2x128xf32>
    %cst_18 = arith.constant 1.000000e+00 : f32
    %55 = vector.broadcast %cst_18 : f32 to vector<2x128xf32>
    %56 = arith.addf %55, %54 : vector<2x128xf32>
    %57 = arith.divf %55, %56 : vector<2x128xf32>
    %58 = arith.select %5, %52, %57 : vector<2x128xi1>, vector<2x128xf32>
    %c96_i32_19 = arith.constant 96 : i32
    %59 = tpu.dynamic_rotate %58 by %c96_i32_19 dim 1 : vector<2x128xf32>, i32 -> vector<2x128xf32>
    %c64_i32_20 = arith.constant 64 : i32
    %60 = tpu.dynamic_rotate %58 by %c64_i32_20 dim 1 : vector<2x128xf32>, i32 -> vector<2x128xf32>
    %c32_i32_21 = arith.constant 32 : i32
    %61 = tpu.dynamic_rotate %58 by %c32_i32_21 dim 1 : vector<2x128xf32>, i32 -> vector<2x128xf32>
    %62 = arith.mulf %59, %45 : vector<2x128xf32>
    %63 = arith.mulf %58, %60 : vector<2x128xf32>
    %64 = arith.addf %62, %63 : vector<2x128xf32>
    %65 = math.tanh %64 : vector<2x128xf32>
    %66 = arith.mulf %61, %65 : vector<2x128xf32>
    %c4 = arith.constant 4 : index
    %c0_22 = arith.constant 0 : index
    %67 = vector.load %arg7[%c4, %c0_22] : memref<16x128xf32, #tpu.memory_space<vmem>>, vector<2x128xf32>
    tpu.vector_store %arg7[%c4, %c0_22], %66 {strides = array<i32>} : memref<16x128xf32, #tpu.memory_space<vmem>>, vector<2x128xf32>,
    %68 = vector.extract_strided_slice %6 {offsets = [6, 0], sizes = [2, 128], strides = [1, 1]} : vector<16x128xf32> to vector<2x128xf32>
    %cst_23 = arith.constant dense<0.000000e+00> : vector<2x128xf32>
    %69 = tpu.matmul %66, %8, %cst_23 {dimension_numbers = #tpu.dot_dimension_numbers<[1], [0], [0], [1], [0, 0, 1, 1], [], []>} : vector<2x128xf32>, vector<128x128xf32>, vector<2x128xf32> -> vector<2x128xf32>
    %70 = arith.addf %68, %69 : vector<2x128xf32>
    %71 = math.tanh %70 : vector<2x128xf32>
    %72 = arith.negf %70 : vector<2x128xf32>
    %73 = math.exp %72 : vector<2x128xf32>
    %cst_24 = arith.constant 1.000000e+00 : f32
    %74 = vector.broadcast %cst_24 : f32 to vector<2x128xf32>
    %75 = arith.addf %74, %73 : vector<2x128xf32>
    %76 = arith.divf %74, %75 : vector<2x128xf32>
    %77 = arith.select %5, %71, %76 : vector<2x128xi1>, vector<2x128xf32>
    %c96_i32_25 = arith.constant 96 : i32
    %78 = tpu.dynamic_rotate %77 by %c96_i32_25 dim 1 : vector<2x128xf32>, i32 -> vector<2x128xf32>
    %c64_i32_26 = arith.constant 64 : i32
    %79 = tpu.dynamic_rotate %77 by %c64_i32_26 dim 1 : vector<2x128xf32>, i32 -> vector<2x128xf32>
    %c32_i32_27 = arith.constant 32 : i32
    %80 = tpu.dynamic_rotate %77 by %c32_i32_27 dim 1 : vector<2x128xf32>, i32 -> vector<2x128xf32>
    %81 = arith.mulf %78, %64 : vector<2x128xf32>
    %82 = arith.mulf %77, %79 : vector<2x128xf32>
    %83 = arith.addf %81, %82 : vector<2x128xf32>
    %84 = math.tanh %83 : vector<2x128xf32>
    %85 = arith.mulf %80, %84 : vector<2x128xf32>
    %c6 = arith.constant 6 : index
    %c0_28 = arith.constant 0 : index
    %86 = vector.load %arg7[%c6, %c0_28] : memref<16x128xf32, #tpu.memory_space<vmem>>, vector<2x128xf32>
    tpu.vector_store %arg7[%c6, %c0_28], %85 {strides = array<i32>} : memref<16x128xf32, #tpu.memory_space<vmem>>, vector<2x128xf32>,
    %87 = vector.extract_strided_slice %6 {offsets = [8, 0], sizes = [2, 128], strides = [1, 1]} : vector<16x128xf32> to vector<2x128xf32>
    %cst_29 = arith.constant dense<0.000000e+00> : vector<2x128xf32>
    %88 = tpu.matmul %85, %8, %cst_29 {dimension_numbers = #tpu.dot_dimension_numbers<[1], [0], [0], [1], [0, 0, 1, 1], [], []>} : vector<2x128xf32>, vector<128x128xf32>, vector<2x128xf32> -> vector<2x128xf32>
    %89 = arith.addf %87, %88 : vector<2x128xf32>
    %90 = math.tanh %89 : vector<2x128xf32>
    %91 = arith.negf %89 : vector<2x128xf32>
    %92 = math.exp %91 : vector<2x128xf32>
    %cst_30 = arith.constant 1.000000e+00 : f32
    %93 = vector.broadcast %cst_30 : f32 to vector<2x128xf32>
    %94 = arith.addf %93, %92 : vector<2x128xf32>
    %95 = arith.divf %93, %94 : vector<2x128xf32>
    %96 = arith.select %5, %90, %95 : vector<2x128xi1>, vector<2x128xf32>
    %c96_i32_31 = arith.constant 96 : i32
    %97 = tpu.dynamic_rotate %96 by %c96_i32_31 dim 1 : vector<2x128xf32>, i32 -> vector<2x128xf32>
    %c64_i32_32 = arith.constant 64 : i32
    %98 = tpu.dynamic_rotate %96 by %c64_i32_32 dim 1 : vector<2x128xf32>, i32 -> vector<2x128xf32>
    %c32_i32_33 = arith.constant 32 : i32
    %99 = tpu.dynamic_rotate %96 by %c32_i32_33 dim 1 : vector<2x128xf32>, i32 -> vector<2x128xf32>
    %100 = arith.mulf %97, %83 : vector<2x128xf32>
    %101 = arith.mulf %96, %98 : vector<2x128xf32>
    %102 = arith.addf %100, %101 : vector<2x128xf32>
    %103 = math.tanh %102 : vector<2x128xf32>
    %104 = arith.mulf %99, %103 : vector<2x128xf32>
    %c8 = arith.constant 8 : index
    %c0_34 = arith.constant 0 : index
    %105 = vector.load %arg7[%c8, %c0_34] : memref<16x128xf32, #tpu.memory_space<vmem>>, vector<2x128xf32>
    tpu.vector_store %arg7[%c8, %c0_34], %104 {strides = array<i32>} : memref<16x128xf32, #tpu.memory_space<vmem>>, vector<2x128xf32>,
    %106 = vector.extract_strided_slice %6 {offsets = [10, 0], sizes = [2, 128], strides = [1, 1]} : vector<16x128xf32> to vector<2x128xf32>
    %cst_35 = arith.constant dense<0.000000e+00> : vector<2x128xf32>
    %107 = tpu.matmul %104, %8, %cst_35 {dimension_numbers = #tpu.dot_dimension_numbers<[1], [0], [0], [1], [0, 0, 1, 1], [], []>} : vector<2x128xf32>, vector<128x128xf32>, vector<2x128xf32> -> vector<2x128xf32>
    %108 = arith.addf %106, %107 : vector<2x128xf32>
    %109 = math.tanh %108 : vector<2x128xf32>
    %110 = arith.negf %108 : vector<2x128xf32>
    %111 = math.exp %110 : vector<2x128xf32>
    %cst_36 = arith.constant 1.000000e+00 : f32
    %112 = vector.broadcast %cst_36 : f32 to vector<2x128xf32>
    %113 = arith.addf %112, %111 : vector<2x128xf32>
    %114 = arith.divf %112, %113 : vector<2x128xf32>
    %115 = arith.select %5, %109, %114 : vector<2x128xi1>, vector<2x128xf32>
    %c96_i32_37 = arith.constant 96 : i32
    %116 = tpu.dynamic_rotate %115 by %c96_i32_37 dim 1 : vector<2x128xf32>, i32 -> vector<2x128xf32>
    %c64_i32_38 = arith.constant 64 : i32
    %117 = tpu.dynamic_rotate %115 by %c64_i32_38 dim 1 : vector<2x128xf32>, i32 -> vector<2x128xf32>
    %c32_i32_39 = arith.constant 32 : i32
    %118 = tpu.dynamic_rotate %115 by %c32_i32_39 dim 1 : vector<2x128xf32>, i32 -> vector<2x128xf32>
    %119 = arith.mulf %116, %102 : vector<2x128xf32>
    %120 = arith.mulf %115, %117 : vector<2x128xf32>
    %121 = arith.addf %119, %120 : vector<2x128xf32>
    %122 = math.tanh %121 : vector<2x128xf32>
    %123 = arith.mulf %118, %122 : vector<2x128xf32>
    %c10 = arith.constant 10 : index
    %c0_40 = arith.constant 0 : index
    %124 = vector.load %arg7[%c10, %c0_40] : memref<16x128xf32, #tpu.memory_space<vmem>>, vector<2x128xf32>
    tpu.vector_store %arg7[%c10, %c0_40], %123 {strides = array<i32>} : memref<16x128xf32, #tpu.memory_space<vmem>>, vector<2x128xf32>,
    %125 = vector.extract_strided_slice %6 {offsets = [12, 0], sizes = [2, 128], strides = [1, 1]} : vector<16x128xf32> to vector<2x128xf32>
    %cst_41 = arith.constant dense<0.000000e+00> : vector<2x128xf32>
    %126 = tpu.matmul %123, %8, %cst_41 {dimension_numbers = #tpu.dot_dimension_numbers<[1], [0], [0], [1], [0, 0, 1, 1], [], []>} : vector<2x128xf32>, vector<128x128xf32>, vector<2x128xf32> -> vector<2x128xf32>
    %127 = arith.addf %125, %126 : vector<2x128xf32>
    %128 = math.tanh %127 : vector<2x128xf32>
    %129 = arith.negf %127 : vector<2x128xf32>
    %130 = math.exp %129 : vector<2x128xf32>
    %cst_42 = arith.constant 1.000000e+00 : f32
    %131 = vector.broadcast %cst_42 : f32 to vector<2x128xf32>
    %132 = arith.addf %131, %130 : vector<2x128xf32>
    %133 = arith.divf %131, %132 : vector<2x128xf32>
    %134 = arith.select %5, %128, %133 : vector<2x128xi1>, vector<2x128xf32>
    %c96_i32_43 = arith.constant 96 : i32
    %135 = tpu.dynamic_rotate %134 by %c96_i32_43 dim 1 : vector<2x128xf32>, i32 -> vector<2x128xf32>
    %c64_i32_44 = arith.constant 64 : i32
    %136 = tpu.dynamic_rotate %134 by %c64_i32_44 dim 1 : vector<2x128xf32>, i32 -> vector<2x128xf32>
    %c32_i32_45 = arith.constant 32 : i32
    %137 = tpu.dynamic_rotate %134 by %c32_i32_45 dim 1 : vector<2x128xf32>, i32 -> vector<2x128xf32>
    %138 = arith.mulf %135, %121 : vector<2x128xf32>
    %139 = arith.mulf %134, %136 : vector<2x128xf32>
    %140 = arith.addf %138, %139 : vector<2x128xf32>
    %141 = math.tanh %140 : vector<2x128xf32>
    %142 = arith.mulf %137, %141 : vector<2x128xf32>
    %c12 = arith.constant 12 : index
    %c0_46 = arith.constant 0 : index
    %143 = vector.load %arg7[%c12, %c0_46] : memref<16x128xf32, #tpu.memory_space<vmem>>, vector<2x128xf32>
    tpu.vector_store %arg7[%c12, %c0_46], %142 {strides = array<i32>} : memref<16x128xf32, #tpu.memory_space<vmem>>, vector<2x128xf32>,
    %144 = vector.extract_strided_slice %6 {offsets = [14, 0], sizes = [2, 128], strides = [1, 1]} : vector<16x128xf32> to vector<2x128xf32>
    %cst_47 = arith.constant dense<0.000000e+00> : vector<2x128xf32>
    %145 = tpu.matmul %142, %8, %cst_47 {dimension_numbers = #tpu.dot_dimension_numbers<[1], [0], [0], [1], [0, 0, 1, 1], [], []>} : vector<2x128xf32>, vector<128x128xf32>, vector<2x128xf32> -> vector<2x128xf32>
    %146 = arith.addf %144, %145 : vector<2x128xf32>
    %147 = math.tanh %146 : vector<2x128xf32>
    %148 = arith.negf %146 : vector<2x128xf32>
    %149 = math.exp %148 : vector<2x128xf32>
    %cst_48 = arith.constant 1.000000e+00 : f32
    %150 = vector.broadcast %cst_48 : f32 to vector<2x128xf32>
    %151 = arith.addf %150, %149 : vector<2x128xf32>
    %152 = arith.divf %150, %151 : vector<2x128xf32>
    %153 = arith.select %5, %147, %152 : vector<2x128xi1>, vector<2x128xf32>
    %c96_i32_49 = arith.constant 96 : i32
    %154 = tpu.dynamic_rotate %153 by %c96_i32_49 dim 1 : vector<2x128xf32>, i32 -> vector<2x128xf32>
    %c64_i32_50 = arith.constant 64 : i32
    %155 = tpu.dynamic_rotate %153 by %c64_i32_50 dim 1 : vector<2x128xf32>, i32 -> vector<2x128xf32>
    %c32_i32_51 = arith.constant 32 : i32
    %156 = tpu.dynamic_rotate %153 by %c32_i32_51 dim 1 : vector<2x128xf32>, i32 -> vector<2x128xf32>
    %157 = arith.mulf %154, %140 : vector<2x128xf32>
    %158 = arith.mulf %153, %155 : vector<2x128xf32>
    %159 = arith.addf %157, %158 : vector<2x128xf32>
    %160 = math.tanh %159 : vector<2x128xf32>
    %161 = arith.mulf %156, %160 : vector<2x128xf32>
    %c14 = arith.constant 14 : index
    %c0_52 = arith.constant 0 : index
    %162 = vector.load %arg7[%c14, %c0_52] : memref<16x128xf32, #tpu.memory_space<vmem>>, vector<2x128xf32>
    tpu.vector_store %arg7[%c14, %c0_52], %161 {strides = array<i32>} : memref<16x128xf32, #tpu.memory_space<vmem>>, vector<2x128xf32>,
    %c0_53 = arith.constant 0 : index
    %c0_54 = arith.constant 0 : index
    %163 = vector.load %arg7[%c0_53, %c0_54] : memref<16x128xf32, #tpu.memory_space<vmem>>, vector<16x128xf32>
    %c0_55 = arith.constant 0 : index
    %c0_56 = arith.constant 0 : index
    %c0_57 = arith.constant 0 : index
    %164 = vector.load %arg1[%c0_55, %c0_56, %c0_57] : memref<3x128x128xf32, #tpu.memory_space<vmem>>, vector<1x128x128xf32>
    %165 = vector.shape_cast %164 : vector<1x128x128xf32> to vector<128x128xf32>
    %cst_58 = arith.constant dense<0.000000e+00> : vector<16x128xf32>
    %166 = tpu.matmul %163, %165, %cst_58 {dimension_numbers = #tpu.dot_dimension_numbers<[1], [0], [0], [1], [0, 0, 1, 1], [], []>} : vector<16x128xf32>, vector<128x128xf32>, vector<16x128xf32> -> vector<16x128xf32>
    %c1 = arith.constant 1 : index
    %c0_59 = arith.constant 0 : index
    %167 = vector.load %arg3[%c1, %c0_59] : memref<4x128xf32, #tpu.memory_space<vmem>>, vector<1x128xf32>
    %168 = vector.broadcast %167 : vector<1x128xf32> to vector<16x128xf32>
    %169 = arith.addf %166, %168 : vector<16x128xf32>
    %c1_60 = arith.constant 1 : index
    %c0_61 = arith.constant 0 : index
    %c0_62 = arith.constant 0 : index
    %170 = vector.load %arg2[%c1_60, %c0_61, %c0_62] : memref<4x128x128xf32, #tpu.memory_space<vmem>>, vector<1x128x128xf32>
    %171 = vector.shape_cast %170 : vector<1x128x128xf32> to vector<128x128xf32>
    %cst_63 = arith.constant 0.000000e+00 : f32
    %172 = vector.broadcast %cst_63 : f32 to vector<2x128xf32>
    %cst_64 = arith.constant 0.000000e+00 : f32
    %173 = vector.broadcast %cst_64 : f32 to vector<2x128xf32>
    %174 = vector.extract_strided_slice %169 {offsets = [0, 0], sizes = [2, 128], strides = [1, 1]} : vector<16x128xf32> to vector<2x128xf32>
    %cst_65 = arith.constant dense<0.000000e+00> : vector<2x128xf32>
    %175 = tpu.matmul %172, %171, %cst_65 {dimension_numbers = #tpu.dot_dimension_numbers<[1], [0], [0], [1], [0, 0, 1, 1], [], []>} : vector<2x128xf32>, vector<128x128xf32>, vector<2x128xf32> -> vector<2x128xf32>
    %176 = arith.addf %174, %175 : vector<2x128xf32>
    %177 = math.tanh %176 : vector<2x128xf32>
    %178 = arith.negf %176 : vector<2x128xf32>
    %179 = math.exp %178 : vector<2x128xf32>
    %cst_66 = arith.constant 1.000000e+00 : f32
    %180 = vector.broadcast %cst_66 : f32 to vector<2x128xf32>
    %181 = arith.addf %180, %179 : vector<2x128xf32>
    %182 = arith.divf %180, %181 : vector<2x128xf32>
    %183 = arith.select %5, %177, %182 : vector<2x128xi1>, vector<2x128xf32>
    %c96_i32_67 = arith.constant 96 : i32
    %184 = tpu.dynamic_rotate %183 by %c96_i32_67 dim 1 : vector<2x128xf32>, i32 -> vector<2x128xf32>
    %c64_i32_68 = arith.constant 64 : i32
    %185 = tpu.dynamic_rotate %183 by %c64_i32_68 dim 1 : vector<2x128xf32>, i32 -> vector<2x128xf32>
    %c32_i32_69 = arith.constant 32 : i32
    %186 = tpu.dynamic_rotate %183 by %c32_i32_69 dim 1 : vector<2x128xf32>, i32 -> vector<2x128xf32>
    %187 = arith.mulf %184, %173 : vector<2x128xf32>
    %188 = arith.mulf %183, %185 : vector<2x128xf32>
    %189 = arith.addf %187, %188 : vector<2x128xf32>
    %190 = math.tanh %189 : vector<2x128xf32>
    %191 = arith.mulf %186, %190 : vector<2x128xf32>
    %c0_70 = arith.constant 0 : index
    %c0_71 = arith.constant 0 : index
    %192 = vector.load %arg7[%c0_70, %c0_71] : memref<16x128xf32, #tpu.memory_space<vmem>>, vector<2x128xf32>
    tpu.vector_store %arg7[%c0_70, %c0_71], %191 {strides = array<i32>} : memref<16x128xf32, #tpu.memory_space<vmem>>, vector<2x128xf32>,
    %193 = vector.extract_strided_slice %169 {offsets = [2, 0], sizes = [2, 128], strides = [1, 1]} : vector<16x128xf32> to vector<2x128xf32>
    %cst_72 = arith.constant dense<0.000000e+00> : vector<2x128xf32>
    %194 = tpu.matmul %191, %171, %cst_72 {dimension_numbers = #tpu.dot_dimension_numbers<[1], [0], [0], [1], [0, 0, 1, 1], [], []>} : vector<2x128xf32>, vector<128x128xf32>, vector<2x128xf32> -> vector<2x128xf32>
    %195 = arith.addf %193, %194 : vector<2x128xf32>
    %196 = math.tanh %195 : vector<2x128xf32>
    %197 = arith.negf %195 : vector<2x128xf32>
    %198 = math.exp %197 : vector<2x128xf32>
    %cst_73 = arith.constant 1.000000e+00 : f32
    %199 = vector.broadcast %cst_73 : f32 to vector<2x128xf32>
    %200 = arith.addf %199, %198 : vector<2x128xf32>
    %201 = arith.divf %199, %200 : vector<2x128xf32>
    %202 = arith.select %5, %196, %201 : vector<2x128xi1>, vector<2x128xf32>
    %c96_i32_74 = arith.constant 96 : i32
    %203 = tpu.dynamic_rotate %202 by %c96_i32_74 dim 1 : vector<2x128xf32>, i32 -> vector<2x128xf32>
    %c64_i32_75 = arith.constant 64 : i32
    %204 = tpu.dynamic_rotate %202 by %c64_i32_75 dim 1 : vector<2x128xf32>, i32 -> vector<2x128xf32>
    %c32_i32_76 = arith.constant 32 : i32
    %205 = tpu.dynamic_rotate %202 by %c32_i32_76 dim 1 : vector<2x128xf32>, i32 -> vector<2x128xf32>
    %206 = arith.mulf %203, %189 : vector<2x128xf32>
    %207 = arith.mulf %202, %204 : vector<2x128xf32>
    %208 = arith.addf %206, %207 : vector<2x128xf32>
    %209 = math.tanh %208 : vector<2x128xf32>
    %210 = arith.mulf %205, %209 : vector<2x128xf32>
    %c2_77 = arith.constant 2 : index
    %c0_78 = arith.constant 0 : index
    %211 = vector.load %arg7[%c2_77, %c0_78] : memref<16x128xf32, #tpu.memory_space<vmem>>, vector<2x128xf32>
    tpu.vector_store %arg7[%c2_77, %c0_78], %210 {strides = array<i32>} : memref<16x128xf32, #tpu.memory_space<vmem>>, vector<2x128xf32>,
    %212 = vector.extract_strided_slice %169 {offsets = [4, 0], sizes = [2, 128], strides = [1, 1]} : vector<16x128xf32> to vector<2x128xf32>
    %cst_79 = arith.constant dense<0.000000e+00> : vector<2x128xf32>
    %213 = tpu.matmul %210, %171, %cst_79 {dimension_numbers = #tpu.dot_dimension_numbers<[1], [0], [0], [1], [0, 0, 1, 1], [], []>} : vector<2x128xf32>, vector<128x128xf32>, vector<2x128xf32> -> vector<2x128xf32>
    %214 = arith.addf %212, %213 : vector<2x128xf32>
    %215 = math.tanh %214 : vector<2x128xf32>
    %216 = arith.negf %214 : vector<2x128xf32>
    %217 = math.exp %216 : vector<2x128xf32>
    %cst_80 = arith.constant 1.000000e+00 : f32
    %218 = vector.broadcast %cst_80 : f32 to vector<2x128xf32>
    %219 = arith.addf %218, %217 : vector<2x128xf32>
    %220 = arith.divf %218, %219 : vector<2x128xf32>
    %221 = arith.select %5, %215, %220 : vector<2x128xi1>, vector<2x128xf32>
    %c96_i32_81 = arith.constant 96 : i32
    %222 = tpu.dynamic_rotate %221 by %c96_i32_81 dim 1 : vector<2x128xf32>, i32 -> vector<2x128xf32>
    %c64_i32_82 = arith.constant 64 : i32
    %223 = tpu.dynamic_rotate %221 by %c64_i32_82 dim 1 : vector<2x128xf32>, i32 -> vector<2x128xf32>
    %c32_i32_83 = arith.constant 32 : i32
    %224 = tpu.dynamic_rotate %221 by %c32_i32_83 dim 1 : vector<2x128xf32>, i32 -> vector<2x128xf32>
    %225 = arith.mulf %222, %208 : vector<2x128xf32>
    %226 = arith.mulf %221, %223 : vector<2x128xf32>
    %227 = arith.addf %225, %226 : vector<2x128xf32>
    %228 = math.tanh %227 : vector<2x128xf32>
    %229 = arith.mulf %224, %228 : vector<2x128xf32>
    %c4_84 = arith.constant 4 : index
    %c0_85 = arith.constant 0 : index
    %230 = vector.load %arg7[%c4_84, %c0_85] : memref<16x128xf32, #tpu.memory_space<vmem>>, vector<2x128xf32>
    tpu.vector_store %arg7[%c4_84, %c0_85], %229 {strides = array<i32>} : memref<16x128xf32, #tpu.memory_space<vmem>>, vector<2x128xf32>,
    %231 = vector.extract_strided_slice %169 {offsets = [6, 0], sizes = [2, 128], strides = [1, 1]} : vector<16x128xf32> to vector<2x128xf32>
    %cst_86 = arith.constant dense<0.000000e+00> : vector<2x128xf32>
    %232 = tpu.matmul %229, %171, %cst_86 {dimension_numbers = #tpu.dot_dimension_numbers<[1], [0], [0], [1], [0, 0, 1, 1], [], []>} : vector<2x128xf32>, vector<128x128xf32>, vector<2x128xf32> -> vector<2x128xf32>
    %233 = arith.addf %231, %232 : vector<2x128xf32>
    %234 = math.tanh %233 : vector<2x128xf32>
    %235 = arith.negf %233 : vector<2x128xf32>
    %236 = math.exp %235 : vector<2x128xf32>
    %cst_87 = arith.constant 1.000000e+00 : f32
    %237 = vector.broadcast %cst_87 : f32 to vector<2x128xf32>
    %238 = arith.addf %237, %236 : vector<2x128xf32>
    %239 = arith.divf %237, %238 : vector<2x128xf32>
    %240 = arith.select %5, %234, %239 : vector<2x128xi1>, vector<2x128xf32>
    %c96_i32_88 = arith.constant 96 : i32
    %241 = tpu.dynamic_rotate %240 by %c96_i32_88 dim 1 : vector<2x128xf32>, i32 -> vector<2x128xf32>
    %c64_i32_89 = arith.constant 64 : i32
    %242 = tpu.dynamic_rotate %240 by %c64_i32_89 dim 1 : vector<2x128xf32>, i32 -> vector<2x128xf32>
    %c32_i32_90 = arith.constant 32 : i32
    %243 = tpu.dynamic_rotate %240 by %c32_i32_90 dim 1 : vector<2x128xf32>, i32 -> vector<2x128xf32>
    %244 = arith.mulf %241, %227 : vector<2x128xf32>
    %245 = arith.mulf %240, %242 : vector<2x128xf32>
    %246 = arith.addf %244, %245 : vector<2x128xf32>
    %247 = math.tanh %246 : vector<2x128xf32>
    %248 = arith.mulf %243, %247 : vector<2x128xf32>
    %c6_91 = arith.constant 6 : index
    %c0_92 = arith.constant 0 : index
    %249 = vector.load %arg7[%c6_91, %c0_92] : memref<16x128xf32, #tpu.memory_space<vmem>>, vector<2x128xf32>
    tpu.vector_store %arg7[%c6_91, %c0_92], %248 {strides = array<i32>} : memref<16x128xf32, #tpu.memory_space<vmem>>, vector<2x128xf32>,
    %250 = vector.extract_strided_slice %169 {offsets = [8, 0], sizes = [2, 128], strides = [1, 1]} : vector<16x128xf32> to vector<2x128xf32>
    %cst_93 = arith.constant dense<0.000000e+00> : vector<2x128xf32>
    %251 = tpu.matmul %248, %171, %cst_93 {dimension_numbers = #tpu.dot_dimension_numbers<[1], [0], [0], [1], [0, 0, 1, 1], [], []>} : vector<2x128xf32>, vector<128x128xf32>, vector<2x128xf32> -> vector<2x128xf32>
    %252 = arith.addf %250, %251 : vector<2x128xf32>
    %253 = math.tanh %252 : vector<2x128xf32>
    %254 = arith.negf %252 : vector<2x128xf32>
    %255 = math.exp %254 : vector<2x128xf32>
    %cst_94 = arith.constant 1.000000e+00 : f32
    %256 = vector.broadcast %cst_94 : f32 to vector<2x128xf32>
    %257 = arith.addf %256, %255 : vector<2x128xf32>
    %258 = arith.divf %256, %257 : vector<2x128xf32>
    %259 = arith.select %5, %253, %258 : vector<2x128xi1>, vector<2x128xf32>
    %c96_i32_95 = arith.constant 96 : i32
    %260 = tpu.dynamic_rotate %259 by %c96_i32_95 dim 1 : vector<2x128xf32>, i32 -> vector<2x128xf32>
    %c64_i32_96 = arith.constant 64 : i32
    %261 = tpu.dynamic_rotate %259 by %c64_i32_96 dim 1 : vector<2x128xf32>, i32 -> vector<2x128xf32>
    %c32_i32_97 = arith.constant 32 : i32
    %262 = tpu.dynamic_rotate %259 by %c32_i32_97 dim 1 : vector<2x128xf32>, i32 -> vector<2x128xf32>
    %263 = arith.mulf %260, %246 : vector<2x128xf32>
    %264 = arith.mulf %259, %261 : vector<2x128xf32>
    %265 = arith.addf %263, %264 : vector<2x128xf32>
    %266 = math.tanh %265 : vector<2x128xf32>
    %267 = arith.mulf %262, %266 : vector<2x128xf32>
    %c8_98 = arith.constant 8 : index
    %c0_99 = arith.constant 0 : index
    %268 = vector.load %arg7[%c8_98, %c0_99] : memref<16x128xf32, #tpu.memory_space<vmem>>, vector<2x128xf32>
    tpu.vector_store %arg7[%c8_98, %c0_99], %267 {strides = array<i32>} : memref<16x128xf32, #tpu.memory_space<vmem>>, vector<2x128xf32>,
    %269 = vector.extract_strided_slice %169 {offsets = [10, 0], sizes = [2, 128], strides = [1, 1]} : vector<16x128xf32> to vector<2x128xf32>
    %cst_100 = arith.constant dense<0.000000e+00> : vector<2x128xf32>
    %270 = tpu.matmul %267, %171, %cst_100 {dimension_numbers = #tpu.dot_dimension_numbers<[1], [0], [0], [1], [0, 0, 1, 1], [], []>} : vector<2x128xf32>, vector<128x128xf32>, vector<2x128xf32> -> vector<2x128xf32>
    %271 = arith.addf %269, %270 : vector<2x128xf32>
    %272 = math.tanh %271 : vector<2x128xf32>
    %273 = arith.negf %271 : vector<2x128xf32>
    %274 = math.exp %273 : vector<2x128xf32>
    %cst_101 = arith.constant 1.000000e+00 : f32
    %275 = vector.broadcast %cst_101 : f32 to vector<2x128xf32>
    %276 = arith.addf %275, %274 : vector<2x128xf32>
    %277 = arith.divf %275, %276 : vector<2x128xf32>
    %278 = arith.select %5, %272, %277 : vector<2x128xi1>, vector<2x128xf32>
    %c96_i32_102 = arith.constant 96 : i32
    %279 = tpu.dynamic_rotate %278 by %c96_i32_102 dim 1 : vector<2x128xf32>, i32 -> vector<2x128xf32>
    %c64_i32_103 = arith.constant 64 : i32
    %280 = tpu.dynamic_rotate %278 by %c64_i32_103 dim 1 : vector<2x128xf32>, i32 -> vector<2x128xf32>
    %c32_i32_104 = arith.constant 32 : i32
    %281 = tpu.dynamic_rotate %278 by %c32_i32_104 dim 1 : vector<2x128xf32>, i32 -> vector<2x128xf32>
    %282 = arith.mulf %279, %265 : vector<2x128xf32>
    %283 = arith.mulf %278, %280 : vector<2x128xf32>
    %284 = arith.addf %282, %283 : vector<2x128xf32>
    %285 = math.tanh %284 : vector<2x128xf32>
    %286 = arith.mulf %281, %285 : vector<2x128xf32>
    %c10_105 = arith.constant 10 : index
    %c0_106 = arith.constant 0 : index
    %287 = vector.load %arg7[%c10_105, %c0_106] : memref<16x128xf32, #tpu.memory_space<vmem>>, vector<2x128xf32>
    tpu.vector_store %arg7[%c10_105, %c0_106], %286 {strides = array<i32>} : memref<16x128xf32, #tpu.memory_space<vmem>>, vector<2x128xf32>,
    %288 = vector.extract_strided_slice %169 {offsets = [12, 0], sizes = [2, 128], strides = [1, 1]} : vector<16x128xf32> to vector<2x128xf32>
    %cst_107 = arith.constant dense<0.000000e+00> : vector<2x128xf32>
    %289 = tpu.matmul %286, %171, %cst_107 {dimension_numbers = #tpu.dot_dimension_numbers<[1], [0], [0], [1], [0, 0, 1, 1], [], []>} : vector<2x128xf32>, vector<128x128xf32>, vector<2x128xf32> -> vector<2x128xf32>
    %290 = arith.addf %288, %289 : vector<2x128xf32>
    %291 = math.tanh %290 : vector<2x128xf32>
    %292 = arith.negf %290 : vector<2x128xf32>
    %293 = math.exp %292 : vector<2x128xf32>
    %cst_108 = arith.constant 1.000000e+00 : f32
    %294 = vector.broadcast %cst_108 : f32 to vector<2x128xf32>
    %295 = arith.addf %294, %293 : vector<2x128xf32>
    %296 = arith.divf %294, %295 : vector<2x128xf32>
    %297 = arith.select %5, %291, %296 : vector<2x128xi1>, vector<2x128xf32>
    %c96_i32_109 = arith.constant 96 : i32
    %298 = tpu.dynamic_rotate %297 by %c96_i32_109 dim 1 : vector<2x128xf32>, i32 -> vector<2x128xf32>
    %c64_i32_110 = arith.constant 64 : i32
    %299 = tpu.dynamic_rotate %297 by %c64_i32_110 dim 1 : vector<2x128xf32>, i32 -> vector<2x128xf32>
    %c32_i32_111 = arith.constant 32 : i32
    %300 = tpu.dynamic_rotate %297 by %c32_i32_111 dim 1 : vector<2x128xf32>, i32 -> vector<2x128xf32>
    %301 = arith.mulf %298, %284 : vector<2x128xf32>
    %302 = arith.mulf %297, %299 : vector<2x128xf32>
    %303 = arith.addf %301, %302 : vector<2x128xf32>
    %304 = math.tanh %303 : vector<2x128xf32>
    %305 = arith.mulf %300, %304 : vector<2x128xf32>
    %c12_112 = arith.constant 12 : index
    %c0_113 = arith.constant 0 : index
    %306 = vector.load %arg7[%c12_112, %c0_113] : memref<16x128xf32, #tpu.memory_space<vmem>>, vector<2x128xf32>
    tpu.vector_store %arg7[%c12_112, %c0_113], %305 {strides = array<i32>} : memref<16x128xf32, #tpu.memory_space<vmem>>, vector<2x128xf32>,
    %307 = vector.extract_strided_slice %169 {offsets = [14, 0], sizes = [2, 128], strides = [1, 1]} : vector<16x128xf32> to vector<2x128xf32>
    %cst_114 = arith.constant dense<0.000000e+00> : vector<2x128xf32>
    %308 = tpu.matmul %305, %171, %cst_114 {dimension_numbers = #tpu.dot_dimension_numbers<[1], [0], [0], [1], [0, 0, 1, 1], [], []>} : vector<2x128xf32>, vector<128x128xf32>, vector<2x128xf32> -> vector<2x128xf32>
    %309 = arith.addf %307, %308 : vector<2x128xf32>
    %310 = math.tanh %309 : vector<2x128xf32>
    %311 = arith.negf %309 : vector<2x128xf32>
    %312 = math.exp %311 : vector<2x128xf32>
    %cst_115 = arith.constant 1.000000e+00 : f32
    %313 = vector.broadcast %cst_115 : f32 to vector<2x128xf32>
    %314 = arith.addf %313, %312 : vector<2x128xf32>
    %315 = arith.divf %313, %314 : vector<2x128xf32>
    %316 = arith.select %5, %310, %315 : vector<2x128xi1>, vector<2x128xf32>
    %c96_i32_116 = arith.constant 96 : i32
    %317 = tpu.dynamic_rotate %316 by %c96_i32_116 dim 1 : vector<2x128xf32>, i32 -> vector<2x128xf32>
    %c64_i32_117 = arith.constant 64 : i32
    %318 = tpu.dynamic_rotate %316 by %c64_i32_117 dim 1 : vector<2x128xf32>, i32 -> vector<2x128xf32>
    %c32_i32_118 = arith.constant 32 : i32
    %319 = tpu.dynamic_rotate %316 by %c32_i32_118 dim 1 : vector<2x128xf32>, i32 -> vector<2x128xf32>
    %320 = arith.mulf %317, %303 : vector<2x128xf32>
    %321 = arith.mulf %316, %318 : vector<2x128xf32>
    %322 = arith.addf %320, %321 : vector<2x128xf32>
    %323 = math.tanh %322 : vector<2x128xf32>
    %324 = arith.mulf %319, %323 : vector<2x128xf32>
    %c14_119 = arith.constant 14 : index
    %c0_120 = arith.constant 0 : index
    %325 = vector.load %arg7[%c14_119, %c0_120] : memref<16x128xf32, #tpu.memory_space<vmem>>, vector<2x128xf32>
    tpu.vector_store %arg7[%c14_119, %c0_120], %324 {strides = array<i32>} : memref<16x128xf32, #tpu.memory_space<vmem>>, vector<2x128xf32>,
    %c0_121 = arith.constant 0 : index
    %c0_122 = arith.constant 0 : index
    %326 = vector.load %arg7[%c0_121, %c0_122] : memref<16x128xf32, #tpu.memory_space<vmem>>, vector<16x128xf32>
    %c1_123 = arith.constant 1 : index
    %c0_124 = arith.constant 0 : index
    %c0_125 = arith.constant 0 : index
    %327 = vector.load %arg1[%c1_123, %c0_124, %c0_125] : memref<3x128x128xf32, #tpu.memory_space<vmem>>, vector<1x128x128xf32>
    %328 = vector.shape_cast %327 : vector<1x128x128xf32> to vector<128x128xf32>
    %cst_126 = arith.constant dense<0.000000e+00> : vector<16x128xf32>
    %329 = tpu.matmul %326, %328, %cst_126 {dimension_numbers = #tpu.dot_dimension_numbers<[1], [0], [0], [1], [0, 0, 1, 1], [], []>} : vector<16x128xf32>, vector<128x128xf32>, vector<16x128xf32> -> vector<16x128xf32>
    %c2_127 = arith.constant 2 : index
    %c0_128 = arith.constant 0 : index
    %330 = vector.load %arg3[%c2_127, %c0_128] : memref<4x128xf32, #tpu.memory_space<vmem>>, vector<1x128xf32>
    %331 = vector.broadcast %330 : vector<1x128xf32> to vector<16x128xf32>
    %332 = arith.addf %329, %331 : vector<16x128xf32>
    %c2_129 = arith.constant 2 : index
    %c0_130 = arith.constant 0 : index
    %c0_131 = arith.constant 0 : index
    %333 = vector.load %arg2[%c2_129, %c0_130, %c0_131] : memref<4x128x128xf32, #tpu.memory_space<vmem>>, vector<1x128x128xf32>
    %334 = vector.shape_cast %333 : vector<1x128x128xf32> to vector<128x128xf32>
    %cst_132 = arith.constant 0.000000e+00 : f32
    %335 = vector.broadcast %cst_132 : f32 to vector<2x128xf32>
    %cst_133 = arith.constant 0.000000e+00 : f32
    %336 = vector.broadcast %cst_133 : f32 to vector<2x128xf32>
    %337 = vector.extract_strided_slice %332 {offsets = [0, 0], sizes = [2, 128], strides = [1, 1]} : vector<16x128xf32> to vector<2x128xf32>
    %cst_134 = arith.constant dense<0.000000e+00> : vector<2x128xf32>
    %338 = tpu.matmul %335, %334, %cst_134 {dimension_numbers = #tpu.dot_dimension_numbers<[1], [0], [0], [1], [0, 0, 1, 1], [], []>} : vector<2x128xf32>, vector<128x128xf32>, vector<2x128xf32> -> vector<2x128xf32>
    %339 = arith.addf %337, %338 : vector<2x128xf32>
    %340 = math.tanh %339 : vector<2x128xf32>
    %341 = arith.negf %339 : vector<2x128xf32>
    %342 = math.exp %341 : vector<2x128xf32>
    %cst_135 = arith.constant 1.000000e+00 : f32
    %343 = vector.broadcast %cst_135 : f32 to vector<2x128xf32>
    %344 = arith.addf %343, %342 : vector<2x128xf32>
    %345 = arith.divf %343, %344 : vector<2x128xf32>
    %346 = arith.select %5, %340, %345 : vector<2x128xi1>, vector<2x128xf32>
    %c96_i32_136 = arith.constant 96 : i32
    %347 = tpu.dynamic_rotate %346 by %c96_i32_136 dim 1 : vector<2x128xf32>, i32 -> vector<2x128xf32>
    %c64_i32_137 = arith.constant 64 : i32
    %348 = tpu.dynamic_rotate %346 by %c64_i32_137 dim 1 : vector<2x128xf32>, i32 -> vector<2x128xf32>
    %c32_i32_138 = arith.constant 32 : i32
    %349 = tpu.dynamic_rotate %346 by %c32_i32_138 dim 1 : vector<2x128xf32>, i32 -> vector<2x128xf32>
    %350 = arith.mulf %347, %336 : vector<2x128xf32>
    %351 = arith.mulf %346, %348 : vector<2x128xf32>
    %352 = arith.addf %350, %351 : vector<2x128xf32>
    %353 = math.tanh %352 : vector<2x128xf32>
    %354 = arith.mulf %349, %353 : vector<2x128xf32>
    %c0_139 = arith.constant 0 : index
    %c0_140 = arith.constant 0 : index
    %355 = vector.load %arg7[%c0_139, %c0_140] : memref<16x128xf32, #tpu.memory_space<vmem>>, vector<2x128xf32>
    tpu.vector_store %arg7[%c0_139, %c0_140], %354 {strides = array<i32>} : memref<16x128xf32, #tpu.memory_space<vmem>>, vector<2x128xf32>,
    %356 = vector.extract_strided_slice %332 {offsets = [2, 0], sizes = [2, 128], strides = [1, 1]} : vector<16x128xf32> to vector<2x128xf32>
    %cst_141 = arith.constant dense<0.000000e+00> : vector<2x128xf32>
    %357 = tpu.matmul %354, %334, %cst_141 {dimension_numbers = #tpu.dot_dimension_numbers<[1], [0], [0], [1], [0, 0, 1, 1], [], []>} : vector<2x128xf32>, vector<128x128xf32>, vector<2x128xf32> -> vector<2x128xf32>
    %358 = arith.addf %356, %357 : vector<2x128xf32>
    %359 = math.tanh %358 : vector<2x128xf32>
    %360 = arith.negf %358 : vector<2x128xf32>
    %361 = math.exp %360 : vector<2x128xf32>
    %cst_142 = arith.constant 1.000000e+00 : f32
    %362 = vector.broadcast %cst_142 : f32 to vector<2x128xf32>
    %363 = arith.addf %362, %361 : vector<2x128xf32>
    %364 = arith.divf %362, %363 : vector<2x128xf32>
    %365 = arith.select %5, %359, %364 : vector<2x128xi1>, vector<2x128xf32>
    %c96_i32_143 = arith.constant 96 : i32
    %366 = tpu.dynamic_rotate %365 by %c96_i32_143 dim 1 : vector<2x128xf32>, i32 -> vector<2x128xf32>
    %c64_i32_144 = arith.constant 64 : i32
    %367 = tpu.dynamic_rotate %365 by %c64_i32_144 dim 1 : vector<2x128xf32>, i32 -> vector<2x128xf32>
    %c32_i32_145 = arith.constant 32 : i32
    %368 = tpu.dynamic_rotate %365 by %c32_i32_145 dim 1 : vector<2x128xf32>, i32 -> vector<2x128xf32>
    %369 = arith.mulf %366, %352 : vector<2x128xf32>
    %370 = arith.mulf %365, %367 : vector<2x128xf32>
    %371 = arith.addf %369, %370 : vector<2x128xf32>
    %372 = math.tanh %371 : vector<2x128xf32>
    %373 = arith.mulf %368, %372 : vector<2x128xf32>
    %c2_146 = arith.constant 2 : index
    %c0_147 = arith.constant 0 : index
    %374 = vector.load %arg7[%c2_146, %c0_147] : memref<16x128xf32, #tpu.memory_space<vmem>>, vector<2x128xf32>
    tpu.vector_store %arg7[%c2_146, %c0_147], %373 {strides = array<i32>} : memref<16x128xf32, #tpu.memory_space<vmem>>, vector<2x128xf32>,
    %375 = vector.extract_strided_slice %332 {offsets = [4, 0], sizes = [2, 128], strides = [1, 1]} : vector<16x128xf32> to vector<2x128xf32>
    %cst_148 = arith.constant dense<0.000000e+00> : vector<2x128xf32>
    %376 = tpu.matmul %373, %334, %cst_148 {dimension_numbers = #tpu.dot_dimension_numbers<[1], [0], [0], [1], [0, 0, 1, 1], [], []>} : vector<2x128xf32>, vector<128x128xf32>, vector<2x128xf32> -> vector<2x128xf32>
    %377 = arith.addf %375, %376 : vector<2x128xf32>
    %378 = math.tanh %377 : vector<2x128xf32>
    %379 = arith.negf %377 : vector<2x128xf32>
    %380 = math.exp %379 : vector<2x128xf32>
    %cst_149 = arith.constant 1.000000e+00 : f32
    %381 = vector.broadcast %cst_149 : f32 to vector<2x128xf32>
    %382 = arith.addf %381, %380 : vector<2x128xf32>
    %383 = arith.divf %381, %382 : vector<2x128xf32>
    %384 = arith.select %5, %378, %383 : vector<2x128xi1>, vector<2x128xf32>
    %c96_i32_150 = arith.constant 96 : i32
    %385 = tpu.dynamic_rotate %384 by %c96_i32_150 dim 1 : vector<2x128xf32>, i32 -> vector<2x128xf32>
    %c64_i32_151 = arith.constant 64 : i32
    %386 = tpu.dynamic_rotate %384 by %c64_i32_151 dim 1 : vector<2x128xf32>, i32 -> vector<2x128xf32>
    %c32_i32_152 = arith.constant 32 : i32
    %387 = tpu.dynamic_rotate %384 by %c32_i32_152 dim 1 : vector<2x128xf32>, i32 -> vector<2x128xf32>
    %388 = arith.mulf %385, %371 : vector<2x128xf32>
    %389 = arith.mulf %384, %386 : vector<2x128xf32>
    %390 = arith.addf %388, %389 : vector<2x128xf32>
    %391 = math.tanh %390 : vector<2x128xf32>
    %392 = arith.mulf %387, %391 : vector<2x128xf32>
    %c4_153 = arith.constant 4 : index
    %c0_154 = arith.constant 0 : index
    %393 = vector.load %arg7[%c4_153, %c0_154] : memref<16x128xf32, #tpu.memory_space<vmem>>, vector<2x128xf32>
    tpu.vector_store %arg7[%c4_153, %c0_154], %392 {strides = array<i32>} : memref<16x128xf32, #tpu.memory_space<vmem>>, vector<2x128xf32>,
    %394 = vector.extract_strided_slice %332 {offsets = [6, 0], sizes = [2, 128], strides = [1, 1]} : vector<16x128xf32> to vector<2x128xf32>
    %cst_155 = arith.constant dense<0.000000e+00> : vector<2x128xf32>
    %395 = tpu.matmul %392, %334, %cst_155 {dimension_numbers = #tpu.dot_dimension_numbers<[1], [0], [0], [1], [0, 0, 1, 1], [], []>} : vector<2x128xf32>, vector<128x128xf32>, vector<2x128xf32> -> vector<2x128xf32>
    %396 = arith.addf %394, %395 : vector<2x128xf32>
    %397 = math.tanh %396 : vector<2x128xf32>
    %398 = arith.negf %396 : vector<2x128xf32>
    %399 = math.exp %398 : vector<2x128xf32>
    %cst_156 = arith.constant 1.000000e+00 : f32
    %400 = vector.broadcast %cst_156 : f32 to vector<2x128xf32>
    %401 = arith.addf %400, %399 : vector<2x128xf32>
    %402 = arith.divf %400, %401 : vector<2x128xf32>
    %403 = arith.select %5, %397, %402 : vector<2x128xi1>, vector<2x128xf32>
    %c96_i32_157 = arith.constant 96 : i32
    %404 = tpu.dynamic_rotate %403 by %c96_i32_157 dim 1 : vector<2x128xf32>, i32 -> vector<2x128xf32>
    %c64_i32_158 = arith.constant 64 : i32
    %405 = tpu.dynamic_rotate %403 by %c64_i32_158 dim 1 : vector<2x128xf32>, i32 -> vector<2x128xf32>
    %c32_i32_159 = arith.constant 32 : i32
    %406 = tpu.dynamic_rotate %403 by %c32_i32_159 dim 1 : vector<2x128xf32>, i32 -> vector<2x128xf32>
    %407 = arith.mulf %404, %390 : vector<2x128xf32>
    %408 = arith.mulf %403, %405 : vector<2x128xf32>
    %409 = arith.addf %407, %408 : vector<2x128xf32>
    %410 = math.tanh %409 : vector<2x128xf32>
    %411 = arith.mulf %406, %410 : vector<2x128xf32>
    %c6_160 = arith.constant 6 : index
    %c0_161 = arith.constant 0 : index
    %412 = vector.load %arg7[%c6_160, %c0_161] : memref<16x128xf32, #tpu.memory_space<vmem>>, vector<2x128xf32>
    tpu.vector_store %arg7[%c6_160, %c0_161], %411 {strides = array<i32>} : memref<16x128xf32, #tpu.memory_space<vmem>>, vector<2x128xf32>,
    %413 = vector.extract_strided_slice %332 {offsets = [8, 0], sizes = [2, 128], strides = [1, 1]} : vector<16x128xf32> to vector<2x128xf32>
    %cst_162 = arith.constant dense<0.000000e+00> : vector<2x128xf32>
    %414 = tpu.matmul %411, %334, %cst_162 {dimension_numbers = #tpu.dot_dimension_numbers<[1], [0], [0], [1], [0, 0, 1, 1], [], []>} : vector<2x128xf32>, vector<128x128xf32>, vector<2x128xf32> -> vector<2x128xf32>
    %415 = arith.addf %413, %414 : vector<2x128xf32>
    %416 = math.tanh %415 : vector<2x128xf32>
    %417 = arith.negf %415 : vector<2x128xf32>
    %418 = math.exp %417 : vector<2x128xf32>
    %cst_163 = arith.constant 1.000000e+00 : f32
    %419 = vector.broadcast %cst_163 : f32 to vector<2x128xf32>
    %420 = arith.addf %419, %418 : vector<2x128xf32>
    %421 = arith.divf %419, %420 : vector<2x128xf32>
    %422 = arith.select %5, %416, %421 : vector<2x128xi1>, vector<2x128xf32>
    %c96_i32_164 = arith.constant 96 : i32
    %423 = tpu.dynamic_rotate %422 by %c96_i32_164 dim 1 : vector<2x128xf32>, i32 -> vector<2x128xf32>
    %c64_i32_165 = arith.constant 64 : i32
    %424 = tpu.dynamic_rotate %422 by %c64_i32_165 dim 1 : vector<2x128xf32>, i32 -> vector<2x128xf32>
    %c32_i32_166 = arith.constant 32 : i32
    %425 = tpu.dynamic_rotate %422 by %c32_i32_166 dim 1 : vector<2x128xf32>, i32 -> vector<2x128xf32>
    %426 = arith.mulf %423, %409 : vector<2x128xf32>
    %427 = arith.mulf %422, %424 : vector<2x128xf32>
    %428 = arith.addf %426, %427 : vector<2x128xf32>
    %429 = math.tanh %428 : vector<2x128xf32>
    %430 = arith.mulf %425, %429 : vector<2x128xf32>
    %c8_167 = arith.constant 8 : index
    %c0_168 = arith.constant 0 : index
    %431 = vector.load %arg7[%c8_167, %c0_168] : memref<16x128xf32, #tpu.memory_space<vmem>>, vector<2x128xf32>
    tpu.vector_store %arg7[%c8_167, %c0_168], %430 {strides = array<i32>} : memref<16x128xf32, #tpu.memory_space<vmem>>, vector<2x128xf32>,
    %432 = vector.extract_strided_slice %332 {offsets = [10, 0], sizes = [2, 128], strides = [1, 1]} : vector<16x128xf32> to vector<2x128xf32>
    %cst_169 = arith.constant dense<0.000000e+00> : vector<2x128xf32>
    %433 = tpu.matmul %430, %334, %cst_169 {dimension_numbers = #tpu.dot_dimension_numbers<[1], [0], [0], [1], [0, 0, 1, 1], [], []>} : vector<2x128xf32>, vector<128x128xf32>, vector<2x128xf32> -> vector<2x128xf32>
    %434 = arith.addf %432, %433 : vector<2x128xf32>
    %435 = math.tanh %434 : vector<2x128xf32>
    %436 = arith.negf %434 : vector<2x128xf32>
    %437 = math.exp %436 : vector<2x128xf32>
    %cst_170 = arith.constant 1.000000e+00 : f32
    %438 = vector.broadcast %cst_170 : f32 to vector<2x128xf32>
    %439 = arith.addf %438, %437 : vector<2x128xf32>
    %440 = arith.divf %438, %439 : vector<2x128xf32>
    %441 = arith.select %5, %435, %440 : vector<2x128xi1>, vector<2x128xf32>
    %c96_i32_171 = arith.constant 96 : i32
    %442 = tpu.dynamic_rotate %441 by %c96_i32_171 dim 1 : vector<2x128xf32>, i32 -> vector<2x128xf32>
    %c64_i32_172 = arith.constant 64 : i32
    %443 = tpu.dynamic_rotate %441 by %c64_i32_172 dim 1 : vector<2x128xf32>, i32 -> vector<2x128xf32>
    %c32_i32_173 = arith.constant 32 : i32
    %444 = tpu.dynamic_rotate %441 by %c32_i32_173 dim 1 : vector<2x128xf32>, i32 -> vector<2x128xf32>
    %445 = arith.mulf %442, %428 : vector<2x128xf32>
    %446 = arith.mulf %441, %443 : vector<2x128xf32>
    %447 = arith.addf %445, %446 : vector<2x128xf32>
    %448 = math.tanh %447 : vector<2x128xf32>
    %449 = arith.mulf %444, %448 : vector<2x128xf32>
    %c10_174 = arith.constant 10 : index
    %c0_175 = arith.constant 0 : index
    %450 = vector.load %arg7[%c10_174, %c0_175] : memref<16x128xf32, #tpu.memory_space<vmem>>, vector<2x128xf32>
    tpu.vector_store %arg7[%c10_174, %c0_175], %449 {strides = array<i32>} : memref<16x128xf32, #tpu.memory_space<vmem>>, vector<2x128xf32>,
    %451 = vector.extract_strided_slice %332 {offsets = [12, 0], sizes = [2, 128], strides = [1, 1]} : vector<16x128xf32> to vector<2x128xf32>
    %cst_176 = arith.constant dense<0.000000e+00> : vector<2x128xf32>
    %452 = tpu.matmul %449, %334, %cst_176 {dimension_numbers = #tpu.dot_dimension_numbers<[1], [0], [0], [1], [0, 0, 1, 1], [], []>} : vector<2x128xf32>, vector<128x128xf32>, vector<2x128xf32> -> vector<2x128xf32>
    %453 = arith.addf %451, %452 : vector<2x128xf32>
    %454 = math.tanh %453 : vector<2x128xf32>
    %455 = arith.negf %453 : vector<2x128xf32>
    %456 = math.exp %455 : vector<2x128xf32>
    %cst_177 = arith.constant 1.000000e+00 : f32
    %457 = vector.broadcast %cst_177 : f32 to vector<2x128xf32>
    %458 = arith.addf %457, %456 : vector<2x128xf32>
    %459 = arith.divf %457, %458 : vector<2x128xf32>
    %460 = arith.select %5, %454, %459 : vector<2x128xi1>, vector<2x128xf32>
    %c96_i32_178 = arith.constant 96 : i32
    %461 = tpu.dynamic_rotate %460 by %c96_i32_178 dim 1 : vector<2x128xf32>, i32 -> vector<2x128xf32>
    %c64_i32_179 = arith.constant 64 : i32
    %462 = tpu.dynamic_rotate %460 by %c64_i32_179 dim 1 : vector<2x128xf32>, i32 -> vector<2x128xf32>
    %c32_i32_180 = arith.constant 32 : i32
    %463 = tpu.dynamic_rotate %460 by %c32_i32_180 dim 1 : vector<2x128xf32>, i32 -> vector<2x128xf32>
    %464 = arith.mulf %461, %447 : vector<2x128xf32>
    %465 = arith.mulf %460, %462 : vector<2x128xf32>
    %466 = arith.addf %464, %465 : vector<2x128xf32>
    %467 = math.tanh %466 : vector<2x128xf32>
    %468 = arith.mulf %463, %467 : vector<2x128xf32>
    %c12_181 = arith.constant 12 : index
    %c0_182 = arith.constant 0 : index
    %469 = vector.load %arg7[%c12_181, %c0_182] : memref<16x128xf32, #tpu.memory_space<vmem>>, vector<2x128xf32>
    tpu.vector_store %arg7[%c12_181, %c0_182], %468 {strides = array<i32>} : memref<16x128xf32, #tpu.memory_space<vmem>>, vector<2x128xf32>,
    %470 = vector.extract_strided_slice %332 {offsets = [14, 0], sizes = [2, 128], strides = [1, 1]} : vector<16x128xf32> to vector<2x128xf32>
    %cst_183 = arith.constant dense<0.000000e+00> : vector<2x128xf32>
    %471 = tpu.matmul %468, %334, %cst_183 {dimension_numbers = #tpu.dot_dimension_numbers<[1], [0], [0], [1], [0, 0, 1, 1], [], []>} : vector<2x128xf32>, vector<128x128xf32>, vector<2x128xf32> -> vector<2x128xf32>
    %472 = arith.addf %470, %471 : vector<2x128xf32>
    %473 = math.tanh %472 : vector<2x128xf32>
    %474 = arith.negf %472 : vector<2x128xf32>
    %475 = math.exp %474 : vector<2x128xf32>
    %cst_184 = arith.constant 1.000000e+00 : f32
    %476 = vector.broadcast %cst_184 : f32 to vector<2x128xf32>
    %477 = arith.addf %476, %475 : vector<2x128xf32>
    %478 = arith.divf %476, %477 : vector<2x128xf32>
    %479 = arith.select %5, %473, %478 : vector<2x128xi1>, vector<2x128xf32>
    %c96_i32_185 = arith.constant 96 : i32
    %480 = tpu.dynamic_rotate %479 by %c96_i32_185 dim 1 : vector<2x128xf32>, i32 -> vector<2x128xf32>
    %c64_i32_186 = arith.constant 64 : i32
    %481 = tpu.dynamic_rotate %479 by %c64_i32_186 dim 1 : vector<2x128xf32>, i32 -> vector<2x128xf32>
    %c32_i32_187 = arith.constant 32 : i32
    %482 = tpu.dynamic_rotate %479 by %c32_i32_187 dim 1 : vector<2x128xf32>, i32 -> vector<2x128xf32>
    %483 = arith.mulf %480, %466 : vector<2x128xf32>
    %484 = arith.mulf %479, %481 : vector<2x128xf32>
    %485 = arith.addf %483, %484 : vector<2x128xf32>
    %486 = math.tanh %485 : vector<2x128xf32>
    %487 = arith.mulf %482, %486 : vector<2x128xf32>
    %c14_188 = arith.constant 14 : index
    %c0_189 = arith.constant 0 : index
    %488 = vector.load %arg7[%c14_188, %c0_189] : memref<16x128xf32, #tpu.memory_space<vmem>>, vector<2x128xf32>
    tpu.vector_store %arg7[%c14_188, %c0_189], %487 {strides = array<i32>} : memref<16x128xf32, #tpu.memory_space<vmem>>, vector<2x128xf32>,
    %c0_190 = arith.constant 0 : index
    %c0_191 = arith.constant 0 : index
    %489 = vector.load %arg7[%c0_190, %c0_191] : memref<16x128xf32, #tpu.memory_space<vmem>>, vector<16x128xf32>
    %c2_192 = arith.constant 2 : index
    %c0_193 = arith.constant 0 : index
    %c0_194 = arith.constant 0 : index
    %490 = vector.load %arg1[%c2_192, %c0_193, %c0_194] : memref<3x128x128xf32, #tpu.memory_space<vmem>>, vector<1x128x128xf32>
    %491 = vector.shape_cast %490 : vector<1x128x128xf32> to vector<128x128xf32>
    %cst_195 = arith.constant dense<0.000000e+00> : vector<16x128xf32>
    %492 = tpu.matmul %489, %491, %cst_195 {dimension_numbers = #tpu.dot_dimension_numbers<[1], [0], [0], [1], [0, 0, 1, 1], [], []>} : vector<16x128xf32>, vector<128x128xf32>, vector<16x128xf32> -> vector<16x128xf32>
    %c3 = arith.constant 3 : index
    %c0_196 = arith.constant 0 : index
    %493 = vector.load %arg3[%c3, %c0_196] : memref<4x128xf32, #tpu.memory_space<vmem>>, vector<1x128xf32>
    %494 = vector.broadcast %493 : vector<1x128xf32> to vector<16x128xf32>
    %495 = arith.addf %492, %494 : vector<16x128xf32>
    %c3_197 = arith.constant 3 : index
    %c0_198 = arith.constant 0 : index
    %c0_199 = arith.constant 0 : index
    %496 = vector.load %arg2[%c3_197, %c0_198, %c0_199] : memref<4x128x128xf32, #tpu.memory_space<vmem>>, vector<1x128x128xf32>
    %497 = vector.shape_cast %496 : vector<1x128x128xf32> to vector<128x128xf32>
    %cst_200 = arith.constant 0.000000e+00 : f32
    %498 = vector.broadcast %cst_200 : f32 to vector<2x128xf32>
    %cst_201 = arith.constant 0.000000e+00 : f32
    %499 = vector.broadcast %cst_201 : f32 to vector<2x128xf32>
    %500 = vector.extract_strided_slice %495 {offsets = [0, 0], sizes = [2, 128], strides = [1, 1]} : vector<16x128xf32> to vector<2x128xf32>
    %cst_202 = arith.constant dense<0.000000e+00> : vector<2x128xf32>
    %501 = tpu.matmul %498, %497, %cst_202 {dimension_numbers = #tpu.dot_dimension_numbers<[1], [0], [0], [1], [0, 0, 1, 1], [], []>} : vector<2x128xf32>, vector<128x128xf32>, vector<2x128xf32> -> vector<2x128xf32>
    %502 = arith.addf %500, %501 : vector<2x128xf32>
    %503 = math.tanh %502 : vector<2x128xf32>
    %504 = arith.negf %502 : vector<2x128xf32>
    %505 = math.exp %504 : vector<2x128xf32>
    %cst_203 = arith.constant 1.000000e+00 : f32
    %506 = vector.broadcast %cst_203 : f32 to vector<2x128xf32>
    %507 = arith.addf %506, %505 : vector<2x128xf32>
    %508 = arith.divf %506, %507 : vector<2x128xf32>
    %509 = arith.select %5, %503, %508 : vector<2x128xi1>, vector<2x128xf32>
    %c96_i32_204 = arith.constant 96 : i32
    %510 = tpu.dynamic_rotate %509 by %c96_i32_204 dim 1 : vector<2x128xf32>, i32 -> vector<2x128xf32>
    %c64_i32_205 = arith.constant 64 : i32
    %511 = tpu.dynamic_rotate %509 by %c64_i32_205 dim 1 : vector<2x128xf32>, i32 -> vector<2x128xf32>
    %c32_i32_206 = arith.constant 32 : i32
    %512 = tpu.dynamic_rotate %509 by %c32_i32_206 dim 1 : vector<2x128xf32>, i32 -> vector<2x128xf32>
    %513 = arith.mulf %510, %499 : vector<2x128xf32>
    %514 = arith.mulf %509, %511 : vector<2x128xf32>
    %515 = arith.addf %513, %514 : vector<2x128xf32>
    %516 = math.tanh %515 : vector<2x128xf32>
    %517 = arith.mulf %512, %516 : vector<2x128xf32>
    %518 = vector.extract_strided_slice %495 {offsets = [2, 0], sizes = [2, 128], strides = [1, 1]} : vector<16x128xf32> to vector<2x128xf32>
    %cst_207 = arith.constant dense<0.000000e+00> : vector<2x128xf32>
    %519 = tpu.matmul %517, %497, %cst_207 {dimension_numbers = #tpu.dot_dimension_numbers<[1], [0], [0], [1], [0, 0, 1, 1], [], []>} : vector<2x128xf32>, vector<128x128xf32>, vector<2x128xf32> -> vector<2x128xf32>
    %520 = arith.addf %518, %519 : vector<2x128xf32>
    %521 = math.tanh %520 : vector<2x128xf32>
    %522 = arith.negf %520 : vector<2x128xf32>
    %523 = math.exp %522 : vector<2x128xf32>
    %cst_208 = arith.constant 1.000000e+00 : f32
    %524 = vector.broadcast %cst_208 : f32 to vector<2x128xf32>
    %525 = arith.addf %524, %523 : vector<2x128xf32>
    %526 = arith.divf %524, %525 : vector<2x128xf32>
    %527 = arith.select %5, %521, %526 : vector<2x128xi1>, vector<2x128xf32>
    %c96_i32_209 = arith.constant 96 : i32
    %528 = tpu.dynamic_rotate %527 by %c96_i32_209 dim 1 : vector<2x128xf32>, i32 -> vector<2x128xf32>
    %c64_i32_210 = arith.constant 64 : i32
    %529 = tpu.dynamic_rotate %527 by %c64_i32_210 dim 1 : vector<2x128xf32>, i32 -> vector<2x128xf32>
    %c32_i32_211 = arith.constant 32 : i32
    %530 = tpu.dynamic_rotate %527 by %c32_i32_211 dim 1 : vector<2x128xf32>, i32 -> vector<2x128xf32>
    %531 = arith.mulf %528, %515 : vector<2x128xf32>
    %532 = arith.mulf %527, %529 : vector<2x128xf32>
    %533 = arith.addf %531, %532 : vector<2x128xf32>
    %534 = math.tanh %533 : vector<2x128xf32>
    %535 = arith.mulf %530, %534 : vector<2x128xf32>
    %536 = vector.extract_strided_slice %495 {offsets = [4, 0], sizes = [2, 128], strides = [1, 1]} : vector<16x128xf32> to vector<2x128xf32>
    %cst_212 = arith.constant dense<0.000000e+00> : vector<2x128xf32>
    %537 = tpu.matmul %535, %497, %cst_212 {dimension_numbers = #tpu.dot_dimension_numbers<[1], [0], [0], [1], [0, 0, 1, 1], [], []>} : vector<2x128xf32>, vector<128x128xf32>, vector<2x128xf32> -> vector<2x128xf32>
    %538 = arith.addf %536, %537 : vector<2x128xf32>
    %539 = math.tanh %538 : vector<2x128xf32>
    %540 = arith.negf %538 : vector<2x128xf32>
    %541 = math.exp %540 : vector<2x128xf32>
    %cst_213 = arith.constant 1.000000e+00 : f32
    %542 = vector.broadcast %cst_213 : f32 to vector<2x128xf32>
    %543 = arith.addf %542, %541 : vector<2x128xf32>
    %544 = arith.divf %542, %543 : vector<2x128xf32>
    %545 = arith.select %5, %539, %544 : vector<2x128xi1>, vector<2x128xf32>
    %c96_i32_214 = arith.constant 96 : i32
    %546 = tpu.dynamic_rotate %545 by %c96_i32_214 dim 1 : vector<2x128xf32>, i32 -> vector<2x128xf32>
    %c64_i32_215 = arith.constant 64 : i32
    %547 = tpu.dynamic_rotate %545 by %c64_i32_215 dim 1 : vector<2x128xf32>, i32 -> vector<2x128xf32>
    %c32_i32_216 = arith.constant 32 : i32
    %548 = tpu.dynamic_rotate %545 by %c32_i32_216 dim 1 : vector<2x128xf32>, i32 -> vector<2x128xf32>
    %549 = arith.mulf %546, %533 : vector<2x128xf32>
    %550 = arith.mulf %545, %547 : vector<2x128xf32>
    %551 = arith.addf %549, %550 : vector<2x128xf32>
    %552 = math.tanh %551 : vector<2x128xf32>
    %553 = arith.mulf %548, %552 : vector<2x128xf32>
    %554 = vector.extract_strided_slice %495 {offsets = [6, 0], sizes = [2, 128], strides = [1, 1]} : vector<16x128xf32> to vector<2x128xf32>
    %cst_217 = arith.constant dense<0.000000e+00> : vector<2x128xf32>
    %555 = tpu.matmul %553, %497, %cst_217 {dimension_numbers = #tpu.dot_dimension_numbers<[1], [0], [0], [1], [0, 0, 1, 1], [], []>} : vector<2x128xf32>, vector<128x128xf32>, vector<2x128xf32> -> vector<2x128xf32>
    %556 = arith.addf %554, %555 : vector<2x128xf32>
    %557 = math.tanh %556 : vector<2x128xf32>
    %558 = arith.negf %556 : vector<2x128xf32>
    %559 = math.exp %558 : vector<2x128xf32>
    %cst_218 = arith.constant 1.000000e+00 : f32
    %560 = vector.broadcast %cst_218 : f32 to vector<2x128xf32>
    %561 = arith.addf %560, %559 : vector<2x128xf32>
    %562 = arith.divf %560, %561 : vector<2x128xf32>
    %563 = arith.select %5, %557, %562 : vector<2x128xi1>, vector<2x128xf32>
    %c96_i32_219 = arith.constant 96 : i32
    %564 = tpu.dynamic_rotate %563 by %c96_i32_219 dim 1 : vector<2x128xf32>, i32 -> vector<2x128xf32>
    %c64_i32_220 = arith.constant 64 : i32
    %565 = tpu.dynamic_rotate %563 by %c64_i32_220 dim 1 : vector<2x128xf32>, i32 -> vector<2x128xf32>
    %c32_i32_221 = arith.constant 32 : i32
    %566 = tpu.dynamic_rotate %563 by %c32_i32_221 dim 1 : vector<2x128xf32>, i32 -> vector<2x128xf32>
    %567 = arith.mulf %564, %551 : vector<2x128xf32>
    %568 = arith.mulf %563, %565 : vector<2x128xf32>
    %569 = arith.addf %567, %568 : vector<2x128xf32>
    %570 = math.tanh %569 : vector<2x128xf32>
    %571 = arith.mulf %566, %570 : vector<2x128xf32>
    %572 = vector.extract_strided_slice %495 {offsets = [8, 0], sizes = [2, 128], strides = [1, 1]} : vector<16x128xf32> to vector<2x128xf32>
    %cst_222 = arith.constant dense<0.000000e+00> : vector<2x128xf32>
    %573 = tpu.matmul %571, %497, %cst_222 {dimension_numbers = #tpu.dot_dimension_numbers<[1], [0], [0], [1], [0, 0, 1, 1], [], []>} : vector<2x128xf32>, vector<128x128xf32>, vector<2x128xf32> -> vector<2x128xf32>
    %574 = arith.addf %572, %573 : vector<2x128xf32>
    %575 = math.tanh %574 : vector<2x128xf32>
    %576 = arith.negf %574 : vector<2x128xf32>
    %577 = math.exp %576 : vector<2x128xf32>
    %cst_223 = arith.constant 1.000000e+00 : f32
    %578 = vector.broadcast %cst_223 : f32 to vector<2x128xf32>
    %579 = arith.addf %578, %577 : vector<2x128xf32>
    %580 = arith.divf %578, %579 : vector<2x128xf32>
    %581 = arith.select %5, %575, %580 : vector<2x128xi1>, vector<2x128xf32>
    %c96_i32_224 = arith.constant 96 : i32
    %582 = tpu.dynamic_rotate %581 by %c96_i32_224 dim 1 : vector<2x128xf32>, i32 -> vector<2x128xf32>
    %c64_i32_225 = arith.constant 64 : i32
    %583 = tpu.dynamic_rotate %581 by %c64_i32_225 dim 1 : vector<2x128xf32>, i32 -> vector<2x128xf32>
    %c32_i32_226 = arith.constant 32 : i32
    %584 = tpu.dynamic_rotate %581 by %c32_i32_226 dim 1 : vector<2x128xf32>, i32 -> vector<2x128xf32>
    %585 = arith.mulf %582, %569 : vector<2x128xf32>
    %586 = arith.mulf %581, %583 : vector<2x128xf32>
    %587 = arith.addf %585, %586 : vector<2x128xf32>
    %588 = math.tanh %587 : vector<2x128xf32>
    %589 = arith.mulf %584, %588 : vector<2x128xf32>
    %590 = vector.extract_strided_slice %495 {offsets = [10, 0], sizes = [2, 128], strides = [1, 1]} : vector<16x128xf32> to vector<2x128xf32>
    %cst_227 = arith.constant dense<0.000000e+00> : vector<2x128xf32>
    %591 = tpu.matmul %589, %497, %cst_227 {dimension_numbers = #tpu.dot_dimension_numbers<[1], [0], [0], [1], [0, 0, 1, 1], [], []>} : vector<2x128xf32>, vector<128x128xf32>, vector<2x128xf32> -> vector<2x128xf32>
    %592 = arith.addf %590, %591 : vector<2x128xf32>
    %593 = math.tanh %592 : vector<2x128xf32>
    %594 = arith.negf %592 : vector<2x128xf32>
    %595 = math.exp %594 : vector<2x128xf32>
    %cst_228 = arith.constant 1.000000e+00 : f32
    %596 = vector.broadcast %cst_228 : f32 to vector<2x128xf32>
    %597 = arith.addf %596, %595 : vector<2x128xf32>
    %598 = arith.divf %596, %597 : vector<2x128xf32>
    %599 = arith.select %5, %593, %598 : vector<2x128xi1>, vector<2x128xf32>
    %c96_i32_229 = arith.constant 96 : i32
    %600 = tpu.dynamic_rotate %599 by %c96_i32_229 dim 1 : vector<2x128xf32>, i32 -> vector<2x128xf32>
    %c64_i32_230 = arith.constant 64 : i32
    %601 = tpu.dynamic_rotate %599 by %c64_i32_230 dim 1 : vector<2x128xf32>, i32 -> vector<2x128xf32>
    %c32_i32_231 = arith.constant 32 : i32
    %602 = tpu.dynamic_rotate %599 by %c32_i32_231 dim 1 : vector<2x128xf32>, i32 -> vector<2x128xf32>
    %603 = arith.mulf %600, %587 : vector<2x128xf32>
    %604 = arith.mulf %599, %601 : vector<2x128xf32>
    %605 = arith.addf %603, %604 : vector<2x128xf32>
    %606 = math.tanh %605 : vector<2x128xf32>
    %607 = arith.mulf %602, %606 : vector<2x128xf32>
    %608 = vector.extract_strided_slice %495 {offsets = [12, 0], sizes = [2, 128], strides = [1, 1]} : vector<16x128xf32> to vector<2x128xf32>
    %cst_232 = arith.constant dense<0.000000e+00> : vector<2x128xf32>
    %609 = tpu.matmul %607, %497, %cst_232 {dimension_numbers = #tpu.dot_dimension_numbers<[1], [0], [0], [1], [0, 0, 1, 1], [], []>} : vector<2x128xf32>, vector<128x128xf32>, vector<2x128xf32> -> vector<2x128xf32>
    %610 = arith.addf %608, %609 : vector<2x128xf32>
    %611 = math.tanh %610 : vector<2x128xf32>
    %612 = arith.negf %610 : vector<2x128xf32>
    %613 = math.exp %612 : vector<2x128xf32>
    %cst_233 = arith.constant 1.000000e+00 : f32
    %614 = vector.broadcast %cst_233 : f32 to vector<2x128xf32>
    %615 = arith.addf %614, %613 : vector<2x128xf32>
    %616 = arith.divf %614, %615 : vector<2x128xf32>
    %617 = arith.select %5, %611, %616 : vector<2x128xi1>, vector<2x128xf32>
    %c96_i32_234 = arith.constant 96 : i32
    %618 = tpu.dynamic_rotate %617 by %c96_i32_234 dim 1 : vector<2x128xf32>, i32 -> vector<2x128xf32>
    %c64_i32_235 = arith.constant 64 : i32
    %619 = tpu.dynamic_rotate %617 by %c64_i32_235 dim 1 : vector<2x128xf32>, i32 -> vector<2x128xf32>
    %c32_i32_236 = arith.constant 32 : i32
    %620 = tpu.dynamic_rotate %617 by %c32_i32_236 dim 1 : vector<2x128xf32>, i32 -> vector<2x128xf32>
    %621 = arith.mulf %618, %605 : vector<2x128xf32>
    %622 = arith.mulf %617, %619 : vector<2x128xf32>
    %623 = arith.addf %621, %622 : vector<2x128xf32>
    %624 = math.tanh %623 : vector<2x128xf32>
    %625 = arith.mulf %620, %624 : vector<2x128xf32>
    %626 = vector.extract_strided_slice %495 {offsets = [14, 0], sizes = [2, 128], strides = [1, 1]} : vector<16x128xf32> to vector<2x128xf32>
    %cst_237 = arith.constant dense<0.000000e+00> : vector<2x128xf32>
    %627 = tpu.matmul %625, %497, %cst_237 {dimension_numbers = #tpu.dot_dimension_numbers<[1], [0], [0], [1], [0, 0, 1, 1], [], []>} : vector<2x128xf32>, vector<128x128xf32>, vector<2x128xf32> -> vector<2x128xf32>
    %628 = arith.addf %626, %627 : vector<2x128xf32>
    %629 = math.tanh %628 : vector<2x128xf32>
    %630 = arith.negf %628 : vector<2x128xf32>
    %631 = math.exp %630 : vector<2x128xf32>
    %cst_238 = arith.constant 1.000000e+00 : f32
    %632 = vector.broadcast %cst_238 : f32 to vector<2x128xf32>
    %633 = arith.addf %632, %631 : vector<2x128xf32>
    %634 = arith.divf %632, %633 : vector<2x128xf32>
    %635 = arith.select %5, %629, %634 : vector<2x128xi1>, vector<2x128xf32>
    %c96_i32_239 = arith.constant 96 : i32
    %636 = tpu.dynamic_rotate %635 by %c96_i32_239 dim 1 : vector<2x128xf32>, i32 -> vector<2x128xf32>
    %c64_i32_240 = arith.constant 64 : i32
    %637 = tpu.dynamic_rotate %635 by %c64_i32_240 dim 1 : vector<2x128xf32>, i32 -> vector<2x128xf32>
    %c32_i32_241 = arith.constant 32 : i32
    %638 = tpu.dynamic_rotate %635 by %c32_i32_241 dim 1 : vector<2x128xf32>, i32 -> vector<2x128xf32>
    %639 = arith.mulf %636, %623 : vector<2x128xf32>
    %640 = arith.mulf %635, %637 : vector<2x128xf32>
    %641 = arith.addf %639, %640 : vector<2x128xf32>
    %642 = math.tanh %641 : vector<2x128xf32>
    %643 = arith.mulf %638, %642 : vector<2x128xf32>
    %c0_242 = arith.constant 0 : index
    %c0_243 = arith.constant 0 : index
    %644 = vector.load %arg4[%c0_242, %c0_243] : memref<1x128xf32, #tpu.memory_space<vmem>>, vector<1x128xf32>
    %645 = vector.broadcast %644 : vector<1x128xf32> to vector<2x128xf32>
    %646 = arith.mulf %643, %645 : vector<2x128xf32>
    %cst_244 = arith.constant dense<0.000000e+00> : vector<2xf32>
    %647 = vector.multi_reduction <add>, %646, %cst_244 [1] : vector<2x128xf32> to vector<2xf32>
    %648 = vector.shape_cast %647 : vector<2xf32> to vector<2x1xf32>
    %c0_245 = arith.constant 0 : index
    %c0_246 = arith.constant 0 : index
    %649 = vector.load %arg5[%c0_245, %c0_246] : memref<1x1xf32, #tpu.memory_space<vmem>>, vector<1x1xf32>
    %650 = vector.broadcast %649 : vector<1x1xf32> to vector<2x1xf32>
    %651 = arith.addf %648, %650 : vector<2x1xf32>
    %cst_247 = arith.constant 0.000000e+00 : f32
    %652 = vector.broadcast %cst_247 : f32 to vector<2x1xf32>
    %653 = arith.maximumf %651, %652 : vector<2x1xf32>
    %c0_248 = arith.constant 0 : index
    %c0_249 = arith.constant 0 : index
    %654 = vector.load %arg6[%c0_248, %c0_249] : memref<2x1xf32, #tpu.memory_space<vmem>>, vector<2x1xf32>
    tpu.vector_store %arg6[%c0_248, %c0_249], %653 {strides = array<i32>} : memref<2x1xf32, #tpu.memory_space<vmem>>, vector<2x1xf32>,
    return
  }
}

</mosaic_0001>

<llo_original>
// kernel: lstm_deep_predictor.1
$region0: #{lstm_deep_predictor.1}
  #allocation0 [shape = 'u32[]', space=smem, size = 0x4, offset = 0x4, fixed_abs, tag = 'smem constant byte address 0x4 - core index']
  #allocation1 [shape = 'u32[144,128]{1,0:T(1,128)}', space=vmem, size = 0x12000, scoped, tag = 'internal scratch']
  #allocation2 [shape = 'f32[16,128]{1,0:T(8,128)}', space=vmem, size = 0x2000, scoped, tag = 'scratch operand']
  #allocation3 [shape = 'f32[1,1]{1,0:T(1,128)S(1)}', space=vmem, size = 0x200, scoped, tag = 'scoped memory for lstm_deep_predictor.1']
  %s0 = inlined_call_operand.vmem [shape: f32[16,128], index: 0, kind: input, shape index: {}]
  %s1 = inlined_call_operand.hbm [shape: f32[3,128,128], index: 1, kind: input, shape index: {}]
  %s2 = inlined_call_operand.hbm [shape: f32[4,128,128], index: 2, kind: input, shape index: {}]
  %s3 = inlined_call_operand.vmem [shape: f32[4,128], index: 3, kind: input, shape index: {}]
  %s4 = inlined_call_operand.vmem [shape: f32[1,128], index: 4, kind: input, shape index: {}]
  %s5 = inlined_call_operand.<no memory space> [shape: f32[1,1], index: 5, kind: input, shape index: {}]
  %s6 = inlined_call_operand.vmem [shape: f32[2,1], index: 6, kind: output, shape index: {}]
  %s7 = sld [smem:[#allocation0]]
  $region42: #{lstm_deep_predictor.1} parent=0
    _
  %s9 = ssub.s32 1, %s7
  %s10 = scalar_select 0, %s9, %s7
  %v11 = vstv %s5
  %12 = vst [vmem:[#allocation3] sm:$0x1] %v11
  $region1: #{lstm_deep_predictor.1} parent=0
    #allocation4 [shape = 'u8[196608]{0}', space=vmem, size = 0x30000, scoped, tag = 'input window, operand 1, single buffered']
    #allocation5 [shape = 's32[1]{0}', space=sflag, size = 0x4, scoped, tag = 'scoped memory for lstm_deep_predictor.1']
    #allocation6 [shape = 'u8[262144]{0}', space=vmem, size = 0x40000, scoped, tag = 'input window, operand 2, single buffered']
    #allocation7 [shape = 's32[1]{0}', space=sflag, size = 0x4, scoped, tag = 'scoped memory for lstm_deep_predictor.1']
    %13 = vsyncpa [#allocation5], 0
    %14 = vsyncpa [#allocation7], 0
    // Predicated region
    $region2: #{lstm_deep_predictor.1} parent=1 // pred_check
      _
    $region3: #{lstm_deep_predictor.1} parent=1 // pred_check_branch
      %16 = sbr.rel (0) target = $region5
    $region4: #{lstm_deep_predictor.1} parent=1 // pred_region
      _
    $region5: #{lstm_deep_predictor.1} parent=1 // pred_fallthru
      _
    // Predicated region
    $region6: #{lstm_deep_predictor.1} parent=1 // pred_check
      _
    $region7: #{lstm_deep_predictor.1} parent=1 // pred_check_branch
      %18 = sbr.rel (0) target = $region9
    $region8: #{lstm_deep_predictor.1} parent=1 // pred_region
      %s20 = ssub.s32 6144, 6144
      %21 = vsyncadd [#allocation5], %s20
      %s22 = sshll.u32 [#allocation4], 4
      %s23 = int_to_ptr.vmem [resolvable:$true] %s22
      %28 = dma.hbm_to_vmem [thread:$0]  %s1, 6144, %s23, [#allocation5], 128, 128, 8
    $region9: #{lstm_deep_predictor.1} parent=1 // pred_fallthru
      _
    // Predicated region
    $region10: #{lstm_deep_predictor.1} parent=1 // pred_check
      _
    $region11: #{lstm_deep_predictor.1} parent=1 // pred_check_branch
      %30 = sbr.rel (0) target = $region13
    $region12: #{lstm_deep_predictor.1} parent=1 // pred_region
      %s32 = ssub.s32 8192, 8192
      %33 = vsyncadd [#allocation7], %s32
      %s34 = sshll.u32 [#allocation6], 4
      %s35 = int_to_ptr.vmem [resolvable:$true] %s34
      %40 = dma.hbm_to_vmem [thread:$0]  %s2, 8192, %s35, [#allocation7], 128, 128, 8
    $region13: #{lstm_deep_predictor.1} parent=1 // pred_fallthru
      _
    // Predicated region
    $region14: #{lstm_deep_predictor.1} parent=1 // pred_check
      _
    $region15: #{lstm_deep_predictor.1} parent=1 // pred_check_branch
      %42 = sbr.rel (0) target = $region17
    $region16: #{lstm_deep_predictor.1} parent=1 // pred_region
      _
    $region17: #{lstm_deep_predictor.1} parent=1 // pred_fallthru
      _
    // Predicated region
    $region18: #{lstm_deep_predictor.1} parent=1 // pred_check
      _
    $region19: #{lstm_deep_predictor.1} parent=1 // pred_check_branch
      %44 = sbr.rel (0) target = $region21
    $region20: #{lstm_deep_predictor.1} parent=1 // pred_region
      _
    $region21: #{lstm_deep_predictor.1} parent=1 // pred_fallthru
      _
    // Predicated region
    $region22: #{lstm_deep_predictor.1} parent=1 // pred_check
      _
    $region23: #{lstm_deep_predictor.1} parent=1 // pred_check_branch
      %46 = sbr.rel (0) target = $region25
    $region24: #{lstm_deep_predictor.1} parent=1 // pred_region
      _
    $region25: #{lstm_deep_predictor.1} parent=1 // pred_fallthru
      _
    // Predicated region
    $region26: #{lstm_deep_predictor.1} parent=1 // pred_check
      _
    $region27: #{lstm_deep_predictor.1} parent=1 // pred_check_branch
      %48 = sbr.rel (0) target = $region29
    $region28: #{lstm_deep_predictor.1} parent=1 // pred_region
      %49 = dma.done [#allocation5], 6144
    $region29: #{lstm_deep_predictor.1} parent=1 // pred_fallthru
      _
    // Predicated region
    $region30: #{lstm_deep_predictor.1} parent=1 // pred_check
      _
    $region31: #{lstm_deep_predictor.1} parent=1 // pred_check_branch
      %51 = sbr.rel (0) target = $region33
    $region32: #{lstm_deep_predictor.1} parent=1 // pred_region
      %52 = dma.done [#allocation7], 8192
    $region33: #{lstm_deep_predictor.1} parent=1 // pred_fallthru
      _
    %v53 = vlaneseq
    %v54 = vand.u32 %v53, 127
    %vm55 = vcmp.ge.s32.totalorder %v54, 64
    %vm56 = vcmp.lt.s32.totalorder %v54, 96
    %vm57 = vmand %vm55, %vm56
    %v58 = vld [vmem:[%s0] sm:$0xff]
    %v59 = vld [vmem:[%s0 + $0x8] sm:$0xff]
    %v60 = vld [vmem:[#allocation6] sm:$0xff]
    %v61 = vld [vmem:[#allocation6 + $0x8] sm:$0xff]
    %v62 = vld [vmem:[#allocation6 + $0x10] sm:$0xff]
    %v63 = vld [vmem:[#allocation6 + $0x18] sm:$0xff]
    %v64 = vld [vmem:[#allocation6 + $0x20] sm:$0xff]
    %v65 = vld [vmem:[#allocation6 + $0x28] sm:$0xff]
    %v66 = vld [vmem:[#allocation6 + $0x30] sm:$0xff]
    %v67 = vld [vmem:[#allocation6 + $0x38] sm:$0xff]
    %v68 = vld [vmem:[#allocation6 + $0x40] sm:$0xff]
    %v69 = vld [vmem:[#allocation6 + $0x48] sm:$0xff]
    %v70 = vld [vmem:[#allocation6 + $0x50] sm:$0xff]
    %v71 = vld [vmem:[#allocation6 + $0x58] sm:$0xff]
    %v72 = vld [vmem:[#allocation6 + $0x60] sm:$0xff]
    %v73 = vld [vmem:[#allocation6 + $0x68] sm:$0xff]
    %v74 = vld [vmem:[#allocation6 + $0x70] sm:$0xff]
    %v75 = vld [vmem:[#allocation6 + $0x78] sm:$0xff]
    %76 = vmatprep.subr.mxu0 0.0
    %77 = vmatpush1.msra.mxu0 %v60
    %78 = vmatprep.subr.mxu0 0.0
    %79 = vmatpush1.msra.mxu0 %v61
    %80 = vmatprep.subr.mxu0 0.0
    %81 = vmatpush1.msra.mxu0 %v62
    %82 = vmatprep.subr.mxu0 0.0
    %83 = vmatpush1.msra.mxu0 %v63
    %84 = vmatprep.subr.mxu0 0.0
    %85 = vmatpush1.msra.mxu0 %v64
    %86 = vmatprep.subr.mxu0 0.0
    %87 = vmatpush1.msra.mxu0 %v65
    %88 = vmatprep.subr.mxu0 0.0
    %89 = vmatpush1.msra.mxu0 %v66
    %90 = vmatprep.subr.mxu0 0.0
    %91 = vmatpush1.msra.mxu0 %v67
    %92 = vmatprep.subr.mxu0 0.0
    %93 = vmatpush1.msra.mxu0 %v68
    %94 = vmatprep.subr.mxu0 0.0
    %95 = vmatpush1.msra.mxu0 %v69
    %96 = vmatprep.subr.mxu0 0.0
    %97 = vmatpush1.msra.mxu0 %v70
    %98 = vmatprep.subr.mxu0 0.0
    %99 = vmatpush1.msra.mxu0 %v71
    %100 = vmatprep.subr.mxu0 0.0
    %101 = vmatpush1.msra.mxu0 %v72
    %102 = vmatprep.subr.mxu0 0.0
    %103 = vmatpush1.msra.mxu0 %v73
    %104 = vmatprep.subr.mxu0 0.0
    %105 = vmatpush1.msra.mxu0 %v74
    %106 = vmatprep.subr.mxu0 0.0
    %107 = vmatpush1.msra.mxu0 %v75
    %108 = vmatprep.subr.mxu0 0.0
    %109 = vmatpush1.msra.mxu0 0.0
    %110 = vmatprep.subr.mxu0 0.0
    %111 = vmatpush1.msra.mxu0 0.0
    %112 = vmatprep.subr.mxu0 0.0
    %113 = vmatpush1.msra.mxu0 0.0
    %114 = vmatprep.subr.mxu0 0.0
    %115 = vmatpush1.msra.mxu0 0.0
    %116 = vmatprep.subr.mxu0 0.0
    %117 = vmatpush1.msra.mxu0 0.0
    %118 = vmatprep.subr.mxu0 0.0
    %119 = vmatpush1.msra.mxu0 0.0
    %120 = vmatprep.subr.mxu0 0.0
    %121 = vmatpush1.msra.mxu0 0.0
    %122 = vmatprep.subr.mxu0 0.0
    %123 = vmatpush1.msra.mxu0 0.0
    %124 = vmatprep.subr.mxu0 0.0
    %125 = vmatpush1.msra.mxu0 0.0
    %126 = vmatprep.subr.mxu0 0.0
    %127 = vmatpush1.msra.mxu0 0.0
    %128 = vmatprep.subr.mxu0 0.0
    %129 = vmatpush1.msra.mxu0 0.0
    %130 = vmatprep.subr.mxu0 0.0
    %131 = vmatpush1.msra.mxu0 0.0
    %132 = vmatprep.subr.mxu0 0.0
    %133 = vmatpush1.msra.mxu0 0.0
    %134 = vmatprep.subr.mxu0 0.0
    %135 = vmatpush1.msra.mxu0 0.0
    %136 = vmatprep.subr.mxu0 0.0
    %137 = vmatpush1.msra.mxu0 0.0
    %138 = vmatprep.subr.mxu0 0.0
    %139 = vmatpush1.msra.mxu0 0.0
    %140 = vmatprep.mubr.f32.mxu0 0.0
    %141 = vmatmul.mubr.f32.gmra.mrb[0].mxu0 0.0
    %v142 = vpop.f32.mrb[0].mxu0
    %v143 = vadd.f32 0.0, %v142
    %v144 = vpop.f32.mrb[0].mxu0
    %145 = vdwg.mxu0
    %v146 = vadd.f32 %v58, %v143
    %v147 = vtanh.pop %v146
    %v148 = vxor.u32 %v146, 2147483648
    %v149 = vmul.f32 %v148, 1.442695
    %v150 = vpow.pop %v149
    %v151 = vadd.f32 %v150, 1.0
    %v152 = vrcp.pop %v151
    %v153 = vmul.f32 1.0, %v152
    %v154 = vsel %vm57, %v147, %v153
    %155 = vrot.lane.b32.xlu0 %v154, 96
    %v156 = vpop.permute.xlu0 %155
    %157 = vrot.lane.b32.xlu0 %v154, 64
    %v158 = vpop.permute.xlu0 %157
    %159 = vrot.lane.b32.xlu0 %v154, 32
    %v160 = vpop.permute.xlu0 %159
    %v161 = vmul.f32 %v156, 0.0
    %v162 = vmul.f32 %v154, %v158
    %v163 = vadd.f32 %v161, %v162
    %v164 = vtanh.pop %v163
    %v165 = vmul.f32 %v160, %v164
    %166 = vst [vmem:[#allocation2] sm:$0x3] %v165
    %167 = vmatprep.subr.mxu0 0.0
    %168 = vmatpush1.msra.mxu0 %v60
    %169 = vmatprep.subr.mxu0 0.0
    %170 = vmatpush1.msra.mxu0 %v61
    %171 = vmatprep.subr.mxu0 0.0
    %172 = vmatpush1.msra.mxu0 %v62
    %173 = vmatprep.subr.mxu0 0.0
    %174 = vmatpush1.msra.mxu0 %v63
    %175 = vmatprep.subr.mxu0 0.0
    %176 = vmatpush1.msra.mxu0 %v64
    %177 = vmatprep.subr.mxu0 0.0
    %178 = vmatpush1.msra.mxu0 %v65
    %179 = vmatprep.subr.mxu0 0.0
    %180 = vmatpush1.msra.mxu0 %v66
    %181 = vmatprep.subr.mxu0 0.0
    %182 = vmatpush1.msra.mxu0 %v67
    %183 = vmatprep.subr.mxu0 0.0
    %184 = vmatpush1.msra.mxu0 %v68
    %185 = vmatprep.subr.mxu0 0.0
    %186 = vmatpush1.msra.mxu0 %v69
    %187 = vmatprep.subr.mxu0 0.0
    %188 = vmatpush1.msra.mxu0 %v70
    %189 = vmatprep.subr.mxu0 0.0
    %190 = vmatpush1.msra.mxu0 %v71
    %191 = vmatprep.subr.mxu0 0.0
    %192 = vmatpush1.msra.mxu0 %v72
    %193 = vmatprep.subr.mxu0 0.0
    %194 = vmatpush1.msra.mxu0 %v73
    %195 = vmatprep.subr.mxu0 0.0
    %196 = vmatpush1.msra.mxu0 %v74
    %197 = vmatprep.subr.mxu0 0.0
    %198 = vmatpush1.msra.mxu0 %v75
    %199 = vmatprep.subr.mxu0 0.0
    %200 = vmatpush1.msra.mxu0 0.0
    %201 = vmatprep.subr.mxu0 0.0
    %202 = vmatpush1.msra.mxu0 0.0
    %203 = vmatprep.subr.mxu0 0.0
    %204 = vmatpush1.msra.mxu0 0.0
    %205 = vmatprep.subr.mxu0 0.0
    %206 = vmatpush1.msra.mxu0 0.0
    %207 = vmatprep.subr.mxu0 0.0
    %208 = vmatpush1.msra.mxu0 0.0
    %209 = vmatprep.subr.mxu0 0.0
    %210 = vmatpush1.msra.mxu0 0.0
    %211 = vmatprep.subr.mxu0 0.0
    %212 = vmatpush1.msra.mxu0 0.0
    %213 = vmatprep.subr.mxu0 0.0
    %214 = vmatpush1.msra.mxu0 0.0
    %215 = vmatprep.subr.mxu0 0.0
    %216 = vmatpush1.msra.mxu0 0.0
    %217 = vmatprep.subr.mxu0 0.0
    %218 = vmatpush1.msra.mxu0 0.0
    %219 = vmatprep.subr.mxu0 0.0
    %220 = vmatpush1.msra.mxu0 0.0
    %221 = vmatprep.subr.mxu0 0.0
    %222 = vmatpush1.msra.mxu0 0.0
    %223 = vmatprep.subr.mxu0 0.0
    %224 = vmatpush1.msra.mxu0 0.0
    %225 = vmatprep.subr.mxu0 0.0
    %226 = vmatpush1.msra.mxu0 0.0
    %227 = vmatprep.subr.mxu0 0.0
    %228 = vmatpush1.msra.mxu0 0.0
    %229 = vmatprep.subr.mxu0 0.0
    %230 = vmatpush1.msra.mxu0 0.0
    %231 = vmatprep.mubr.f32.mxu0 0.0
    %232 = vmatmul.mubr.f32.gmra.mrb[0].mxu0 %v165
    %v233 = vpop.f32.mrb[0].mxu0
    %v234 = vadd.f32 0.0, %v233
    %v235 = vpop.f32.mrb[0].mxu0
    %236 = vdwg.mxu0
    %v238 = vrot.slane %v234, 6
    %v240 = vadd.f32 %v58, %v238
    %v241 = vtanh.pop %v240
    %v242 = vxor.u32 %v240, 2147483648
    %v243 = vmul.f32 %v242, 1.442695
    %v244 = vpow.pop %v243
    %v245 = vadd.f32 %v244, 1.0
    %v246 = vrcp.pop %v245
    %v247 = vmul.f32 1.0, %v246
    %v248 = vsel %vm57, %v241, %v247
    %v250 = vrot.slane %v248, 2
    %252 = vrot.lane.b32.xlu0 %v250, 96
    %v253 = vpop.permute.xlu0 %252
    %254 = vrot.lane.b32.xlu0 %v250, 64
    %v255 = vpop.permute.xlu0 %254
    %256 = vrot.lane.b32.xlu0 %v250, 32
    %v257 = vpop.permute.xlu0 %256
    %v258 = vmul.f32 %v253, %v163
    %v260 = vrot.slane %v255, 6
    %v262 = vmul.f32 %v248, %v260
    %v264 = vrot.slane %v262, 2
    %v266 = vadd.f32 %v258, %v264
    %v267 = vtanh.pop %v266
    %v268 = vmul.f32 %v257, %v267
    %269 = vst [vmem:[#allocation2 + $0x2] sm:$0x3] %v268
    %270 = vmatprep.subr.mxu0 0.0
    %271 = vmatpush1.msra.mxu0 %v60
    %272 = vmatprep.subr.mxu0 0.0
    %273 = vmatpush1.msra.mxu0 %v61
    %274 = vmatprep.subr.mxu0 0.0
    %275 = vmatpush1.msra.mxu0 %v62
    %276 = vmatprep.subr.mxu0 0.0
    %277 = vmatpush1.msra.mxu0 %v63
    %278 = vmatprep.subr.mxu0 0.0
    %279 = vmatpush1.msra.mxu0 %v64
    %280 = vmatprep.subr.mxu0 0.0
    %281 = vmatpush1.msra.mxu0 %v65
    %282 = vmatprep.subr.mxu0 0.0
    %283 = vmatpush1.msra.mxu0 %v66
    %284 = vmatprep.subr.mxu0 0.0
    %285 = vmatpush1.msra.mxu0 %v67
    %286 = vmatprep.subr.mxu0 0.0
    %287 = vmatpush1.msra.mxu0 %v68
    %288 = vmatprep.subr.mxu0 0.0
    %289 = vmatpush1.msra.mxu0 %v69
    %290 = vmatprep.subr.mxu0 0.0
    %291 = vmatpush1.msra.mxu0 %v70
    %292 = vmatprep.subr.mxu0 0.0
    %293 = vmatpush1.msra.mxu0 %v71
    %294 = vmatprep.subr.mxu0 0.0
    %295 = vmatpush1.msra.mxu0 %v72
    %296 = vmatprep.subr.mxu0 0.0
    %297 = vmatpush1.msra.mxu0 %v73
    %298 = vmatprep.subr.mxu0 0.0
    %299 = vmatpush1.msra.mxu0 %v74
    %300 = vmatprep.subr.mxu0 0.0
    %301 = vmatpush1.msra.mxu0 %v75
    %302 = vmatprep.subr.mxu0 0.0
    %303 = vmatpush1.msra.mxu0 0.0
    %304 = vmatprep.subr.mxu0 0.0
    %305 = vmatpush1.msra.mxu0 0.0
    %306 = vmatprep.subr.mxu0 0.0
    %307 = vmatpush1.msra.mxu0 0.0
    %308 = vmatprep.subr.mxu0 0.0
    %309 = vmatpush1.msra.mxu0 0.0
    %310 = vmatprep.subr.mxu0 0.0
    %311 = vmatpush1.msra.mxu0 0.0
    %312 = vmatprep.subr.mxu0 0.0
    %313 = vmatpush1.msra.mxu0 0.0
    %314 = vmatprep.subr.mxu0 0.0
    %315 = vmatpush1.msra.mxu0 0.0
    %316 = vmatprep.subr.mxu0 0.0
    %317 = vmatpush1.msra.mxu0 0.0
    %318 = vmatprep.subr.mxu0 0.0
    %319 = vmatpush1.msra.mxu0 0.0
    %320 = vmatprep.subr.mxu0 0.0
    %321 = vmatpush1.msra.mxu0 0.0
    %322 = vmatprep.subr.mxu0 0.0
    %323 = vmatpush1.msra.mxu0 0.0
    %324 = vmatprep.subr.mxu0 0.0
    %325 = vmatpush1.msra.mxu0 0.0
    %326 = vmatprep.subr.mxu0 0.0
    %327 = vmatpush1.msra.mxu0 0.0
    %328 = vmatprep.subr.mxu0 0.0
    %329 = vmatpush1.msra.mxu0 0.0
    %330 = vmatprep.subr.mxu0 0.0
    %331 = vmatpush1.msra.mxu0 0.0
    %332 = vmatprep.subr.mxu0 0.0
    %333 = vmatpush1.msra.mxu0 0.0
    %334 = vmatprep.mubr.f32.mxu0 0.0
    %335 = vmatmul.mubr.f32.gmra.mrb[0].mxu0 %v268
    %v336 = vpop.f32.mrb[0].mxu0
    %v337 = vadd.f32 0.0, %v336
    %v338 = vpop.f32.mrb[0].mxu0
    %339 = vdwg.mxu0
    %v341 = vrot.slane %v337, 4
    %v343 = vadd.f32 %v58, %v341
    %v344 = vtanh.pop %v343
    %v345 = vxor.u32 %v343, 2147483648
    %v346 = vmul.f32 %v345, 1.442695
    %v347 = vpow.pop %v346
    %v348 = vadd.f32 %v347, 1.0
    %v349 = vrcp.pop %v348
    %v350 = vmul.f32 1.0, %v349
    %v351 = vsel %vm57, %v344, %v350
    %v353 = vrot.slane %v351, 4
    %355 = vrot.lane.b32.xlu0 %v353, 96
    %v356 = vpop.permute.xlu0 %355
    %357 = vrot.lane.b32.xlu0 %v353, 64
    %v358 = vpop.permute.xlu0 %357
    %359 = vrot.lane.b32.xlu0 %v353, 32
    %v360 = vpop.permute.xlu0 %359
    %v361 = vmul.f32 %v356, %v266
    %v363 = vrot.slane %v358, 4
    %v365 = vmul.f32 %v351, %v363
    %v367 = vrot.slane %v365, 4
    %v369 = vadd.f32 %v361, %v367
    %v370 = vtanh.pop %v369
    %v371 = vmul.f32 %v360, %v370
    %372 = vst [vmem:[#allocation2 + $0x4] sm:$0x3] %v371
    %373 = vmatprep.subr.mxu0 0.0
    %374 = vmatpush1.msra.mxu0 %v60
    %375 = vmatprep.subr.mxu0 0.0
    %376 = vmatpush1.msra.mxu0 %v61
    %377 = vmatprep.subr.mxu0 0.0
    %378 = vmatpush1.msra.mxu0 %v62
    %379 = vmatprep.subr.mxu0 0.0
    %380 = vmatpush1.msra.mxu0 %v63
    %381 = vmatprep.subr.mxu0 0.0
    %382 = vmatpush1.msra.mxu0 %v64
    %383 = vmatprep.subr.mxu0 0.0
    %384 = vmatpush1.msra.mxu0 %v65
    %385 = vmatprep.subr.mxu0 0.0
    %386 = vmatpush1.msra.mxu0 %v66
    %387 = vmatprep.subr.mxu0 0.0
    %388 = vmatpush1.msra.mxu0 %v67
    %389 = vmatprep.subr.mxu0 0.0
    %390 = vmatpush1.msra.mxu0 %v68
    %391 = vmatprep.subr.mxu0 0.0
    %392 = vmatpush1.msra.mxu0 %v69
    %393 = vmatprep.subr.mxu0 0.0
    %394 = vmatpush1.msra.mxu0 %v70
    %395 = vmatprep.subr.mxu0 0.0
    %396 = vmatpush1.msra.mxu0 %v71
    %397 = vmatprep.subr.mxu0 0.0
    %398 = vmatpush1.msra.mxu0 %v72
    %399 = vmatprep.subr.mxu0 0.0
    %400 = vmatpush1.msra.mxu0 %v73
    %401 = vmatprep.subr.mxu0 0.0
    %402 = vmatpush1.msra.mxu0 %v74
    %403 = vmatprep.subr.mxu0 0.0
    %404 = vmatpush1.msra.mxu0 %v75
    %405 = vmatprep.subr.mxu0 0.0
    %406 = vmatpush1.msra.mxu0 0.0
    %407 = vmatprep.subr.mxu0 0.0
    %408 = vmatpush1.msra.mxu0 0.0
    %409 = vmatprep.subr.mxu0 0.0
    %410 = vmatpush1.msra.mxu0 0.0
    %411 = vmatprep.subr.mxu0 0.0
    %412 = vmatpush1.msra.mxu0 0.0
    %413 = vmatprep.subr.mxu0 0.0
    %414 = vmatpush1.msra.mxu0 0.0
    %415 = vmatprep.subr.mxu0 0.0
    %416 = vmatpush1.msra.mxu0 0.0
    %417 = vmatprep.subr.mxu0 0.0
    %418 = vmatpush1.msra.mxu0 0.0
    %419 = vmatprep.subr.mxu0 0.0
    %420 = vmatpush1.msra.mxu0 0.0
    %421 = vmatprep.subr.mxu0 0.0
    %422 = vmatpush1.msra.mxu0 0.0
    %423 = vmatprep.subr.mxu0 0.0
    %424 = vmatpush1.msra.mxu0 0.0
    %425 = vmatprep.subr.mxu0 0.0
    %426 = vmatpush1.msra.mxu0 0.0
    %427 = vmatprep.subr.mxu0 0.0
    %428 = vmatpush1.msra.mxu0 0.0
    %429 = vmatprep.subr.mxu0 0.0
    %430 = vmatpush1.msra.mxu0 0.0
    %431 = vmatprep.subr.mxu0 0.0
    %432 = vmatpush1.msra.mxu0 0.0
    %433 = vmatprep.subr.mxu0 0.0
    %434 = vmatpush1.msra.mxu0 0.0
    %435 = vmatprep.subr.mxu0 0.0
    %436 = vmatpush1.msra.mxu0 0.0
    %437 = vmatprep.mubr.f32.mxu0 0.0
    %438 = vmatmul.mubr.f32.gmra.mrb[0].mxu0 %v371
    %v439 = vpop.f32.mrb[0].mxu0
    %v440 = vadd.f32 0.0, %v439
    %v441 = vpop.f32.mrb[0].mxu0
    %442 = vdwg.mxu0
    %v444 = vrot.slane %v440, 2
    %v446 = vadd.f32 %v58, %v444
    %v447 = vtanh.pop %v446
    %v448 = vxor.u32 %v446, 2147483648
    %v449 = vmul.f32 %v448, 1.442695
    %v450 = vpow.pop %v449
    %v451 = vadd.f32 %v450, 1.0
    %v452 = vrcp.pop %v451
    %v453 = vmul.f32 1.0, %v452
    %v454 = vsel %vm57, %v447, %v453
    %v456 = vrot.slane %v454, 6
    %458 = vrot.lane.b32.xlu0 %v456, 96
    %v459 = vpop.permute.xlu0 %458
    %460 = vrot.lane.b32.xlu0 %v456, 64
    %v461 = vpop.permute.xlu0 %460
    %462 = vrot.lane.b32.xlu0 %v456, 32
    %v463 = vpop.permute.xlu0 %462
    %v464 = vmul.f32 %v459, %v369
    %v466 = vrot.slane %v461, 2
    %v468 = vmul.f32 %v454, %v466
    %v470 = vrot.slane %v468, 6
    %v472 = vadd.f32 %v464, %v470
    %v473 = vtanh.pop %v472
    %v474 = vmul.f32 %v463, %v473
    %475 = vst [vmem:[#allocation2 + $0x6] sm:$0x3] %v474
    %476 = vmatprep.subr.mxu0 0.0
    %477 = vmatpush1.msra.mxu0 %v60
    %478 = vmatprep.subr.mxu0 0.0
    %479 = vmatpush1.msra.mxu0 %v61
    %480 = vmatprep.subr.mxu0 0.0
    %481 = vmatpush1.msra.mxu0 %v62
    %482 = vmatprep.subr.mxu0 0.0
    %483 = vmatpush1.msra.mxu0 %v63
    %484 = vmatprep.subr.mxu0 0.0
    %485 = vmatpush1.msra.mxu0 %v64
    %486 = vmatprep.subr.mxu0 0.0
    %487 = vmatpush1.msra.mxu0 %v65
    %488 = vmatprep.subr.mxu0 0.0
    %489 = vmatpush1.msra.mxu0 %v66
    %490 = vmatprep.subr.mxu0 0.0
    %491 = vmatpush1.msra.mxu0 %v67
    %492 = vmatprep.subr.mxu0 0.0
    %493 = vmatpush1.msra.mxu0 %v68
    %494 = vmatprep.subr.mxu0 0.0
    %495 = vmatpush1.msra.mxu0 %v69
    %496 = vmatprep.subr.mxu0 0.0
    %497 = vmatpush1.msra.mxu0 %v70
    %498 = vmatprep.subr.mxu0 0.0
    %499 = vmatpush1.msra.mxu0 %v71
    %500 = vmatprep.subr.mxu0 0.0
    %501 = vmatpush1.msra.mxu0 %v72
    %502 = vmatprep.subr.mxu0 0.0
    %503 = vmatpush1.msra.mxu0 %v73
    %504 = vmatprep.subr.mxu0 0.0
    %505 = vmatpush1.msra.mxu0 %v74
    %506 = vmatprep.subr.mxu0 0.0
    %507 = vmatpush1.msra.mxu0 %v75
    %508 = vmatprep.subr.mxu0 0.0
    %509 = vmatpush1.msra.mxu0 0.0
    %510 = vmatprep.subr.mxu0 0.0
    %511 = vmatpush1.msra.mxu0 0.0
    %512 = vmatprep.subr.mxu0 0.0
    %513 = vmatpush1.msra.mxu0 0.0
    %514 = vmatprep.subr.mxu0 0.0
    %515 = vmatpush1.msra.mxu0 0.0
    %516 = vmatprep.subr.mxu0 0.0
    %517 = vmatpush1.msra.mxu0 0.0
    %518 = vmatprep.subr.mxu0 0.0
    %519 = vmatpush1.msra.mxu0 0.0
    %520 = vmatprep.subr.mxu0 0.0
    %521 = vmatpush1.msra.mxu0 0.0
    %522 = vmatprep.subr.mxu0 0.0
    %523 = vmatpush1.msra.mxu0 0.0
    %524 = vmatprep.subr.mxu0 0.0
    %525 = vmatpush1.msra.mxu0 0.0
    %526 = vmatprep.subr.mxu0 0.0
    %527 = vmatpush1.msra.mxu0 0.0
    %528 = vmatprep.subr.mxu0 0.0
    %529 = vmatpush1.msra.mxu0 0.0
    %530 = vmatprep.subr.mxu0 0.0
    %531 = vmatpush1.msra.mxu0 0.0
    %532 = vmatprep.subr.mxu0 0.0
    %533 = vmatpush1.msra.mxu0 0.0
    %534 = vmatprep.subr.mxu0 0.0
    %535 = vmatpush1.msra.mxu0 0.0
    %536 = vmatprep.subr.mxu0 0.0
    %537 = vmatpush1.msra.mxu0 0.0
    %538 = vmatprep.subr.mxu0 0.0
    %539 = vmatpush1.msra.mxu0 0.0
    %540 = vmatprep.mubr.f32.mxu0 0.0
    %541 = vmatmul.mubr.f32.gmra.mrb[0].mxu0 %v474
    %v542 = vpop.f32.mrb[0].mxu0
    %v543 = vadd.f32 0.0, %v542
    %v544 = vpop.f32.mrb[0].mxu0
    %545 = vdwg.mxu0
    %v546 = vadd.f32 %v59, %v543
    %v547 = vtanh.pop %v546
    %v548 = vxor.u32 %v546, 2147483648
    %v549 = vmul.f32 %v548, 1.442695
    %v550 = vpow.pop %v549
    %v551 = vadd.f32 %v550, 1.0
    %v552 = vrcp.pop %v551
    %v553 = vmul.f32 1.0, %v552
    %v554 = vsel %vm57, %v547, %v553
    %555 = vrot.lane.b32.xlu0 %v554, 96
    %v556 = vpop.permute.xlu0 %555
    %557 = vrot.lane.b32.xlu0 %v554, 64
    %v558 = vpop.permute.xlu0 %557
    %559 = vrot.lane.b32.xlu0 %v554, 32
    %v560 = vpop.permute.xlu0 %559
    %v561 = vmul.f32 %v556, %v472
    %v562 = vmul.f32 %v554, %v558
    %v563 = vadd.f32 %v561, %v562
    %v564 = vtanh.pop %v563
    %v565 = vmul.f32 %v560, %v564
    %566 = vst [vmem:[#allocation2 + $0x8] sm:$0x3] %v565
    %567 = vmatprep.subr.mxu0 0.0
    %568 = vmatpush1.msra.mxu0 %v60
    %569 = vmatprep.subr.mxu0 0.0
    %570 = vmatpush1.msra.mxu0 %v61
    %571 = vmatprep.subr.mxu0 0.0
    %572 = vmatpush1.msra.mxu0 %v62
    %573 = vmatprep.subr.mxu0 0.0
    %574 = vmatpush1.msra.mxu0 %v63
    %575 = vmatprep.subr.mxu0 0.0
    %576 = vmatpush1.msra.mxu0 %v64
    %577 = vmatprep.subr.mxu0 0.0
    %578 = vmatpush1.msra.mxu0 %v65
    %579 = vmatprep.subr.mxu0 0.0
    %580 = vmatpush1.msra.mxu0 %v66
    %581 = vmatprep.subr.mxu0 0.0
    %582 = vmatpush1.msra.mxu0 %v67
    %583 = vmatprep.subr.mxu0 0.0
    %584 = vmatpush1.msra.mxu0 %v68
    %585 = vmatprep.subr.mxu0 0.0
    %586 = vmatpush1.msra.mxu0 %v69
    %587 = vmatprep.subr.mxu0 0.0
    %588 = vmatpush1.msra.mxu0 %v70
    %589 = vmatprep.subr.mxu0 0.0
    %590 = vmatpush1.msra.mxu0 %v71
    %591 = vmatprep.subr.mxu0 0.0
    %592 = vmatpush1.msra.mxu0 %v72
    %593 = vmatprep.subr.mxu0 0.0
    %594 = vmatpush1.msra.mxu0 %v73
    %595 = vmatprep.subr.mxu0 0.0
    %596 = vmatpush1.msra.mxu0 %v74
    %597 = vmatprep.subr.mxu0 0.0
    %598 = vmatpush1.msra.mxu0 %v75
    %599 = vmatprep.subr.mxu0 0.0
    %600 = vmatpush1.msra.mxu0 0.0
    %601 = vmatprep.subr.mxu0 0.0
    %602 = vmatpush1.msra.mxu0 0.0
    %603 = vmatprep.subr.mxu0 0.0
    %604 = vmatpush1.msra.mxu0 0.0
    %605 = vmatprep.subr.mxu0 0.0
    %606 = vmatpush1.msra.mxu0 0.0
    %607 = vmatprep.subr.mxu0 0.0
    %608 = vmatpush1.msra.mxu0 0.0
    %609 = vmatprep.subr.mxu0 0.0
    %610 = vmatpush1.msra.mxu0 0.0
    %611 = vmatprep.subr.mxu0 0.0
    %612 = vmatpush1.msra.mxu0 0.0
    %613 = vmatprep.subr.mxu0 0.0
    %614 = vmatpush1.msra.mxu0 0.0
    %615 = vmatprep.subr.mxu0 0.0
    %616 = vmatpush1.msra.mxu0 0.0
    %617 = vmatprep.subr.mxu0 0.0
    %618 = vmatpush1.msra.mxu0 0.0
    %619 = vmatprep.subr.mxu0 0.0
    %620 = vmatpush1.msra.mxu0 0.0
    %621 = vmatprep.subr.mxu0 0.0
    %622 = vmatpush1.msra.mxu0 0.0
    %623 = vmatprep.subr.mxu0 0.0
    %624 = vmatpush1.msra.mxu0 0.0
    %625 = vmatprep.subr.mxu0 0.0
    %626 = vmatpush1.msra.mxu0 0.0
    %627 = vmatprep.subr.mxu0 0.0
    %628 = vmatpush1.msra.mxu0 0.0
    %629 = vmatprep.subr.mxu0 0.0
    %630 = vmatpush1.msra.mxu0 0.0
    %631 = vmatprep.mubr.f32.mxu0 0.0
    %632 = vmatmul.mubr.f32.gmra.mrb[0].mxu0 %v565
    %v633 = vpop.f32.mrb[0].mxu0
    %v634 = vadd.f32 0.0, %v633
    %v635 = vpop.f32.mrb[0].mxu0
    %636 = vdwg.mxu0
    %v638 = vrot.slane %v634, 6
    %v640 = vadd.f32 %v59, %v638
    %v641 = vtanh.pop %v640
    %v642 = vxor.u32 %v640, 2147483648
    %v643 = vmul.f32 %v642, 1.442695
    %v644 = vpow.pop %v643
    %v645 = vadd.f32 %v644, 1.0
    %v646 = vrcp.pop %v645
    %v647 = vmul.f32 1.0, %v646
    %v648 = vsel %vm57, %v641, %v647
    %v650 = vrot.slane %v648, 2
    %652 = vrot.lane.b32.xlu0 %v650, 96
    %v653 = vpop.permute.xlu0 %652
    %654 = vrot.lane.b32.xlu0 %v650, 64
    %v655 = vpop.permute.xlu0 %654
    %656 = vrot.lane.b32.xlu0 %v650, 32
    %v657 = vpop.permute.xlu0 %656
    %v658 = vmul.f32 %v653, %v563
    %v660 = vrot.slane %v655, 6
    %v662 = vmul.f32 %v648, %v660
    %v664 = vrot.slane %v662, 2
    %v666 = vadd.f32 %v658, %v664
    %v667 = vtanh.pop %v666
    %v668 = vmul.f32 %v657, %v667
    %669 = vst [vmem:[#allocation2 + $0xa] sm:$0x3] %v668
    %670 = vmatprep.subr.mxu0 0.0
    %671 = vmatpush1.msra.mxu0 %v60
    %672 = vmatprep.subr.mxu0 0.0
    %673 = vmatpush1.msra.mxu0 %v61
    %674 = vmatprep.subr.mxu0 0.0
    %675 = vmatpush1.msra.mxu0 %v62
    %676 = vmatprep.subr.mxu0 0.0
    %677 = vmatpush1.msra.mxu0 %v63
    %678 = vmatprep.subr.mxu0 0.0
    %679 = vmatpush1.msra.mxu0 %v64
    %680 = vmatprep.subr.mxu0 0.0
    %681 = vmatpush1.msra.mxu0 %v65
    %682 = vmatprep.subr.mxu0 0.0
    %683 = vmatpush1.msra.mxu0 %v66
    %684 = vmatprep.subr.mxu0 0.0
    %685 = vmatpush1.msra.mxu0 %v67
    %686 = vmatprep.subr.mxu0 0.0
    %687 = vmatpush1.msra.mxu0 %v68
    %688 = vmatprep.subr.mxu0 0.0
    %689 = vmatpush1.msra.mxu0 %v69
    %690 = vmatprep.subr.mxu0 0.0
    %691 = vmatpush1.msra.mxu0 %v70
    %692 = vmatprep.subr.mxu0 0.0
    %693 = vmatpush1.msra.mxu0 %v71
    %694 = vmatprep.subr.mxu0 0.0
    %695 = vmatpush1.msra.mxu0 %v72
    %696 = vmatprep.subr.mxu0 0.0
    %697 = vmatpush1.msra.mxu0 %v73
    %698 = vmatprep.subr.mxu0 0.0
    %699 = vmatpush1.msra.mxu0 %v74
    %700 = vmatprep.subr.mxu0 0.0
    %701 = vmatpush1.msra.mxu0 %v75
    %702 = vmatprep.subr.mxu0 0.0
    %703 = vmatpush1.msra.mxu0 0.0
    %704 = vmatprep.subr.mxu0 0.0
    %705 = vmatpush1.msra.mxu0 0.0
    %706 = vmatprep.subr.mxu0 0.0
    %707 = vmatpush1.msra.mxu0 0.0
    %708 = vmatprep.subr.mxu0 0.0
    %709 = vmatpush1.msra.mxu0 0.0
    %710 = vmatprep.subr.mxu0 0.0
    %711 = vmatpush1.msra.mxu0 0.0
    %712 = vmatprep.subr.mxu0 0.0
    %713 = vmatpush1.msra.mxu0 0.0
    %714 = vmatprep.subr.mxu0 0.0
    %715 = vmatpush1.msra.mxu0 0.0
    %716 = vmatprep.subr.mxu0 0.0
    %717 = vmatpush1.msra.mxu0 0.0
    %718 = vmatprep.subr.mxu0 0.0
    %719 = vmatpush1.msra.mxu0 0.0
    %720 = vmatprep.subr.mxu0 0.0
    %721 = vmatpush1.msra.mxu0 0.0
    %722 = vmatprep.subr.mxu0 0.0
    %723 = vmatpush1.msra.mxu0 0.0
    %724 = vmatprep.subr.mxu0 0.0
    %725 = vmatpush1.msra.mxu0 0.0
    %726 = vmatprep.subr.mxu0 0.0
    %727 = vmatpush1.msra.mxu0 0.0
    %728 = vmatprep.subr.mxu0 0.0
    %729 = vmatpush1.msra.mxu0 0.0
    %730 = vmatprep.subr.mxu0 0.0
    %731 = vmatpush1.msra.mxu0 0.0
    %732 = vmatprep.subr.mxu0 0.0
    %733 = vmatpush1.msra.mxu0 0.0
    %734 = vmatprep.mubr.f32.mxu0 0.0
    %735 = vmatmul.mubr.f32.gmra.mrb[0].mxu0 %v668
    %v736 = vpop.f32.mrb[0].mxu0
    %v737 = vadd.f32 0.0, %v736
    %v738 = vpop.f32.mrb[0].mxu0
    %739 = vdwg.mxu0
    %v741 = vrot.slane %v737, 4
    %v743 = vadd.f32 %v59, %v741
    %v744 = vtanh.pop %v743
    %v745 = vxor.u32 %v743, 2147483648
    %v746 = vmul.f32 %v745, 1.442695
    %v747 = vpow.pop %v746
    %v748 = vadd.f32 %v747, 1.0
    %v749 = vrcp.pop %v748
    %v750 = vmul.f32 1.0, %v749
    %v751 = vsel %vm57, %v744, %v750
    %v753 = vrot.slane %v751, 4
    %755 = vrot.lane.b32.xlu0 %v753, 96
    %v756 = vpop.permute.xlu0 %755
    %757 = vrot.lane.b32.xlu0 %v753, 64
    %v758 = vpop.permute.xlu0 %757
    %759 = vrot.lane.b32.xlu0 %v753, 32
    %v760 = vpop.permute.xlu0 %759
    %v761 = vmul.f32 %v756, %v666
    %v763 = vrot.slane %v758, 4
    %v765 = vmul.f32 %v751, %v763
    %v767 = vrot.slane %v765, 4
    %v769 = vadd.f32 %v761, %v767
    %v770 = vtanh.pop %v769
    %v771 = vmul.f32 %v760, %v770
    %772 = vst [vmem:[#allocation2 + $0xc] sm:$0x3] %v771
    %773 = vmatprep.subr.mxu0 0.0
    %774 = vmatpush1.msra.mxu0 %v60
    %775 = vmatprep.subr.mxu0 0.0
    %776 = vmatpush1.msra.mxu0 %v61
    %777 = vmatprep.subr.mxu0 0.0
    %778 = vmatpush1.msra.mxu0 %v62
    %779 = vmatprep.subr.mxu0 0.0
    %780 = vmatpush1.msra.mxu0 %v63
    %781 = vmatprep.subr.mxu0 0.0
    %782 = vmatpush1.msra.mxu0 %v64
    %783 = vmatprep.subr.mxu0 0.0
    %784 = vmatpush1.msra.mxu0 %v65
    %785 = vmatprep.subr.mxu0 0.0
    %786 = vmatpush1.msra.mxu0 %v66
    %787 = vmatprep.subr.mxu0 0.0
    %788 = vmatpush1.msra.mxu0 %v67
    %789 = vmatprep.subr.mxu0 0.0
    %790 = vmatpush1.msra.mxu0 %v68
    %791 = vmatprep.subr.mxu0 0.0
    %792 = vmatpush1.msra.mxu0 %v69
    %793 = vmatprep.subr.mxu0 0.0
    %794 = vmatpush1.msra.mxu0 %v70
    %795 = vmatprep.subr.mxu0 0.0
    %796 = vmatpush1.msra.mxu0 %v71
    %797 = vmatprep.subr.mxu0 0.0
    %798 = vmatpush1.msra.mxu0 %v72
    %799 = vmatprep.subr.mxu0 0.0
    %800 = vmatpush1.msra.mxu0 %v73
    %801 = vmatprep.subr.mxu0 0.0
    %802 = vmatpush1.msra.mxu0 %v74
    %803 = vmatprep.subr.mxu0 0.0
    %804 = vmatpush1.msra.mxu0 %v75
    %805 = vmatprep.subr.mxu0 0.0
    %806 = vmatpush1.msra.mxu0 0.0
    %807 = vmatprep.subr.mxu0 0.0
    %808 = vmatpush1.msra.mxu0 0.0
    %809 = vmatprep.subr.mxu0 0.0
    %810 = vmatpush1.msra.mxu0 0.0
    %811 = vmatprep.subr.mxu0 0.0
    %812 = vmatpush1.msra.mxu0 0.0
    %813 = vmatprep.subr.mxu0 0.0
    %814 = vmatpush1.msra.mxu0 0.0
    %815 = vmatprep.subr.mxu0 0.0
    %816 = vmatpush1.msra.mxu0 0.0
    %817 = vmatprep.subr.mxu0 0.0
    %818 = vmatpush1.msra.mxu0 0.0
    %819 = vmatprep.subr.mxu0 0.0
    %820 = vmatpush1.msra.mxu0 0.0
    %821 = vmatprep.subr.mxu0 0.0
    %822 = vmatpush1.msra.mxu0 0.0
    %823 = vmatprep.subr.mxu0 0.0
    %824 = vmatpush1.msra.mxu0 0.0
    %825 = vmatprep.subr.mxu0 0.0
    %826 = vmatpush1.msra.mxu0 0.0
    %827 = vmatprep.subr.mxu0 0.0
    %828 = vmatpush1.msra.mxu0 0.0
    %829 = vmatprep.subr.mxu0 0.0
    %830 = vmatpush1.msra.mxu0 0.0
    %831 = vmatprep.subr.mxu0 0.0
    %832 = vmatpush1.msra.mxu0 0.0
    %833 = vmatprep.subr.mxu0 0.0
    %834 = vmatpush1.msra.mxu0 0.0
    %835 = vmatprep.subr.mxu0 0.0
    %836 = vmatpush1.msra.mxu0 0.0
    %837 = vmatprep.mubr.f32.mxu0 0.0
    %838 = vmatmul.mubr.f32.gmra.mrb[0].mxu0 %v771
    %v839 = vpop.f32.mrb[0].mxu0
    %v840 = vadd.f32 0.0, %v839
    %v841 = vpop.f32.mrb[0].mxu0
    %842 = vdwg.mxu0
    %v844 = vrot.slane %v840, 2
    %v846 = vadd.f32 %v59, %v844
    %v847 = vtanh.pop %v846
    %v848 = vxor.u32 %v846, 2147483648
    %v849 = vmul.f32 %v848, 1.442695
    %v850 = vpow.pop %v849
    %v851 = vadd.f32 %v850, 1.0
    %v852 = vrcp.pop %v851
    %v853 = vmul.f32 1.0, %v852
    %v854 = vsel %vm57, %v847, %v853
    %v856 = vrot.slane %v854, 6
    %858 = vrot.lane.b32.xlu0 %v856, 96
    %v859 = vpop.permute.xlu0 %858
    %860 = vrot.lane.b32.xlu0 %v856, 64
    %v861 = vpop.permute.xlu0 %860
    %862 = vrot.lane.b32.xlu0 %v856, 32
    %v863 = vpop.permute.xlu0 %862
    %v864 = vmul.f32 %v859, %v769
    %v866 = vrot.slane %v861, 2
    %v868 = vmul.f32 %v854, %v866
    %v870 = vrot.slane %v868, 6
    %v872 = vadd.f32 %v864, %v870
    %v873 = vtanh.pop %v872
    %v874 = vmul.f32 %v863, %v873
    %875 = vst [vmem:[#allocation2 + $0xe] sm:$0x3] %v874
    %v876 = vld [vmem:[#allocation2] sm:$0xff]
    %v877 = vld [vmem:[#allocation2 + $0x8] sm:$0xff]
    %v878 = vld [vmem:[#allocation4] sm:$0xff]
    %v879 = vld [vmem:[#allocation4 + $0x8] sm:$0xff]
    %v880 = vld [vmem:[#allocation4 + $0x10] sm:$0xff]
    %v881 = vld [vmem:[#allocation4 + $0x18] sm:$0xff]
    %v882 = vld [vmem:[#allocation4 + $0x20] sm:$0xff]
    %v883 = vld [vmem:[#allocation4 + $0x28] sm:$0xff]
    %v884 = vld [vmem:[#allocation4 + $0x30] sm:$0xff]
    %v885 = vld [vmem:[#allocation4 + $0x38] sm:$0xff]
    %v886 = vld [vmem:[#allocation4 + $0x40] sm:$0xff]
    %v887 = vld [vmem:[#allocation4 + $0x48] sm:$0xff]
    %v888 = vld [vmem:[#allocation4 + $0x50] sm:$0xff]
    %v889 = vld [vmem:[#allocation4 + $0x58] sm:$0xff]
    %v890 = vld [vmem:[#allocation4 + $0x60] sm:$0xff]
    %v891 = vld [vmem:[#allocation4 + $0x68] sm:$0xff]
    %v892 = vld [vmem:[#allocation4 + $0x70] sm:$0xff]
    %v893 = vld [vmem:[#allocation4 + $0x78] sm:$0xff]
    %v894 = vld [vmem:[%s3 + $0x1] sm:$0x1]
    %v895 = vlaneseq
    %v896 = vshrl.u32 %v895, 7
    %v897 = vsub.s32 0, %v896
    %v898 = vrot.slane %v894, %v897
    %899 = vmatprep.subr.mxu0 0.0
    %900 = vmatpush1.msra.mxu0 %v878
    %901 = vmatprep.subr.mxu0 0.0
    %902 = vmatpush1.msra.mxu0 %v879
    %903 = vmatprep.subr.mxu0 0.0
    %904 = vmatpush1.msra.mxu0 %v880
    %905 = vmatprep.subr.mxu0 0.0
    %906 = vmatpush1.msra.mxu0 %v881
    %907 = vmatprep.subr.mxu0 0.0
    %908 = vmatpush1.msra.mxu0 %v882
    %909 = vmatprep.subr.mxu0 0.0
    %910 = vmatpush1.msra.mxu0 %v883
    %911 = vmatprep.subr.mxu0 0.0
    %912 = vmatpush1.msra.mxu0 %v884
    %913 = vmatprep.subr.mxu0 0.0
    %914 = vmatpush1.msra.mxu0 %v885
    %915 = vmatprep.subr.mxu0 0.0
    %916 = vmatpush1.msra.mxu0 %v886
    %917 = vmatprep.subr.mxu0 0.0
    %918 = vmatpush1.msra.mxu0 %v887
    %919 = vmatprep.subr.mxu0 0.0
    %920 = vmatpush1.msra.mxu0 %v888
    %921 = vmatprep.subr.mxu0 0.0
    %922 = vmatpush1.msra.mxu0 %v889
    %923 = vmatprep.subr.mxu0 0.0
    %924 = vmatpush1.msra.mxu0 %v890
    %925 = vmatprep.subr.mxu0 0.0
    %926 = vmatpush1.msra.mxu0 %v891
    %927 = vmatprep.subr.mxu0 0.0
    %928 = vmatpush1.msra.mxu0 %v892
    %929 = vmatprep.subr.mxu0 0.0
    %930 = vmatpush1.msra.mxu0 %v893
    %931 = vmatprep.subr.mxu0 0.0
    %932 = vmatpush1.msra.mxu0 0.0
    %933 = vmatprep.subr.mxu0 0.0
    %934 = vmatpush1.msra.mxu0 0.0
    %935 = vmatprep.subr.mxu0 0.0
    %936 = vmatpush1.msra.mxu0 0.0
    %937 = vmatprep.subr.mxu0 0.0
    %938 = vmatpush1.msra.mxu0 0.0
    %939 = vmatprep.subr.mxu0 0.0
    %940 = vmatpush1.msra.mxu0 0.0
    %941 = vmatprep.subr.mxu0 0.0
    %942 = vmatpush1.msra.mxu0 0.0
    %943 = vmatprep.subr.mxu0 0.0
    %944 = vmatpush1.msra.mxu0 0.0
    %945 = vmatprep.subr.mxu0 0.0
    %946 = vmatpush1.msra.mxu0 0.0
    %947 = vmatprep.subr.mxu0 0.0
    %948 = vmatpush1.msra.mxu0 0.0
    %949 = vmatprep.subr.mxu0 0.0
    %950 = vmatpush1.msra.mxu0 0.0
    %951 = vmatprep.subr.mxu0 0.0
    %952 = vmatpush1.msra.mxu0 0.0
    %953 = vmatprep.subr.mxu0 0.0
    %954 = vmatpush1.msra.mxu0 0.0
    %955 = vmatprep.subr.mxu0 0.0
    %956 = vmatpush1.msra.mxu0 0.0
    %957 = vmatprep.subr.mxu0 0.0
    %958 = vmatpush1.msra.mxu0 0.0
    %959 = vmatprep.subr.mxu0 0.0
    %960 = vmatpush1.msra.mxu0 0.0
    %961 = vmatprep.subr.mxu0 0.0
    %962 = vmatpush1.msra.mxu0 0.0
    %963 = vmatprep.mubr.f32.mxu0 0.0
    %964 = vmatmul.mubr.f32.gmra.mrb[0].mxu0 %v876
    %v965 = vpop.f32.mrb[0].mxu0
    %v966 = vadd.f32 %v898, %v965
    %v967 = vpop.f32.mrb[0].mxu0
    %968 = vmatprep.mubr.f32.mxu0 0.0
    %969 = vmatmul.mubr.f32.gmra.mrb[0].mxu0 %v877
    %v970 = vpop.f32.mrb[0].mxu0
    %v971 = vadd.f32 %v898, %v970
    %v972 = vpop.f32.mrb[0].mxu0
    %973 = vdwg.mxu0
    %s974 = scalar_lea.vmem [#allocation6], 128
    %v975 = vld [vmem:[%s974] sm:$0xff]
    %v976 = vld [vmem:[%s974 + $0x8] sm:$0xff]
    %v977 = vld [vmem:[%s974 + $0x10] sm:$0xff]
    %v978 = vld [vmem:[%s974 + $0x18] sm:$0xff]
    %v979 = vld [vmem:[%s974 + $0x20] sm:$0xff]
    %v980 = vld [vmem:[%s974 + $0x28] sm:$0xff]
    %v981 = vld [vmem:[%s974 + $0x30] sm:$0xff]
    %v982 = vld [vmem:[%s974 + $0x38] sm:$0xff]
    %v983 = vld [vmem:[%s974 + $0x40] sm:$0xff]
    %v984 = vld [vmem:[%s974 + $0x48] sm:$0xff]
    %v985 = vld [vmem:[%s974 + $0x50] sm:$0xff]
    %v986 = vld [vmem:[%s974 + $0x58] sm:$0xff]
    %v987 = vld [vmem:[%s974 + $0x60] sm:$0xff]
    %v988 = vld [vmem:[%s974 + $0x68] sm:$0xff]
    %v989 = vld [vmem:[%s974 + $0x70] sm:$0xff]
    %v990 = vld [vmem:[%s974 + $0x78] sm:$0xff]
    %991 = vmatprep.subr.mxu0 0.0
    %992 = vmatpush1.msra.mxu0 %v975
    %993 = vmatprep.subr.mxu0 0.0
    %994 = vmatpush1.msra.mxu0 %v976
    %995 = vmatprep.subr.mxu0 0.0
    %996 = vmatpush1.msra.mxu0 %v977
    %997 = vmatprep.subr.mxu0 0.0
    %998 = vmatpush1.msra.mxu0 %v978
    %999 = vmatprep.subr.mxu0 0.0
    %1000 = vmatpush1.msra.mxu0 %v979
    %1001 = vmatprep.subr.mxu0 0.0
    %1002 = vmatpush1.msra.mxu0 %v980
    %1003 = vmatprep.subr.mxu0 0.0
    %1004 = vmatpush1.msra.mxu0 %v981
    %1005 = vmatprep.subr.mxu0 0.0
    %1006 = vmatpush1.msra.mxu0 %v982
    %1007 = vmatprep.subr.mxu0 0.0
    %1008 = vmatpush1.msra.mxu0 %v983
    %1009 = vmatprep.subr.mxu0 0.0
    %1010 = vmatpush1.msra.mxu0 %v984
    %1011 = vmatprep.subr.mxu0 0.0
    %1012 = vmatpush1.msra.mxu0 %v985
    %1013 = vmatprep.subr.mxu0 0.0
    %1014 = vmatpush1.msra.mxu0 %v986
    %1015 = vmatprep.subr.mxu0 0.0
    %1016 = vmatpush1.msra.mxu0 %v987
    %1017 = vmatprep.subr.mxu0 0.0
    %1018 = vmatpush1.msra.mxu0 %v988
    %1019 = vmatprep.subr.mxu0 0.0
    %1020 = vmatpush1.msra.mxu0 %v989
    %1021 = vmatprep.subr.mxu0 0.0
    %1022 = vmatpush1.msra.mxu0 %v990
    %1023 = vmatprep.subr.mxu0 0.0
    %1024 = vmatpush1.msra.mxu0 0.0
    %1025 = vmatprep.subr.mxu0 0.0
    %1026 = vmatpush1.msra.mxu0 0.0
    %1027 = vmatprep.subr.mxu0 0.0
    %1028 = vmatpush1.msra.mxu0 0.0
    %1029 = vmatprep.subr.mxu0 0.0
    %1030 = vmatpush1.msra.mxu0 0.0
    %1031 = vmatprep.subr.mxu0 0.0
    %1032 = vmatpush1.msra.mxu0 0.0
    %1033 = vmatprep.subr.mxu0 0.0
    %1034 = vmatpush1.msra.mxu0 0.0
    %1035 = vmatprep.subr.mxu0 0.0
    %1036 = vmatpush1.msra.mxu0 0.0
    %1037 = vmatprep.subr.mxu0 0.0
    %1038 = vmatpush1.msra.mxu0 0.0
    %1039 = vmatprep.subr.mxu0 0.0
    %1040 = vmatpush1.msra.mxu0 0.0
    %1041 = vmatprep.subr.mxu0 0.0
    %1042 = vmatpush1.msra.mxu0 0.0
    %1043 = vmatprep.subr.mxu0 0.0
    %1044 = vmatpush1.msra.mxu0 0.0
    %1045 = vmatprep.subr.mxu0 0.0
    %1046 = vmatpush1.msra.mxu0 0.0
    %1047 = vmatprep.subr.mxu0 0.0
    %1048 = vmatpush1.msra.mxu0 0.0
    %1049 = vmatprep.subr.mxu0 0.0
    %1050 = vmatpush1.msra.mxu0 0.0
    %1051 = vmatprep.subr.mxu0 0.0
    %1052 = vmatpush1.msra.mxu0 0.0
    %1053 = vmatprep.subr.mxu0 0.0
    %1054 = vmatpush1.msra.mxu0 0.0
    %1055 = vmatprep.mubr.f32.mxu0 0.0
    %1056 = vmatmul.mubr.f32.gmra.mrb[0].mxu0 0.0
    %v1057 = vpop.f32.mrb[0].mxu0
    %v1058 = vadd.f32 0.0, %v1057
    %v1059 = vpop.f32.mrb[0].mxu0
    %1060 = vdwg.mxu0
    %v1061 = vadd.f32 %v966, %v1058
    %v1062 = vtanh.pop %v1061
    %v1063 = vxor.u32 %v1061, 2147483648
    %v1064 = vmul.f32 %v1063, 1.442695
    %v1065 = vpow.pop %v1064
    %v1066 = vadd.f32 %v1065, 1.0
    %v1067 = vrcp.pop %v1066
    %v1068 = vmul.f32 1.0, %v1067
    %v1069 = vsel %vm57, %v1062, %v1068
    %1070 = vrot.lane.b32.xlu0 %v1069, 96
    %v1071 = vpop.permute.xlu0 %1070
    %1072 = vrot.lane.b32.xlu0 %v1069, 64
    %v1073 = vpop.permute.xlu0 %1072
    %1074 = vrot.lane.b32.xlu0 %v1069, 32
    %v1075 = vpop.permute.xlu0 %1074
    %v1076 = vmul.f32 %v1071, 0.0
    %v1077 = vmul.f32 %v1069, %v1073
    %v1078 = vadd.f32 %v1076, %v1077
    %v1079 = vtanh.pop %v1078
    %v1080 = vmul.f32 %v1075, %v1079
    %1081 = vst [vmem:[#allocation2] sm:$0x3] %v1080
    %1082 = vmatprep.subr.mxu0 0.0
    %1083 = vmatpush1.msra.mxu0 %v975
    %1084 = vmatprep.subr.mxu0 0.0
    %1085 = vmatpush1.msra.mxu0 %v976
    %1086 = vmatprep.subr.mxu0 0.0
    %1087 = vmatpush1.msra.mxu0 %v977
    %1088 = vmatprep.subr.mxu0 0.0
    %1089 = vmatpush1.msra.mxu0 %v978
    %1090 = vmatprep.subr.mxu0 0.0
    %1091 = vmatpush1.msra.mxu0 %v979
    %1092 = vmatprep.subr.mxu0 0.0
    %1093 = vmatpush1.msra.mxu0 %v980
    %1094 = vmatprep.subr.mxu0 0.0
    %1095 = vmatpush1.msra.mxu0 %v981
    %1096 = vmatprep.subr.mxu0 0.0
    %1097 = vmatpush1.msra.mxu0 %v982
    %1098 = vmatprep.subr.mxu0 0.0
    %1099 = vmatpush1.msra.mxu0 %v983
    %1100 = vmatprep.subr.mxu0 0.0
    %1101 = vmatpush1.msra.mxu0 %v984
    %1102 = vmatprep.subr.mxu0 0.0
    %1103 = vmatpush1.msra.mxu0 %v985
    %1104 = vmatprep.subr.mxu0 0.0
    %1105 = vmatpush1.msra.mxu0 %v986
    %1106 = vmatprep.subr.mxu0 0.0
    %1107 = vmatpush1.msra.mxu0 %v987
    %1108 = vmatprep.subr.mxu0 0.0
    %1109 = vmatpush1.msra.mxu0 %v988
    %1110 = vmatprep.subr.mxu0 0.0
    %1111 = vmatpush1.msra.mxu0 %v989
    %1112 = vmatprep.subr.mxu0 0.0
    %1113 = vmatpush1.msra.mxu0 %v990
    %1114 = vmatprep.subr.mxu0 0.0
    %1115 = vmatpush1.msra.mxu0 0.0
    %1116 = vmatprep.subr.mxu0 0.0
    %1117 = vmatpush1.msra.mxu0 0.0
    %1118 = vmatprep.subr.mxu0 0.0
    %1119 = vmatpush1.msra.mxu0 0.0
    %1120 = vmatprep.subr.mxu0 0.0
    %1121 = vmatpush1.msra.mxu0 0.0
    %1122 = vmatprep.subr.mxu0 0.0
    %1123 = vmatpush1.msra.mxu0 0.0
    %1124 = vmatprep.subr.mxu0 0.0
    %1125 = vmatpush1.msra.mxu0 0.0
    %1126 = vmatprep.subr.mxu0 0.0
    %1127 = vmatpush1.msra.mxu0 0.0
    %1128 = vmatprep.subr.mxu0 0.0
    %1129 = vmatpush1.msra.mxu0 0.0
    %1130 = vmatprep.subr.mxu0 0.0
    %1131 = vmatpush1.msra.mxu0 0.0
    %1132 = vmatprep.subr.mxu0 0.0
    %1133 = vmatpush1.msra.mxu0 0.0
    %1134 = vmatprep.subr.mxu0 0.0
    %1135 = vmatpush1.msra.mxu0 0.0
    %1136 = vmatprep.subr.mxu0 0.0
    %1137 = vmatpush1.msra.mxu0 0.0
    %1138 = vmatprep.subr.mxu0 0.0
    %1139 = vmatpush1.msra.mxu0 0.0
    %1140 = vmatprep.subr.mxu0 0.0
    %1141 = vmatpush1.msra.mxu0 0.0
    %1142 = vmatprep.subr.mxu0 0.0
    %1143 = vmatpush1.msra.mxu0 0.0
    %1144 = vmatprep.subr.mxu0 0.0
    %1145 = vmatpush1.msra.mxu0 0.0
    %1146 = vmatprep.mubr.f32.mxu0 0.0
    %1147 = vmatmul.mubr.f32.gmra.mrb[0].mxu0 %v1080
    %v1148 = vpop.f32.mrb[0].mxu0
    %v1149 = vadd.f32 0.0, %v1148
    %v1150 = vpop.f32.mrb[0].mxu0
    %1151 = vdwg.mxu0
    %v1153 = vrot.slane %v1149, 6
    %v1155 = vadd.f32 %v966, %v1153
    %v1156 = vtanh.pop %v1155
    %v1157 = vxor.u32 %v1155, 2147483648
    %v1158 = vmul.f32 %v1157, 1.442695
    %v1159 = vpow.pop %v1158
    %v1160 = vadd.f32 %v1159, 1.0
    %v1161 = vrcp.pop %v1160
    %v1162 = vmul.f32 1.0, %v1161
    %v1163 = vsel %vm57, %v1156, %v1162
    %v1165 = vrot.slane %v1163, 2
    %1167 = vrot.lane.b32.xlu0 %v1165, 96
    %v1168 = vpop.permute.xlu0 %1167
    %1169 = vrot.lane.b32.xlu0 %v1165, 64
    %v1170 = vpop.permute.xlu0 %1169
    %1171 = vrot.lane.b32.xlu0 %v1165, 32
    %v1172 = vpop.permute.xlu0 %1171
    %v1173 = vmul.f32 %v1168, %v1078
    %v1175 = vrot.slane %v1170, 6
    %v1177 = vmul.f32 %v1163, %v1175
    %v1179 = vrot.slane %v1177, 2
    %v1181 = vadd.f32 %v1173, %v1179
    %v1182 = vtanh.pop %v1181
    %v1183 = vmul.f32 %v1172, %v1182
    %1184 = vst [vmem:[#allocation2 + $0x2] sm:$0x3] %v1183
    %1185 = vmatprep.subr.mxu0 0.0
    %1186 = vmatpush1.msra.mxu0 %v975
    %1187 = vmatprep.subr.mxu0 0.0
    %1188 = vmatpush1.msra.mxu0 %v976
    %1189 = vmatprep.subr.mxu0 0.0
    %1190 = vmatpush1.msra.mxu0 %v977
    %1191 = vmatprep.subr.mxu0 0.0
    %1192 = vmatpush1.msra.mxu0 %v978
    %1193 = vmatprep.subr.mxu0 0.0
    %1194 = vmatpush1.msra.mxu0 %v979
    %1195 = vmatprep.subr.mxu0 0.0
    %1196 = vmatpush1.msra.mxu0 %v980
    %1197 = vmatprep.subr.mxu0 0.0
    %1198 = vmatpush1.msra.mxu0 %v981
    %1199 = vmatprep.subr.mxu0 0.0
    %1200 = vmatpush1.msra.mxu0 %v982
    %1201 = vmatprep.subr.mxu0 0.0
    %1202 = vmatpush1.msra.mxu0 %v983
    %1203 = vmatprep.subr.mxu0 0.0
    %1204 = vmatpush1.msra.mxu0 %v984
    %1205 = vmatprep.subr.mxu0 0.0
    %1206 = vmatpush1.msra.mxu0 %v985
    %1207 = vmatprep.subr.mxu0 0.0
    %1208 = vmatpush1.msra.mxu0 %v986
    %1209 = vmatprep.subr.mxu0 0.0
    %1210 = vmatpush1.msra.mxu0 %v987
    %1211 = vmatprep.subr.mxu0 0.0
    %1212 = vmatpush1.msra.mxu0 %v988
    %1213 = vmatprep.subr.mxu0 0.0
    %1214 = vmatpush1.msra.mxu0 %v989
    %1215 = vmatprep.subr.mxu0 0.0
    %1216 = vmatpush1.msra.mxu0 %v990
    %1217 = vmatprep.subr.mxu0 0.0
    %1218 = vmatpush1.msra.mxu0 0.0
    %1219 = vmatprep.subr.mxu0 0.0
    %1220 = vmatpush1.msra.mxu0 0.0
    %1221 = vmatprep.subr.mxu0 0.0
    %1222 = vmatpush1.msra.mxu0 0.0
    %1223 = vmatprep.subr.mxu0 0.0
    %1224 = vmatpush1.msra.mxu0 0.0
    %1225 = vmatprep.subr.mxu0 0.0
    %1226 = vmatpush1.msra.mxu0 0.0
    %1227 = vmatprep.subr.mxu0 0.0
    %1228 = vmatpush1.msra.mxu0 0.0
    %1229 = vmatprep.subr.mxu0 0.0
    %1230 = vmatpush1.msra.mxu0 0.0
    %1231 = vmatprep.subr.mxu0 0.0
    %1232 = vmatpush1.msra.mxu0 0.0
    %1233 = vmatprep.subr.mxu0 0.0
    %1234 = vmatpush1.msra.mxu0 0.0
    %1235 = vmatprep.subr.mxu0 0.0
    %1236 = vmatpush1.msra.mxu0 0.0
    %1237 = vmatprep.subr.mxu0 0.0
    %1238 = vmatpush1.msra.mxu0 0.0
    %1239 = vmatprep.subr.mxu0 0.0
    %1240 = vmatpush1.msra.mxu0 0.0
    %1241 = vmatprep.subr.mxu0 0.0
    %1242 = vmatpush1.msra.mxu0 0.0
    %1243 = vmatprep.subr.mxu0 0.0
    %1244 = vmatpush1.msra.mxu0 0.0
    %1245 = vmatprep.subr.mxu0 0.0
    %1246 = vmatpush1.msra.mxu0 0.0
    %1247 = vmatprep.subr.mxu0 0.0
    %1248 = vmatpush1.msra.mxu0 0.0
    %1249 = vmatprep.mubr.f32.mxu0 0.0
    %1250 = vmatmul.mubr.f32.gmra.mrb[0].mxu0 %v1183
    %v1251 = vpop.f32.mrb[0].mxu0
    %v1252 = vadd.f32 0.0, %v1251
    %v1253 = vpop.f32.mrb[0].mxu0
    %1254 = vdwg.mxu0
    %v1256 = vrot.slane %v1252, 4
    %v1258 = vadd.f32 %v966, %v1256
    %v1259 = vtanh.pop %v1258
    %v1260 = vxor.u32 %v1258, 2147483648
    %v1261 = vmul.f32 %v1260, 1.442695
    %v1262 = vpow.pop %v1261
    %v1263 = vadd.f32 %v1262, 1.0
    %v1264 = vrcp.pop %v1263
    %v1265 = vmul.f32 1.0, %v1264
    %v1266 = vsel %vm57, %v1259, %v1265
    %v1268 = vrot.slane %v1266, 4
    %1270 = vrot.lane.b32.xlu0 %v1268, 96
    %v1271 = vpop.permute.xlu0 %1270
    %1272 = vrot.lane.b32.xlu0 %v1268, 64
    %v1273 = vpop.permute.xlu0 %1272
    %1274 = vrot.lane.b32.xlu0 %v1268, 32
    %v1275 = vpop.permute.xlu0 %1274
    %v1276 = vmul.f32 %v1271, %v1181
    %v1278 = vrot.slane %v1273, 4
    %v1280 = vmul.f32 %v1266, %v1278
    %v1282 = vrot.slane %v1280, 4
    %v1284 = vadd.f32 %v1276, %v1282
    %v1285 = vtanh.pop %v1284
    %v1286 = vmul.f32 %v1275, %v1285
    %1287 = vst [vmem:[#allocation2 + $0x4] sm:$0x3] %v1286
    %1288 = vmatprep.subr.mxu0 0.0
    %1289 = vmatpush1.msra.mxu0 %v975
    %1290 = vmatprep.subr.mxu0 0.0
    %1291 = vmatpush1.msra.mxu0 %v976
    %1292 = vmatprep.subr.mxu0 0.0
    %1293 = vmatpush1.msra.mxu0 %v977
    %1294 = vmatprep.subr.mxu0 0.0
    %1295 = vmatpush1.msra.mxu0 %v978
    %1296 = vmatprep.subr.mxu0 0.0
    %1297 = vmatpush1.msra.mxu0 %v979
    %1298 = vmatprep.subr.mxu0 0.0
    %1299 = vmatpush1.msra.mxu0 %v980
    %1300 = vmatprep.subr.mxu0 0.0
    %1301 = vmatpush1.msra.mxu0 %v981
    %1302 = vmatprep.subr.mxu0 0.0
    %1303 = vmatpush1.msra.mxu0 %v982
    %1304 = vmatprep.subr.mxu0 0.0
    %1305 = vmatpush1.msra.mxu0 %v983
    %1306 = vmatprep.subr.mxu0 0.0
    %1307 = vmatpush1.msra.mxu0 %v984
    %1308 = vmatprep.subr.mxu0 0.0
    %1309 = vmatpush1.msra.mxu0 %v985
    %1310 = vmatprep.subr.mxu0 0.0
    %1311 = vmatpush1.msra.mxu0 %v986
    %1312 = vmatprep.subr.mxu0 0.0
    %1313 = vmatpush1.msra.mxu0 %v987
    %1314 = vmatprep.subr.mxu0 0.0
    %1315 = vmatpush1.msra.mxu0 %v988
    %1316 = vmatprep.subr.mxu0 0.0
    %1317 = vmatpush1.msra.mxu0 %v989
    %1318 = vmatprep.subr.mxu0 0.0
    %1319 = vmatpush1.msra.mxu0 %v990
    %1320 = vmatprep.subr.mxu0 0.0
    %1321 = vmatpush1.msra.mxu0 0.0
    %1322 = vmatprep.subr.mxu0 0.0
    %1323 = vmatpush1.msra.mxu0 0.0
    %1324 = vmatprep.subr.mxu0 0.0
    %1325 = vmatpush1.msra.mxu0 0.0
    %1326 = vmatprep.subr.mxu0 0.0
    %1327 = vmatpush1.msra.mxu0 0.0
    %1328 = vmatprep.subr.mxu0 0.0
    %1329 = vmatpush1.msra.mxu0 0.0
    %1330 = vmatprep.subr.mxu0 0.0
    %1331 = vmatpush1.msra.mxu0 0.0
    %1332 = vmatprep.subr.mxu0 0.0
    %1333 = vmatpush1.msra.mxu0 0.0
    %1334 = vmatprep.subr.mxu0 0.0
    %1335 = vmatpush1.msra.mxu0 0.0
    %1336 = vmatprep.subr.mxu0 0.0
    %1337 = vmatpush1.msra.mxu0 0.0
    %1338 = vmatprep.subr.mxu0 0.0
    %1339 = vmatpush1.msra.mxu0 0.0
    %1340 = vmatprep.subr.mxu0 0.0
    %1341 = vmatpush1.msra.mxu0 0.0
    %1342 = vmatprep.subr.mxu0 0.0
    %1343 = vmatpush1.msra.mxu0 0.0
    %1344 = vmatprep.subr.mxu0 0.0
    %1345 = vmatpush1.msra.mxu0 0.0
    %1346 = vmatprep.subr.mxu0 0.0
    %1347 = vmatpush1.msra.mxu0 0.0
    %1348 = vmatprep.subr.mxu0 0.0
    %1349 = vmatpush1.msra.mxu0 0.0
    %1350 = vmatprep.subr.mxu0 0.0
    %1351 = vmatpush1.msra.mxu0 0.0
    %1352 = vmatprep.mubr.f32.mxu0 0.0
    %1353 = vmatmul.mubr.f32.gmra.mrb[0].mxu0 %v1286
    %v1354 = vpop.f32.mrb[0].mxu0
    %v1355 = vadd.f32 0.0, %v1354
    %v1356 = vpop.f32.mrb[0].mxu0
    %1357 = vdwg.mxu0
    %v1359 = vrot.slane %v1355, 2
    %v1361 = vadd.f32 %v966, %v1359
    %v1362 = vtanh.pop %v1361
    %v1363 = vxor.u32 %v1361, 2147483648
    %v1364 = vmul.f32 %v1363, 1.442695
    %v1365 = vpow.pop %v1364
    %v1366 = vadd.f32 %v1365, 1.0
    %v1367 = vrcp.pop %v1366
    %v1368 = vmul.f32 1.0, %v1367
    %v1369 = vsel %vm57, %v1362, %v1368
    %v1371 = vrot.slane %v1369, 6
    %1373 = vrot.lane.b32.xlu0 %v1371, 96
    %v1374 = vpop.permute.xlu0 %1373
    %1375 = vrot.lane.b32.xlu0 %v1371, 64
    %v1376 = vpop.permute.xlu0 %1375
    %1377 = vrot.lane.b32.xlu0 %v1371, 32
    %v1378 = vpop.permute.xlu0 %1377
    %v1379 = vmul.f32 %v1374, %v1284
    %v1381 = vrot.slane %v1376, 2
    %v1383 = vmul.f32 %v1369, %v1381
    %v1385 = vrot.slane %v1383, 6
    %v1387 = vadd.f32 %v1379, %v1385
    %v1388 = vtanh.pop %v1387
    %v1389 = vmul.f32 %v1378, %v1388
    %1390 = vst [vmem:[#allocation2 + $0x6] sm:$0x3] %v1389
    %1391 = vmatprep.subr.mxu0 0.0
    %1392 = vmatpush1.msra.mxu0 %v975
    %1393 = vmatprep.subr.mxu0 0.0
    %1394 = vmatpush1.msra.mxu0 %v976
    %1395 = vmatprep.subr.mxu0 0.0
    %1396 = vmatpush1.msra.mxu0 %v977
    %1397 = vmatprep.subr.mxu0 0.0
    %1398 = vmatpush1.msra.mxu0 %v978
    %1399 = vmatprep.subr.mxu0 0.0
    %1400 = vmatpush1.msra.mxu0 %v979
    %1401 = vmatprep.subr.mxu0 0.0
    %1402 = vmatpush1.msra.mxu0 %v980
    %1403 = vmatprep.subr.mxu0 0.0
    %1404 = vmatpush1.msra.mxu0 %v981
    %1405 = vmatprep.subr.mxu0 0.0
    %1406 = vmatpush1.msra.mxu0 %v982
    %1407 = vmatprep.subr.mxu0 0.0
    %1408 = vmatpush1.msra.mxu0 %v983
    %1409 = vmatprep.subr.mxu0 0.0
    %1410 = vmatpush1.msra.mxu0 %v984
    %1411 = vmatprep.subr.mxu0 0.0
    %1412 = vmatpush1.msra.mxu0 %v985
    %1413 = vmatprep.subr.mxu0 0.0
    %1414 = vmatpush1.msra.mxu0 %v986
    %1415 = vmatprep.subr.mxu0 0.0
    %1416 = vmatpush1.msra.mxu0 %v987
    %1417 = vmatprep.subr.mxu0 0.0
    %1418 = vmatpush1.msra.mxu0 %v988
    %1419 = vmatprep.subr.mxu0 0.0
    %1420 = vmatpush1.msra.mxu0 %v989
    %1421 = vmatprep.subr.mxu0 0.0
    %1422 = vmatpush1.msra.mxu0 %v990
    %1423 = vmatprep.subr.mxu0 0.0
    %1424 = vmatpush1.msra.mxu0 0.0
    %1425 = vmatprep.subr.mxu0 0.0
    %1426 = vmatpush1.msra.mxu0 0.0
    %1427 = vmatprep.subr.mxu0 0.0
    %1428 = vmatpush1.msra.mxu0 0.0
    %1429 = vmatprep.subr.mxu0 0.0
    %1430 = vmatpush1.msra.mxu0 0.0
    %1431 = vmatprep.subr.mxu0 0.0
    %1432 = vmatpush1.msra.mxu0 0.0
    %1433 = vmatprep.subr.mxu0 0.0
    %1434 = vmatpush1.msra.mxu0 0.0
    %1435 = vmatprep.subr.mxu0 0.0
    %1436 = vmatpush1.msra.mxu0 0.0
    %1437 = vmatprep.subr.mxu0 0.0
    %1438 = vmatpush1.msra.mxu0 0.0
    %1439 = vmatprep.subr.mxu0 0.0
    %1440 = vmatpush1.msra.mxu0 0.0
    %1441 = vmatprep.subr.mxu0 0.0
    %1442 = vmatpush1.msra.mxu0 0.0
    %1443 = vmatprep.subr.mxu0 0.0
    %1444 = vmatpush1.msra.mxu0 0.0
    %1445 = vmatprep.subr.mxu0 0.0
    %1446 = vmatpush1.msra.mxu0 0.0
    %1447 = vmatprep.subr.mxu0 0.0
    %1448 = vmatpush1.msra.mxu0 0.0
    %1449 = vmatprep.subr.mxu0 0.0
    %1450 = vmatpush1.msra.mxu0 0.0
    %1451 = vmatprep.subr.mxu0 0.0
    %1452 = vmatpush1.msra.mxu0 0.0
    %1453 = vmatprep.subr.mxu0 0.0
    %1454 = vmatpush1.msra.mxu0 0.0
    %1455 = vmatprep.mubr.f32.mxu0 0.0
    %1456 = vmatmul.mubr.f32.gmra.mrb[0].mxu0 %v1389
    %v1457 = vpop.f32.mrb[0].mxu0
    %v1458 = vadd.f32 0.0, %v1457
    %v1459 = vpop.f32.mrb[0].mxu0
    %1460 = vdwg.mxu0
    %v1461 = vadd.f32 %v971, %v1458
    %v1462 = vtanh.pop %v1461
    %v1463 = vxor.u32 %v1461, 2147483648
    %v1464 = vmul.f32 %v1463, 1.442695
    %v1465 = vpow.pop %v1464
    %v1466 = vadd.f32 %v1465, 1.0
    %v1467 = vrcp.pop %v1466
    %v1468 = vmul.f32 1.0, %v1467
    %v1469 = vsel %vm57, %v1462, %v1468
    %1470 = vrot.lane.b32.xlu0 %v1469, 96
    %v1471 = vpop.permute.xlu0 %1470
    %1472 = vrot.lane.b32.xlu0 %v1469, 64
    %v1473 = vpop.permute.xlu0 %1472
    %1474 = vrot.lane.b32.xlu0 %v1469, 32
    %v1475 = vpop.permute.xlu0 %1474
    %v1476 = vmul.f32 %v1471, %v1387
    %v1477 = vmul.f32 %v1469, %v1473
    %v1478 = vadd.f32 %v1476, %v1477
    %v1479 = vtanh.pop %v1478
    %v1480 = vmul.f32 %v1475, %v1479
    %1481 = vst [vmem:[#allocation2 + $0x8] sm:$0x3] %v1480
    %1482 = vmatprep.subr.mxu0 0.0
    %1483 = vmatpush1.msra.mxu0 %v975
    %1484 = vmatprep.subr.mxu0 0.0
    %1485 = vmatpush1.msra.mxu0 %v976
    %1486 = vmatprep.subr.mxu0 0.0
    %1487 = vmatpush1.msra.mxu0 %v977
    %1488 = vmatprep.subr.mxu0 0.0
    %1489 = vmatpush1.msra.mxu0 %v978
    %1490 = vmatprep.subr.mxu0 0.0
    %1491 = vmatpush1.msra.mxu0 %v979
    %1492 = vmatprep.subr.mxu0 0.0
    %1493 = vmatpush1.msra.mxu0 %v980
    %1494 = vmatprep.subr.mxu0 0.0
    %1495 = vmatpush1.msra.mxu0 %v981
    %1496 = vmatprep.subr.mxu0 0.0
    %1497 = vmatpush1.msra.mxu0 %v982
    %1498 = vmatprep.subr.mxu0 0.0
    %1499 = vmatpush1.msra.mxu0 %v983
    %1500 = vmatprep.subr.mxu0 0.0
    %1501 = vmatpush1.msra.mxu0 %v984
    %1502 = vmatprep.subr.mxu0 0.0
    %1503 = vmatpush1.msra.mxu0 %v985
    %1504 = vmatprep.subr.mxu0 0.0
    %1505 = vmatpush1.msra.mxu0 %v986
    %1506 = vmatprep.subr.mxu0 0.0
    %1507 = vmatpush1.msra.mxu0 %v987
    %1508 = vmatprep.subr.mxu0 0.0
    %1509 = vmatpush1.msra.mxu0 %v988
    %1510 = vmatprep.subr.mxu0 0.0
    %1511 = vmatpush1.msra.mxu0 %v989
    %1512 = vmatprep.subr.mxu0 0.0
    %1513 = vmatpush1.msra.mxu0 %v990
    %1514 = vmatprep.subr.mxu0 0.0
    %1515 = vmatpush1.msra.mxu0 0.0
    %1516 = vmatprep.subr.mxu0 0.0
    %1517 = vmatpush1.msra.mxu0 0.0
    %1518 = vmatprep.subr.mxu0 0.0
    %1519 = vmatpush1.msra.mxu0 0.0
    %1520 = vmatprep.subr.mxu0 0.0
    %1521 = vmatpush1.msra.mxu0 0.0
    %1522 = vmatprep.subr.mxu0 0.0
    %1523 = vmatpush1.msra.mxu0 0.0
    %1524 = vmatprep.subr.mxu0 0.0
    %1525 = vmatpush1.msra.mxu0 0.0
    %1526 = vmatprep.subr.mxu0 0.0
    %1527 = vmatpush1.msra.mxu0 0.0
    %1528 = vmatprep.subr.mxu0 0.0
    %1529 = vmatpush1.msra.mxu0 0.0
    %1530 = vmatprep.subr.mxu0 0.0
    %1531 = vmatpush1.msra.mxu0 0.0
    %1532 = vmatprep.subr.mxu0 0.0
    %1533 = vmatpush1.msra.mxu0 0.0
    %1534 = vmatprep.subr.mxu0 0.0
    %1535 = vmatpush1.msra.mxu0 0.0
    %1536 = vmatprep.subr.mxu0 0.0
    %1537 = vmatpush1.msra.mxu0 0.0
    %1538 = vmatprep.subr.mxu0 0.0
    %1539 = vmatpush1.msra.mxu0 0.0
    %1540 = vmatprep.subr.mxu0 0.0
    %1541 = vmatpush1.msra.mxu0 0.0
    %1542 = vmatprep.subr.mxu0 0.0
    %1543 = vmatpush1.msra.mxu0 0.0
    %1544 = vmatprep.subr.mxu0 0.0
    %1545 = vmatpush1.msra.mxu0 0.0
    %1546 = vmatprep.mubr.f32.mxu0 0.0
    %1547 = vmatmul.mubr.f32.gmra.mrb[0].mxu0 %v1480
    %v1548 = vpop.f32.mrb[0].mxu0
    %v1549 = vadd.f32 0.0, %v1548
    %v1550 = vpop.f32.mrb[0].mxu0
    %1551 = vdwg.mxu0
    %v1553 = vrot.slane %v1549, 6
    %v1555 = vadd.f32 %v971, %v1553
    %v1556 = vtanh.pop %v1555
    %v1557 = vxor.u32 %v1555, 2147483648
    %v1558 = vmul.f32 %v1557, 1.442695
    %v1559 = vpow.pop %v1558
    %v1560 = vadd.f32 %v1559, 1.0
    %v1561 = vrcp.pop %v1560
    %v1562 = vmul.f32 1.0, %v1561
    %v1563 = vsel %vm57, %v1556, %v1562
    %v1565 = vrot.slane %v1563, 2
    %1567 = vrot.lane.b32.xlu0 %v1565, 96
    %v1568 = vpop.permute.xlu0 %1567
    %1569 = vrot.lane.b32.xlu0 %v1565, 64
    %v1570 = vpop.permute.xlu0 %1569
    %1571 = vrot.lane.b32.xlu0 %v1565, 32
    %v1572 = vpop.permute.xlu0 %1571
    %v1573 = vmul.f32 %v1568, %v1478
    %v1575 = vrot.slane %v1570, 6
    %v1577 = vmul.f32 %v1563, %v1575
    %v1579 = vrot.slane %v1577, 2
    %v1581 = vadd.f32 %v1573, %v1579
    %v1582 = vtanh.pop %v1581
    %v1583 = vmul.f32 %v1572, %v1582
    %1584 = vst [vmem:[#allocation2 + $0xa] sm:$0x3] %v1583
    %1585 = vmatprep.subr.mxu0 0.0
    %1586 = vmatpush1.msra.mxu0 %v975
    %1587 = vmatprep.subr.mxu0 0.0
    %1588 = vmatpush1.msra.mxu0 %v976
    %1589 = vmatprep.subr.mxu0 0.0
    %1590 = vmatpush1.msra.mxu0 %v977
    %1591 = vmatprep.subr.mxu0 0.0
    %1592 = vmatpush1.msra.mxu0 %v978
    %1593 = vmatprep.subr.mxu0 0.0
    %1594 = vmatpush1.msra.mxu0 %v979
    %1595 = vmatprep.subr.mxu0 0.0
    %1596 = vmatpush1.msra.mxu0 %v980
    %1597 = vmatprep.subr.mxu0 0.0
    %1598 = vmatpush1.msra.mxu0 %v981
    %1599 = vmatprep.subr.mxu0 0.0
    %1600 = vmatpush1.msra.mxu0 %v982
    %1601 = vmatprep.subr.mxu0 0.0
    %1602 = vmatpush1.msra.mxu0 %v983
    %1603 = vmatprep.subr.mxu0 0.0
    %1604 = vmatpush1.msra.mxu0 %v984
    %1605 = vmatprep.subr.mxu0 0.0
    %1606 = vmatpush1.msra.mxu0 %v985
    %1607 = vmatprep.subr.mxu0 0.0
    %1608 = vmatpush1.msra.mxu0 %v986
    %1609 = vmatprep.subr.mxu0 0.0
    %1610 = vmatpush1.msra.mxu0 %v987
    %1611 = vmatprep.subr.mxu0 0.0
    %1612 = vmatpush1.msra.mxu0 %v988
    %1613 = vmatprep.subr.mxu0 0.0
    %1614 = vmatpush1.msra.mxu0 %v989
    %1615 = vmatprep.subr.mxu0 0.0
    %1616 = vmatpush1.msra.mxu0 %v990
    %1617 = vmatprep.subr.mxu0 0.0
    %1618 = vmatpush1.msra.mxu0 0.0
    %1619 = vmatprep.subr.mxu0 0.0
    %1620 = vmatpush1.msra.mxu0 0.0
    %1621 = vmatprep.subr.mxu0 0.0
    %1622 = vmatpush1.msra.mxu0 0.0
    %1623 = vmatprep.subr.mxu0 0.0
    %1624 = vmatpush1.msra.mxu0 0.0
    %1625 = vmatprep.subr.mxu0 0.0
    %1626 = vmatpush1.msra.mxu0 0.0
    %1627 = vmatprep.subr.mxu0 0.0
    %1628 = vmatpush1.msra.mxu0 0.0
    %1629 = vmatprep.subr.mxu0 0.0
    %1630 = vmatpush1.msra.mxu0 0.0
    %1631 = vmatprep.subr.mxu0 0.0
    %1632 = vmatpush1.msra.mxu0 0.0
    %1633 = vmatprep.subr.mxu0 0.0
    %1634 = vmatpush1.msra.mxu0 0.0
    %1635 = vmatprep.subr.mxu0 0.0
    %1636 = vmatpush1.msra.mxu0 0.0
    %1637 = vmatprep.subr.mxu0 0.0
    %1638 = vmatpush1.msra.mxu0 0.0
    %1639 = vmatprep.subr.mxu0 0.0
    %1640 = vmatpush1.msra.mxu0 0.0
    %1641 = vmatprep.subr.mxu0 0.0
    %1642 = vmatpush1.msra.mxu0 0.0
    %1643 = vmatprep.subr.mxu0 0.0
    %1644 = vmatpush1.msra.mxu0 0.0
    %1645 = vmatprep.subr.mxu0 0.0
    %1646 = vmatpush1.msra.mxu0 0.0
    %1647 = vmatprep.subr.mxu0 0.0
    %1648 = vmatpush1.msra.mxu0 0.0
    %1649 = vmatprep.mubr.f32.mxu0 0.0
    %1650 = vmatmul.mubr.f32.gmra.mrb[0].mxu0 %v1583
    %v1651 = vpop.f32.mrb[0].mxu0
    %v1652 = vadd.f32 0.0, %v1651
    %v1653 = vpop.f32.mrb[0].mxu0
    %1654 = vdwg.mxu0
    %v1656 = vrot.slane %v1652, 4
    %v1658 = vadd.f32 %v971, %v1656
    %v1659 = vtanh.pop %v1658
    %v1660 = vxor.u32 %v1658, 2147483648
    %v1661 = vmul.f32 %v1660, 1.442695
    %v1662 = vpow.pop %v1661
    %v1663 = vadd.f32 %v1662, 1.0
    %v1664 = vrcp.pop %v1663
    %v1665 = vmul.f32 1.0, %v1664
    %v1666 = vsel %vm57, %v1659, %v1665
    %v1668 = vrot.slane %v1666, 4
    %1670 = vrot.lane.b32.xlu0 %v1668, 96
    %v1671 = vpop.permute.xlu0 %1670
    %1672 = vrot.lane.b32.xlu0 %v1668, 64
    %v1673 = vpop.permute.xlu0 %1672
    %1674 = vrot.lane.b32.xlu0 %v1668, 32
    %v1675 = vpop.permute.xlu0 %1674
    %v1676 = vmul.f32 %v1671, %v1581
    %v1678 = vrot.slane %v1673, 4
    %v1680 = vmul.f32 %v1666, %v1678
    %v1682 = vrot.slane %v1680, 4
    %v1684 = vadd.f32 %v1676, %v1682
    %v1685 = vtanh.pop %v1684
    %v1686 = vmul.f32 %v1675, %v1685
    %1687 = vst [vmem:[#allocation2 + $0xc] sm:$0x3] %v1686
    %1688 = vmatprep.subr.mxu0 0.0
    %1689 = vmatpush1.msra.mxu0 %v975
    %1690 = vmatprep.subr.mxu0 0.0
    %1691 = vmatpush1.msra.mxu0 %v976
    %1692 = vmatprep.subr.mxu0 0.0
    %1693 = vmatpush1.msra.mxu0 %v977
    %1694 = vmatprep.subr.mxu0 0.0
    %1695 = vmatpush1.msra.mxu0 %v978
    %1696 = vmatprep.subr.mxu0 0.0
    %1697 = vmatpush1.msra.mxu0 %v979
    %1698 = vmatprep.subr.mxu0 0.0
    %1699 = vmatpush1.msra.mxu0 %v980
    %1700 = vmatprep.subr.mxu0 0.0
    %1701 = vmatpush1.msra.mxu0 %v981
    %1702 = vmatprep.subr.mxu0 0.0
    %1703 = vmatpush1.msra.mxu0 %v982
    %1704 = vmatprep.subr.mxu0 0.0
    %1705 = vmatpush1.msra.mxu0 %v983
    %1706 = vmatprep.subr.mxu0 0.0
    %1707 = vmatpush1.msra.mxu0 %v984
    %1708 = vmatprep.subr.mxu0 0.0
    %1709 = vmatpush1.msra.mxu0 %v985
    %1710 = vmatprep.subr.mxu0 0.0
    %1711 = vmatpush1.msra.mxu0 %v986
    %1712 = vmatprep.subr.mxu0 0.0
    %1713 = vmatpush1.msra.mxu0 %v987
    %1714 = vmatprep.subr.mxu0 0.0
    %1715 = vmatpush1.msra.mxu0 %v988
    %1716 = vmatprep.subr.mxu0 0.0
    %1717 = vmatpush1.msra.mxu0 %v989
    %1718 = vmatprep.subr.mxu0 0.0
    %1719 = vmatpush1.msra.mxu0 %v990
    %1720 = vmatprep.subr.mxu0 0.0
    %1721 = vmatpush1.msra.mxu0 0.0
    %1722 = vmatprep.subr.mxu0 0.0
    %1723 = vmatpush1.msra.mxu0 0.0
    %1724 = vmatprep.subr.mxu0 0.0
    %1725 = vmatpush1.msra.mxu0 0.0
    %1726 = vmatprep.subr.mxu0 0.0
    %1727 = vmatpush1.msra.mxu0 0.0
    %1728 = vmatprep.subr.mxu0 0.0
    %1729 = vmatpush1.msra.mxu0 0.0
    %1730 = vmatprep.subr.mxu0 0.0
    %1731 = vmatpush1.msra.mxu0 0.0
    %1732 = vmatprep.subr.mxu0 0.0
    %1733 = vmatpush1.msra.mxu0 0.0
    %1734 = vmatprep.subr.mxu0 0.0
    %1735 = vmatpush1.msra.mxu0 0.0
    %1736 = vmatprep.subr.mxu0 0.0
    %1737 = vmatpush1.msra.mxu0 0.0
    %1738 = vmatprep.subr.mxu0 0.0
    %1739 = vmatpush1.msra.mxu0 0.0
    %1740 = vmatprep.subr.mxu0 0.0
    %1741 = vmatpush1.msra.mxu0 0.0
    %1742 = vmatprep.subr.mxu0 0.0
    %1743 = vmatpush1.msra.mxu0 0.0
    %1744 = vmatprep.subr.mxu0 0.0
    %1745 = vmatpush1.msra.mxu0 0.0
    %1746 = vmatprep.subr.mxu0 0.0
    %1747 = vmatpush1.msra.mxu0 0.0
    %1748 = vmatprep.subr.mxu0 0.0
    %1749 = vmatpush1.msra.mxu0 0.0
    %1750 = vmatprep.subr.mxu0 0.0
    %1751 = vmatpush1.msra.mxu0 0.0
    %1752 = vmatprep.mubr.f32.mxu0 0.0
    %1753 = vmatmul.mubr.f32.gmra.mrb[0].mxu0 %v1686
    %v1754 = vpop.f32.mrb[0].mxu0
    %v1755 = vadd.f32 0.0, %v1754
    %v1756 = vpop.f32.mrb[0].mxu0
    %1757 = vdwg.mxu0
    %v1759 = vrot.slane %v1755, 2
    %v1761 = vadd.f32 %v971, %v1759
    %v1762 = vtanh.pop %v1761
    %v1763 = vxor.u32 %v1761, 2147483648
    %v1764 = vmul.f32 %v1763, 1.442695
    %v1765 = vpow.pop %v1764
    %v1766 = vadd.f32 %v1765, 1.0
    %v1767 = vrcp.pop %v1766
    %v1768 = vmul.f32 1.0, %v1767
    %v1769 = vsel %vm57, %v1762, %v1768
    %v1771 = vrot.slane %v1769, 6
    %1773 = vrot.lane.b32.xlu0 %v1771, 96
    %v1774 = vpop.permute.xlu0 %1773
    %1775 = vrot.lane.b32.xlu0 %v1771, 64
    %v1776 = vpop.permute.xlu0 %1775
    %1777 = vrot.lane.b32.xlu0 %v1771, 32
    %v1778 = vpop.permute.xlu0 %1777
    %v1779 = vmul.f32 %v1774, %v1684
    %v1781 = vrot.slane %v1776, 2
    %v1783 = vmul.f32 %v1769, %v1781
    %v1785 = vrot.slane %v1783, 6
    %v1787 = vadd.f32 %v1779, %v1785
    %v1788 = vtanh.pop %v1787
    %v1789 = vmul.f32 %v1778, %v1788
    %1790 = vst [vmem:[#allocation2 + $0xe] sm:$0x3] %v1789
    %v1791 = vld [vmem:[#allocation2] sm:$0xff]
    %v1792 = vld [vmem:[#allocation2 + $0x8] sm:$0xff]
    %s1793 = scalar_lea.vmem [#allocation4], 128
    %v1794 = vld [vmem:[%s1793] sm:$0xff]
    %v1795 = vld [vmem:[%s1793 + $0x8] sm:$0xff]
    %v1796 = vld [vmem:[%s1793 + $0x10] sm:$0xff]
    %v1797 = vld [vmem:[%s1793 + $0x18] sm:$0xff]
    %v1798 = vld [vmem:[%s1793 + $0x20] sm:$0xff]
    %v1799 = vld [vmem:[%s1793 + $0x28] sm:$0xff]
    %v1800 = vld [vmem:[%s1793 + $0x30] sm:$0xff]
    %v1801 = vld [vmem:[%s1793 + $0x38] sm:$0xff]
    %v1802 = vld [vmem:[%s1793 + $0x40] sm:$0xff]
    %v1803 = vld [vmem:[%s1793 + $0x48] sm:$0xff]
    %v1804 = vld [vmem:[%s1793 + $0x50] sm:$0xff]
    %v1805 = vld [vmem:[%s1793 + $0x58] sm:$0xff]
    %v1806 = vld [vmem:[%s1793 + $0x60] sm:$0xff]
    %v1807 = vld [vmem:[%s1793 + $0x68] sm:$0xff]
    %v1808 = vld [vmem:[%s1793 + $0x70] sm:$0xff]
    %v1809 = vld [vmem:[%s1793 + $0x78] sm:$0xff]
    %v1810 = vld [vmem:[%s3 + $0x2] sm:$0x1]
    %v1811 = vlaneseq
    %v1812 = vshrl.u32 %v1811, 7
    %v1813 = vsub.s32 0, %v1812
    %v1814 = vrot.slane %v1810, %v1813
    %1815 = vmatprep.subr.mxu0 0.0
    %1816 = vmatpush1.msra.mxu0 %v1794
    %1817 = vmatprep.subr.mxu0 0.0
    %1818 = vmatpush1.msra.mxu0 %v1795
    %1819 = vmatprep.subr.mxu0 0.0
    %1820 = vmatpush1.msra.mxu0 %v1796
    %1821 = vmatprep.subr.mxu0 0.0
    %1822 = vmatpush1.msra.mxu0 %v1797
    %1823 = vmatprep.subr.mxu0 0.0
    %1824 = vmatpush1.msra.mxu0 %v1798
    %1825 = vmatprep.subr.mxu0 0.0
    %1826 = vmatpush1.msra.mxu0 %v1799
    %1827 = vmatprep.subr.mxu0 0.0
    %1828 = vmatpush1.msra.mxu0 %v1800
    %1829 = vmatprep.subr.mxu0 0.0
    %1830 = vmatpush1.msra.mxu0 %v1801
    %1831 = vmatprep.subr.mxu0 0.0
    %1832 = vmatpush1.msra.mxu0 %v1802
    %1833 = vmatprep.subr.mxu0 0.0
    %1834 = vmatpush1.msra.mxu0 %v1803
    %1835 = vmatprep.subr.mxu0 0.0
    %1836 = vmatpush1.msra.mxu0 %v1804
    %1837 = vmatprep.subr.mxu0 0.0
    %1838 = vmatpush1.msra.mxu0 %v1805
    %1839 = vmatprep.subr.mxu0 0.0
    %1840 = vmatpush1.msra.mxu0 %v1806
    %1841 = vmatprep.subr.mxu0 0.0
    %1842 = vmatpush1.msra.mxu0 %v1807
    %1843 = vmatprep.subr.mxu0 0.0
    %1844 = vmatpush1.msra.mxu0 %v1808
    %1845 = vmatprep.subr.mxu0 0.0
    %1846 = vmatpush1.msra.mxu0 %v1809
    %1847 = vmatprep.subr.mxu0 0.0
    %1848 = vmatpush1.msra.mxu0 0.0
    %1849 = vmatprep.subr.mxu0 0.0
    %1850 = vmatpush1.msra.mxu0 0.0
    %1851 = vmatprep.subr.mxu0 0.0
    %1852 = vmatpush1.msra.mxu0 0.0
    %1853 = vmatprep.subr.mxu0 0.0
    %1854 = vmatpush1.msra.mxu0 0.0
    %1855 = vmatprep.subr.mxu0 0.0
    %1856 = vmatpush1.msra.mxu0 0.0
    %1857 = vmatprep.subr.mxu0 0.0
    %1858 = vmatpush1.msra.mxu0 0.0
    %1859 = vmatprep.subr.mxu0 0.0
    %1860 = vmatpush1.msra.mxu0 0.0
    %1861 = vmatprep.subr.mxu0 0.0
    %1862 = vmatpush1.msra.mxu0 0.0
    %1863 = vmatprep.subr.mxu0 0.0
    %1864 = vmatpush1.msra.mxu0 0.0
    %1865 = vmatprep.subr.mxu0 0.0
    %1866 = vmatpush1.msra.mxu0 0.0
    %1867 = vmatprep.subr.mxu0 0.0
    %1868 = vmatpush1.msra.mxu0 0.0
    %1869 = vmatprep.subr.mxu0 0.0
    %1870 = vmatpush1.msra.mxu0 0.0
    %1871 = vmatprep.subr.mxu0 0.0
    %1872 = vmatpush1.msra.mxu0 0.0
    %1873 = vmatprep.subr.mxu0 0.0
    %1874 = vmatpush1.msra.mxu0 0.0
    %1875 = vmatprep.subr.mxu0 0.0
    %1876 = vmatpush1.msra.mxu0 0.0
    %1877 = vmatprep.subr.mxu0 0.0
    %1878 = vmatpush1.msra.mxu0 0.0
    %1879 = vmatprep.mubr.f32.mxu0 0.0
    %1880 = vmatmul.mubr.f32.gmra.mrb[0].mxu0 %v1791
    %v1881 = vpop.f32.mrb[0].mxu0
    %v1882 = vadd.f32 %v1814, %v1881
    %v1883 = vpop.f32.mrb[0].mxu0
    %1884 = vmatprep.mubr.f32.mxu0 0.0
    %1885 = vmatmul.mubr.f32.gmra.mrb[0].mxu0 %v1792
    %v1886 = vpop.f32.mrb[0].mxu0
    %v1887 = vadd.f32 %v1814, %v1886
    %v1888 = vpop.f32.mrb[0].mxu0
    %1889 = vdwg.mxu0
    %s1890 = scalar_lea.vmem [#allocation6], 256
    %v1891 = vld [vmem:[%s1890] sm:$0xff]
    %v1892 = vld [vmem:[%s1890 + $0x8] sm:$0xff]
    %v1893 = vld [vmem:[%s1890 + $0x10] sm:$0xff]
    %v1894 = vld [vmem:[%s1890 + $0x18] sm:$0xff]
    %v1895 = vld [vmem:[%s1890 + $0x20] sm:$0xff]
    %v1896 = vld [vmem:[%s1890 + $0x28] sm:$0xff]
    %v1897 = vld [vmem:[%s1890 + $0x30] sm:$0xff]
    %v1898 = vld [vmem:[%s1890 + $0x38] sm:$0xff]
    %v1899 = vld [vmem:[%s1890 + $0x40] sm:$0xff]
    %v1900 = vld [vmem:[%s1890 + $0x48] sm:$0xff]
    %v1901 = vld [vmem:[%s1890 + $0x50] sm:$0xff]
    %v1902 = vld [vmem:[%s1890 + $0x58] sm:$0xff]
    %v1903 = vld [vmem:[%s1890 + $0x60] sm:$0xff]
    %v1904 = vld [vmem:[%s1890 + $0x68] sm:$0xff]
    %v1905 = vld [vmem:[%s1890 + $0x70] sm:$0xff]
    %v1906 = vld [vmem:[%s1890 + $0x78] sm:$0xff]
    %1907 = vmatprep.subr.mxu0 0.0
    %1908 = vmatpush1.msra.mxu0 %v1891
    %1909 = vmatprep.subr.mxu0 0.0
    %1910 = vmatpush1.msra.mxu0 %v1892
    %1911 = vmatprep.subr.mxu0 0.0
    %1912 = vmatpush1.msra.mxu0 %v1893
    %1913 = vmatprep.subr.mxu0 0.0
    %1914 = vmatpush1.msra.mxu0 %v1894
    %1915 = vmatprep.subr.mxu0 0.0
    %1916 = vmatpush1.msra.mxu0 %v1895
    %1917 = vmatprep.subr.mxu0 0.0
    %1918 = vmatpush1.msra.mxu0 %v1896
    %1919 = vmatprep.subr.mxu0 0.0
    %1920 = vmatpush1.msra.mxu0 %v1897
    %1921 = vmatprep.subr.mxu0 0.0
    %1922 = vmatpush1.msra.mxu0 %v1898
    %1923 = vmatprep.subr.mxu0 0.0
    %1924 = vmatpush1.msra.mxu0 %v1899
    %1925 = vmatprep.subr.mxu0 0.0
    %1926 = vmatpush1.msra.mxu0 %v1900
    %1927 = vmatprep.subr.mxu0 0.0
    %1928 = vmatpush1.msra.mxu0 %v1901
    %1929 = vmatprep.subr.mxu0 0.0
    %1930 = vmatpush1.msra.mxu0 %v1902
    %1931 = vmatprep.subr.mxu0 0.0
    %1932 = vmatpush1.msra.mxu0 %v1903
    %1933 = vmatprep.subr.mxu0 0.0
    %1934 = vmatpush1.msra.mxu0 %v1904
    %1935 = vmatprep.subr.mxu0 0.0
    %1936 = vmatpush1.msra.mxu0 %v1905
    %1937 = vmatprep.subr.mxu0 0.0
    %1938 = vmatpush1.msra.mxu0 %v1906
    %1939 = vmatprep.subr.mxu0 0.0
    %1940 = vmatpush1.msra.mxu0 0.0
    %1941 = vmatprep.subr.mxu0 0.0
    %1942 = vmatpush1.msra.mxu0 0.0
    %1943 = vmatprep.subr.mxu0 0.0
    %1944 = vmatpush1.msra.mxu0 0.0
    %1945 = vmatprep.subr.mxu0 0.0
    %1946 = vmatpush1.msra.mxu0 0.0
    %1947 = vmatprep.subr.mxu0 0.0
    %1948 = vmatpush1.msra.mxu0 0.0
    %1949 = vmatprep.subr.mxu0 0.0
    %1950 = vmatpush1.msra.mxu0 0.0
    %1951 = vmatprep.subr.mxu0 0.0
    %1952 = vmatpush1.msra.mxu0 0.0
    %1953 = vmatprep.subr.mxu0 0.0
    %1954 = vmatpush1.msra.mxu0 0.0
    %1955 = vmatprep.subr.mxu0 0.0
    %1956 = vmatpush1.msra.mxu0 0.0
    %1957 = vmatprep.subr.mxu0 0.0
    %1958 = vmatpush1.msra.mxu0 0.0
    %1959 = vmatprep.subr.mxu0 0.0
    %1960 = vmatpush1.msra.mxu0 0.0
    %1961 = vmatprep.subr.mxu0 0.0
    %1962 = vmatpush1.msra.mxu0 0.0
    %1963 = vmatprep.subr.mxu0 0.0
    %1964 = vmatpush1.msra.mxu0 0.0
    %1965 = vmatprep.subr.mxu0 0.0
    %1966 = vmatpush1.msra.mxu0 0.0
    %1967 = vmatprep.subr.mxu0 0.0
    %1968 = vmatpush1.msra.mxu0 0.0
    %1969 = vmatprep.subr.mxu0 0.0
    %1970 = vmatpush1.msra.mxu0 0.0
    %1971 = vmatprep.mubr.f32.mxu0 0.0
    %1972 = vmatmul.mubr.f32.gmra.mrb[0].mxu0 0.0
    %v1973 = vpop.f32.mrb[0].mxu0
    %v1974 = vadd.f32 0.0, %v1973
    %v1975 = vpop.f32.mrb[0].mxu0
    %1976 = vdwg.mxu0
    %v1977 = vadd.f32 %v1882, %v1974
    %v1978 = vtanh.pop %v1977
    %v1979 = vxor.u32 %v1977, 2147483648
    %v1980 = vmul.f32 %v1979, 1.442695
    %v1981 = vpow.pop %v1980
    %v1982 = vadd.f32 %v1981, 1.0
    %v1983 = vrcp.pop %v1982
    %v1984 = vmul.f32 1.0, %v1983
    %v1985 = vsel %vm57, %v1978, %v1984
    %1986 = vrot.lane.b32.xlu0 %v1985, 96
    %v1987 = vpop.permute.xlu0 %1986
    %1988 = vrot.lane.b32.xlu0 %v1985, 64
    %v1989 = vpop.permute.xlu0 %1988
    %1990 = vrot.lane.b32.xlu0 %v1985, 32
    %v1991 = vpop.permute.xlu0 %1990
    %v1992 = vmul.f32 %v1987, 0.0
    %v1993 = vmul.f32 %v1985, %v1989
    %v1994 = vadd.f32 %v1992, %v1993
    %v1995 = vtanh.pop %v1994
    %v1996 = vmul.f32 %v1991, %v1995
    %1997 = vst [vmem:[#allocation2] sm:$0x3] %v1996
    %1998 = vmatprep.subr.mxu0 0.0
    %1999 = vmatpush1.msra.mxu0 %v1891
    %2000 = vmatprep.subr.mxu0 0.0
    %2001 = vmatpush1.msra.mxu0 %v1892
    %2002 = vmatprep.subr.mxu0 0.0
    %2003 = vmatpush1.msra.mxu0 %v1893
    %2004 = vmatprep.subr.mxu0 0.0
    %2005 = vmatpush1.msra.mxu0 %v1894
    %2006 = vmatprep.subr.mxu0 0.0
    %2007 = vmatpush1.msra.mxu0 %v1895
    %2008 = vmatprep.subr.mxu0 0.0
    %2009 = vmatpush1.msra.mxu0 %v1896
    %2010 = vmatprep.subr.mxu0 0.0
    %2011 = vmatpush1.msra.mxu0 %v1897
    %2012 = vmatprep.subr.mxu0 0.0
    %2013 = vmatpush1.msra.mxu0 %v1898
    %2014 = vmatprep.subr.mxu0 0.0
    %2015 = vmatpush1.msra.mxu0 %v1899
    %2016 = vmatprep.subr.mxu0 0.0
    %2017 = vmatpush1.msra.mxu0 %v1900
    %2018 = vmatprep.subr.mxu0 0.0
    %2019 = vmatpush1.msra.mxu0 %v1901
    %2020 = vmatprep.subr.mxu0 0.0
    %2021 = vmatpush1.msra.mxu0 %v1902
    %2022 = vmatprep.subr.mxu0 0.0
    %2023 = vmatpush1.msra.mxu0 %v1903
    %2024 = vmatprep.subr.mxu0 0.0
    %2025 = vmatpush1.msra.mxu0 %v1904
    %2026 = vmatprep.subr.mxu0 0.0
    %2027 = vmatpush1.msra.mxu0 %v1905
    %2028 = vmatprep.subr.mxu0 0.0
    %2029 = vmatpush1.msra.mxu0 %v1906
    %2030 = vmatprep.subr.mxu0 0.0
    %2031 = vmatpush1.msra.mxu0 0.0
    %2032 = vmatprep.subr.mxu0 0.0
    %2033 = vmatpush1.msra.mxu0 0.0
    %2034 = vmatprep.subr.mxu0 0.0
    %2035 = vmatpush1.msra.mxu0 0.0
    %2036 = vmatprep.subr.mxu0 0.0
    %2037 = vmatpush1.msra.mxu0 0.0
    %2038 = vmatprep.subr.mxu0 0.0
    %2039 = vmatpush1.msra.mxu0 0.0
    %2040 = vmatprep.subr.mxu0 0.0
    %2041 = vmatpush1.msra.mxu0 0.0
    %2042 = vmatprep.subr.mxu0 0.0
    %2043 = vmatpush1.msra.mxu0 0.0
    %2044 = vmatprep.subr.mxu0 0.0
    %2045 = vmatpush1.msra.mxu0 0.0
    %2046 = vmatprep.subr.mxu0 0.0
    %2047 = vmatpush1.msra.mxu0 0.0
    %2048 = vmatprep.subr.mxu0 0.0
    %2049 = vmatpush1.msra.mxu0 0.0
    %2050 = vmatprep.subr.mxu0 0.0
    %2051 = vmatpush1.msra.mxu0 0.0
    %2052 = vmatprep.subr.mxu0 0.0
    %2053 = vmatpush1.msra.mxu0 0.0
    %2054 = vmatprep.subr.mxu0 0.0
    %2055 = vmatpush1.msra.mxu0 0.0
    %2056 = vmatprep.subr.mxu0 0.0
    %2057 = vmatpush1.msra.mxu0 0.0
    %2058 = vmatprep.subr.mxu0 0.0
    %2059 = vmatpush1.msra.mxu0 0.0
    %2060 = vmatprep.subr.mxu0 0.0
    %2061 = vmatpush1.msra.mxu0 0.0
    %2062 = vmatprep.mubr.f32.mxu0 0.0
    %2063 = vmatmul.mubr.f32.gmra.mrb[0].mxu0 %v1996
    %v2064 = vpop.f32.mrb[0].mxu0
    %v2065 = vadd.f32 0.0, %v2064
    %v2066 = vpop.f32.mrb[0].mxu0
    %2067 = vdwg.mxu0
    %v2069 = vrot.slane %v2065, 6
    %v2071 = vadd.f32 %v1882, %v2069
    %v2072 = vtanh.pop %v2071
    %v2073 = vxor.u32 %v2071, 2147483648
    %v2074 = vmul.f32 %v2073, 1.442695
    %v2075 = vpow.pop %v2074
    %v2076 = vadd.f32 %v2075, 1.0
    %v2077 = vrcp.pop %v2076
    %v2078 = vmul.f32 1.0, %v2077
    %v2079 = vsel %vm57, %v2072, %v2078
    %v2081 = vrot.slane %v2079, 2
    %2083 = vrot.lane.b32.xlu0 %v2081, 96
    %v2084 = vpop.permute.xlu0 %2083
    %2085 = vrot.lane.b32.xlu0 %v2081, 64
    %v2086 = vpop.permute.xlu0 %2085
    %2087 = vrot.lane.b32.xlu0 %v2081, 32
    %v2088 = vpop.permute.xlu0 %2087
    %v2089 = vmul.f32 %v2084, %v1994
    %v2091 = vrot.slane %v2086, 6
    %v2093 = vmul.f32 %v2079, %v2091
    %v2095 = vrot.slane %v2093, 2
    %v2097 = vadd.f32 %v2089, %v2095
    %v2098 = vtanh.pop %v2097
    %v2099 = vmul.f32 %v2088, %v2098
    %2100 = vst [vmem:[#allocation2 + $0x2] sm:$0x3] %v2099
    %2101 = vmatprep.subr.mxu0 0.0
    %2102 = vmatpush1.msra.mxu0 %v1891
    %2103 = vmatprep.subr.mxu0 0.0
    %2104 = vmatpush1.msra.mxu0 %v1892
    %2105 = vmatprep.subr.mxu0 0.0
    %2106 = vmatpush1.msra.mxu0 %v1893
    %2107 = vmatprep.subr.mxu0 0.0
    %2108 = vmatpush1.msra.mxu0 %v1894
    %2109 = vmatprep.subr.mxu0 0.0
    %2110 = vmatpush1.msra.mxu0 %v1895
    %2111 = vmatprep.subr.mxu0 0.0
    %2112 = vmatpush1.msra.mxu0 %v1896
    %2113 = vmatprep.subr.mxu0 0.0
    %2114 = vmatpush1.msra.mxu0 %v1897
    %2115 = vmatprep.subr.mxu0 0.0
    %2116 = vmatpush1.msra.mxu0 %v1898
    %2117 = vmatprep.subr.mxu0 0.0
    %2118 = vmatpush1.msra.mxu0 %v1899
    %2119 = vmatprep.subr.mxu0 0.0
    %2120 = vmatpush1.msra.mxu0 %v1900
    %2121 = vmatprep.subr.mxu0 0.0
    %2122 = vmatpush1.msra.mxu0 %v1901
    %2123 = vmatprep.subr.mxu0 0.0
    %2124 = vmatpush1.msra.mxu0 %v1902
    %2125 = vmatprep.subr.mxu0 0.0
    %2126 = vmatpush1.msra.mxu0 %v1903
    %2127 = vmatprep.subr.mxu0 0.0
    %2128 = vmatpush1.msra.mxu0 %v1904
    %2129 = vmatprep.subr.mxu0 0.0
    %2130 = vmatpush1.msra.mxu0 %v1905
    %2131 = vmatprep.subr.mxu0 0.0
    %2132 = vmatpush1.msra.mxu0 %v1906
    %2133 = vmatprep.subr.mxu0 0.0
    %2134 = vmatpush1.msra.mxu0 0.0
    %2135 = vmatprep.subr.mxu0 0.0
    %2136 = vmatpush1.msra.mxu0 0.0
    %2137 = vmatprep.subr.mxu0 0.0
    %2138 = vmatpush1.msra.mxu0 0.0
    %2139 = vmatprep.subr.mxu0 0.0
    %2140 = vmatpush1.msra.mxu0 0.0
    %2141 = vmatprep.subr.mxu0 0.0
    %2142 = vmatpush1.msra.mxu0 0.0
    %2143 = vmatprep.subr.mxu0 0.0
    %2144 = vmatpush1.msra.mxu0 0.0
    %2145 = vmatprep.subr.mxu0 0.0
    %2146 = vmatpush1.msra.mxu0 0.0
    %2147 = vmatprep.subr.mxu0 0.0
    %2148 = vmatpush1.msra.mxu0 0.0
    %2149 = vmatprep.subr.mxu0 0.0
    %2150 = vmatpush1.msra.mxu0 0.0
    %2151 = vmatprep.subr.mxu0 0.0
    %2152 = vmatpush1.msra.mxu0 0.0
    %2153 = vmatprep.subr.mxu0 0.0
    %2154 = vmatpush1.msra.mxu0 0.0
    %2155 = vmatprep.subr.mxu0 0.0
    %2156 = vmatpush1.msra.mxu0 0.0
    %2157 = vmatprep.subr.mxu0 0.0
    %2158 = vmatpush1.msra.mxu0 0.0
    %2159 = vmatprep.subr.mxu0 0.0
    %2160 = vmatpush1.msra.mxu0 0.0
    %2161 = vmatprep.subr.mxu0 0.0
    %2162 = vmatpush1.msra.mxu0 0.0
    %2163 = vmatprep.subr.mxu0 0.0
    %2164 = vmatpush1.msra.mxu0 0.0
    %2165 = vmatprep.mubr.f32.mxu0 0.0
    %2166 = vmatmul.mubr.f32.gmra.mrb[0].mxu0 %v2099
    %v2167 = vpop.f32.mrb[0].mxu0
    %v2168 = vadd.f32 0.0, %v2167
    %v2169 = vpop.f32.mrb[0].mxu0
    %2170 = vdwg.mxu0
    %v2172 = vrot.slane %v2168, 4
    %v2174 = vadd.f32 %v1882, %v2172
    %v2175 = vtanh.pop %v2174
    %v2176 = vxor.u32 %v2174, 2147483648
    %v2177 = vmul.f32 %v2176, 1.442695
    %v2178 = vpow.pop %v2177
    %v2179 = vadd.f32 %v2178, 1.0
    %v2180 = vrcp.pop %v2179
    %v2181 = vmul.f32 1.0, %v2180
    %v2182 = vsel %vm57, %v2175, %v2181
    %v2184 = vrot.slane %v2182, 4
    %2186 = vrot.lane.b32.xlu0 %v2184, 96
    %v2187 = vpop.permute.xlu0 %2186
    %2188 = vrot.lane.b32.xlu0 %v2184, 64
    %v2189 = vpop.permute.xlu0 %2188
    %2190 = vrot.lane.b32.xlu0 %v2184, 32
    %v2191 = vpop.permute.xlu0 %2190
    %v2192 = vmul.f32 %v2187, %v2097
    %v2194 = vrot.slane %v2189, 4
    %v2196 = vmul.f32 %v2182, %v2194
    %v2198 = vrot.slane %v2196, 4
    %v2200 = vadd.f32 %v2192, %v2198
    %v2201 = vtanh.pop %v2200
    %v2202 = vmul.f32 %v2191, %v2201
    %2203 = vst [vmem:[#allocation2 + $0x4] sm:$0x3] %v2202
    %2204 = vmatprep.subr.mxu0 0.0
    %2205 = vmatpush1.msra.mxu0 %v1891
    %2206 = vmatprep.subr.mxu0 0.0
    %2207 = vmatpush1.msra.mxu0 %v1892
    %2208 = vmatprep.subr.mxu0 0.0
    %2209 = vmatpush1.msra.mxu0 %v1893
    %2210 = vmatprep.subr.mxu0 0.0
    %2211 = vmatpush1.msra.mxu0 %v1894
    %2212 = vmatprep.subr.mxu0 0.0
    %2213 = vmatpush1.msra.mxu0 %v1895
    %2214 = vmatprep.subr.mxu0 0.0
    %2215 = vmatpush1.msra.mxu0 %v1896
    %2216 = vmatprep.subr.mxu0 0.0
    %2217 = vmatpush1.msra.mxu0 %v1897
    %2218 = vmatprep.subr.mxu0 0.0
    %2219 = vmatpush1.msra.mxu0 %v1898
    %2220 = vmatprep.subr.mxu0 0.0
    %2221 = vmatpush1.msra.mxu0 %v1899
    %2222 = vmatprep.subr.mxu0 0.0
    %2223 = vmatpush1.msra.mxu0 %v1900
    %2224 = vmatprep.subr.mxu0 0.0
    %2225 = vmatpush1.msra.mxu0 %v1901
    %2226 = vmatprep.subr.mxu0 0.0
    %2227 = vmatpush1.msra.mxu0 %v1902
    %2228 = vmatprep.subr.mxu0 0.0
    %2229 = vmatpush1.msra.mxu0 %v1903
    %2230 = vmatprep.subr.mxu0 0.0
    %2231 = vmatpush1.msra.mxu0 %v1904
    %2232 = vmatprep.subr.mxu0 0.0
    %2233 = vmatpush1.msra.mxu0 %v1905
    %2234 = vmatprep.subr.mxu0 0.0
    %2235 = vmatpush1.msra.mxu0 %v1906
    %2236 = vmatprep.subr.mxu0 0.0
    %2237 = vmatpush1.msra.mxu0 0.0
    %2238 = vmatprep.subr.mxu0 0.0
    %2239 = vmatpush1.msra.mxu0 0.0
    %2240 = vmatprep.subr.mxu0 0.0
    %2241 = vmatpush1.msra.mxu0 0.0
    %2242 = vmatprep.subr.mxu0 0.0
    %2243 = vmatpush1.msra.mxu0 0.0
    %2244 = vmatprep.subr.mxu0 0.0
    %2245 = vmatpush1.msra.mxu0 0.0
    %2246 = vmatprep.subr.mxu0 0.0
    %2247 = vmatpush1.msra.mxu0 0.0
    %2248 = vmatprep.subr.mxu0 0.0
    %2249 = vmatpush1.msra.mxu0 0.0
    %2250 = vmatprep.subr.mxu0 0.0
    %2251 = vmatpush1.msra.mxu0 0.0
    %2252 = vmatprep.subr.mxu0 0.0
    %2253 = vmatpush1.msra.mxu0 0.0
    %2254 = vmatprep.subr.mxu0 0.0
    %2255 = vmatpush1.msra.mxu0 0.0
    %2256 = vmatprep.subr.mxu0 0.0
    %2257 = vmatpush1.msra.mxu0 0.0
    %2258 = vmatprep.subr.mxu0 0.0
    %2259 = vmatpush1.msra.mxu0 0.0
    %2260 = vmatprep.subr.mxu0 0.0
    %2261 = vmatpush1.msra.mxu0 0.0
    %2262 = vmatprep.subr.mxu0 0.0
    %2263 = vmatpush1.msra.mxu0 0.0
    %2264 = vmatprep.subr.mxu0 0.0
    %2265 = vmatpush1.msra.mxu0 0.0
    %2266 = vmatprep.subr.mxu0 0.0
    %2267 = vmatpush1.msra.mxu0 0.0
    %2268 = vmatprep.mubr.f32.mxu0 0.0
    %2269 = vmatmul.mubr.f32.gmra.mrb[0].mxu0 %v2202
    %v2270 = vpop.f32.mrb[0].mxu0
    %v2271 = vadd.f32 0.0, %v2270
    %v2272 = vpop.f32.mrb[0].mxu0
    %2273 = vdwg.mxu0
    %v2275 = vrot.slane %v2271, 2
    %v2277 = vadd.f32 %v1882, %v2275
    %v2278 = vtanh.pop %v2277
    %v2279 = vxor.u32 %v2277, 2147483648
    %v2280 = vmul.f32 %v2279, 1.442695
    %v2281 = vpow.pop %v2280
    %v2282 = vadd.f32 %v2281, 1.0
    %v2283 = vrcp.pop %v2282
    %v2284 = vmul.f32 1.0, %v2283
    %v2285 = vsel %vm57, %v2278, %v2284
    %v2287 = vrot.slane %v2285, 6
    %2289 = vrot.lane.b32.xlu0 %v2287, 96
    %v2290 = vpop.permute.xlu0 %2289
    %2291 = vrot.lane.b32.xlu0 %v2287, 64
    %v2292 = vpop.permute.xlu0 %2291
    %2293 = vrot.lane.b32.xlu0 %v2287, 32
    %v2294 = vpop.permute.xlu0 %2293
    %v2295 = vmul.f32 %v2290, %v2200
    %v2297 = vrot.slane %v2292, 2
    %v2299 = vmul.f32 %v2285, %v2297
    %v2301 = vrot.slane %v2299, 6
    %v2303 = vadd.f32 %v2295, %v2301
    %v2304 = vtanh.pop %v2303
    %v2305 = vmul.f32 %v2294, %v2304
    %2306 = vst [vmem:[#allocation2 + $0x6] sm:$0x3] %v2305
    %2307 = vmatprep.subr.mxu0 0.0
    %2308 = vmatpush1.msra.mxu0 %v1891
    %2309 = vmatprep.subr.mxu0 0.0
    %2310 = vmatpush1.msra.mxu0 %v1892
    %2311 = vmatprep.subr.mxu0 0.0
    %2312 = vmatpush1.msra.mxu0 %v1893
    %2313 = vmatprep.subr.mxu0 0.0
    %2314 = vmatpush1.msra.mxu0 %v1894
    %2315 = vmatprep.subr.mxu0 0.0
    %2316 = vmatpush1.msra.mxu0 %v1895
    %2317 = vmatprep.subr.mxu0 0.0
    %2318 = vmatpush1.msra.mxu0 %v1896
    %2319 = vmatprep.subr.mxu0 0.0
    %2320 = vmatpush1.msra.mxu0 %v1897
    %2321 = vmatprep.subr.mxu0 0.0
    %2322 = vmatpush1.msra.mxu0 %v1898
    %2323 = vmatprep.subr.mxu0 0.0
    %2324 = vmatpush1.msra.mxu0 %v1899
    %2325 = vmatprep.subr.mxu0 0.0
    %2326 = vmatpush1.msra.mxu0 %v1900
    %2327 = vmatprep.subr.mxu0 0.0
    %2328 = vmatpush1.msra.mxu0 %v1901
    %2329 = vmatprep.subr.mxu0 0.0
    %2330 = vmatpush1.msra.mxu0 %v1902
    %2331 = vmatprep.subr.mxu0 0.0
    %2332 = vmatpush1.msra.mxu0 %v1903
    %2333 = vmatprep.subr.mxu0 0.0
    %2334 = vmatpush1.msra.mxu0 %v1904
    %2335 = vmatprep.subr.mxu0 0.0
    %2336 = vmatpush1.msra.mxu0 %v1905
    %2337 = vmatprep.subr.mxu0 0.0
    %2338 = vmatpush1.msra.mxu0 %v1906
    %2339 = vmatprep.subr.mxu0 0.0
    %2340 = vmatpush1.msra.mxu0 0.0
    %2341 = vmatprep.subr.mxu0 0.0
    %2342 = vmatpush1.msra.mxu0 0.0
    %2343 = vmatprep.subr.mxu0 0.0
    %2344 = vmatpush1.msra.mxu0 0.0
    %2345 = vmatprep.subr.mxu0 0.0
    %2346 = vmatpush1.msra.mxu0 0.0
    %2347 = vmatprep.subr.mxu0 0.0
    %2348 = vmatpush1.msra.mxu0 0.0
    %2349 = vmatprep.subr.mxu0 0.0
    %2350 = vmatpush1.msra.mxu0 0.0
    %2351 = vmatprep.subr.mxu0 0.0
    %2352 = vmatpush1.msra.mxu0 0.0
    %2353 = vmatprep.subr.mxu0 0.0
    %2354 = vmatpush1.msra.mxu0 0.0
    %2355 = vmatprep.subr.mxu0 0.0
    %2356 = vmatpush1.msra.mxu0 0.0
    %2357 = vmatprep.subr.mxu0 0.0
    %2358 = vmatpush1.msra.mxu0 0.0
    %2359 = vmatprep.subr.mxu0 0.0
    %2360 = vmatpush1.msra.mxu0 0.0
    %2361 = vmatprep.subr.mxu0 0.0
    %2362 = vmatpush1.msra.mxu0 0.0
    %2363 = vmatprep.subr.mxu0 0.0
    %2364 = vmatpush1.msra.mxu0 0.0
    %2365 = vmatprep.subr.mxu0 0.0
    %2366 = vmatpush1.msra.mxu0 0.0
    %2367 = vmatprep.subr.mxu0 0.0
    %2368 = vmatpush1.msra.mxu0 0.0
    %2369 = vmatprep.subr.mxu0 0.0
    %2370 = vmatpush1.msra.mxu0 0.0
    %2371 = vmatprep.mubr.f32.mxu0 0.0
    %2372 = vmatmul.mubr.f32.gmra.mrb[0].mxu0 %v2305
    %v2373 = vpop.f32.mrb[0].mxu0
    %v2374 = vadd.f32 0.0, %v2373
    %v2375 = vpop.f32.mrb[0].mxu0
    %2376 = vdwg.mxu0
    %v2377 = vadd.f32 %v1887, %v2374
    %v2378 = vtanh.pop %v2377
    %v2379 = vxor.u32 %v2377, 2147483648
    %v2380 = vmul.f32 %v2379, 1.442695
    %v2381 = vpow.pop %v2380
    %v2382 = vadd.f32 %v2381, 1.0
    %v2383 = vrcp.pop %v2382
    %v2384 = vmul.f32 1.0, %v2383
    %v2385 = vsel %vm57, %v2378, %v2384
    %2386 = vrot.lane.b32.xlu0 %v2385, 96
    %v2387 = vpop.permute.xlu0 %2386
    %2388 = vrot.lane.b32.xlu0 %v2385, 64
    %v2389 = vpop.permute.xlu0 %2388
    %2390 = vrot.lane.b32.xlu0 %v2385, 32
    %v2391 = vpop.permute.xlu0 %2390
    %v2392 = vmul.f32 %v2387, %v2303
    %v2393 = vmul.f32 %v2385, %v2389
    %v2394 = vadd.f32 %v2392, %v2393
    %v2395 = vtanh.pop %v2394
    %v2396 = vmul.f32 %v2391, %v2395
    %2397 = vst [vmem:[#allocation2 + $0x8] sm:$0x3] %v2396
    %2398 = vmatprep.subr.mxu0 0.0
    %2399 = vmatpush1.msra.mxu0 %v1891
    %2400 = vmatprep.subr.mxu0 0.0
    %2401 = vmatpush1.msra.mxu0 %v1892
    %2402 = vmatprep.subr.mxu0 0.0
    %2403 = vmatpush1.msra.mxu0 %v1893
    %2404 = vmatprep.subr.mxu0 0.0
    %2405 = vmatpush1.msra.mxu0 %v1894
    %2406 = vmatprep.subr.mxu0 0.0
    %2407 = vmatpush1.msra.mxu0 %v1895
    %2408 = vmatprep.subr.mxu0 0.0
    %2409 = vmatpush1.msra.mxu0 %v1896
    %2410 = vmatprep.subr.mxu0 0.0
    %2411 = vmatpush1.msra.mxu0 %v1897
    %2412 = vmatprep.subr.mxu0 0.0
    %2413 = vmatpush1.msra.mxu0 %v1898
    %2414 = vmatprep.subr.mxu0 0.0
    %2415 = vmatpush1.msra.mxu0 %v1899
    %2416 = vmatprep.subr.mxu0 0.0
    %2417 = vmatpush1.msra.mxu0 %v1900
    %2418 = vmatprep.subr.mxu0 0.0
    %2419 = vmatpush1.msra.mxu0 %v1901
    %2420 = vmatprep.subr.mxu0 0.0
    %2421 = vmatpush1.msra.mxu0 %v1902
    %2422 = vmatprep.subr.mxu0 0.0
    %2423 = vmatpush1.msra.mxu0 %v1903
    %2424 = vmatprep.subr.mxu0 0.0
    %2425 = vmatpush1.msra.mxu0 %v1904
    %2426 = vmatprep.subr.mxu0 0.0
    %2427 = vmatpush1.msra.mxu0 %v1905
    %2428 = vmatprep.subr.mxu0 0.0
    %2429 = vmatpush1.msra.mxu0 %v1906
    %2430 = vmatprep.subr.mxu0 0.0
    %2431 = vmatpush1.msra.mxu0 0.0
    %2432 = vmatprep.subr.mxu0 0.0
    %2433 = vmatpush1.msra.mxu0 0.0
    %2434 = vmatprep.subr.mxu0 0.0
    %2435 = vmatpush1.msra.mxu0 0.0
    %2436 = vmatprep.subr.mxu0 0.0
    %2437 = vmatpush1.msra.mxu0 0.0
    %2438 = vmatprep.subr.mxu0 0.0
    %2439 = vmatpush1.msra.mxu0 0.0
    %2440 = vmatprep.subr.mxu0 0.0
    %2441 = vmatpush1.msra.mxu0 0.0
    %2442 = vmatprep.subr.mxu0 0.0
    %2443 = vmatpush1.msra.mxu0 0.0
    %2444 = vmatprep.subr.mxu0 0.0
    %2445 = vmatpush1.msra.mxu0 0.0
    %2446 = vmatprep.subr.mxu0 0.0
    %2447 = vmatpush1.msra.mxu0 0.0
    %2448 = vmatprep.subr.mxu0 0.0
    %2449 = vmatpush1.msra.mxu0 0.0
    %2450 = vmatprep.subr.mxu0 0.0
    %2451 = vmatpush1.msra.mxu0 0.0
    %2452 = vmatprep.subr.mxu0 0.0
    %2453 = vmatpush1.msra.mxu0 0.0
    %2454 = vmatprep.subr.mxu0 0.0
    %2455 = vmatpush1.msra.mxu0 0.0
    %2456 = vmatprep.subr.mxu0 0.0
    %2457 = vmatpush1.msra.mxu0 0.0
    %2458 = vmatprep.subr.mxu0 0.0
    %2459 = vmatpush1.msra.mxu0 0.0
    %2460 = vmatprep.subr.mxu0 0.0
    %2461 = vmatpush1.msra.mxu0 0.0
    %2462 = vmatprep.mubr.f32.mxu0 0.0
    %2463 = vmatmul.mubr.f32.gmra.mrb[0].mxu0 %v2396
    %v2464 = vpop.f32.mrb[0].mxu0
    %v2465 = vadd.f32 0.0, %v2464
    %v2466 = vpop.f32.mrb[0].mxu0
    %2467 = vdwg.mxu0
    %v2469 = vrot.slane %v2465, 6
    %v2471 = vadd.f32 %v1887, %v2469
    %v2472 = vtanh.pop %v2471
    %v2473 = vxor.u32 %v2471, 2147483648
    %v2474 = vmul.f32 %v2473, 1.442695
    %v2475 = vpow.pop %v2474
    %v2476 = vadd.f32 %v2475, 1.0
    %v2477 = vrcp.pop %v2476
    %v2478 = vmul.f32 1.0, %v2477
    %v2479 = vsel %vm57, %v2472, %v2478
    %v2481 = vrot.slane %v2479, 2
    %2483 = vrot.lane.b32.xlu0 %v2481, 96
    %v2484 = vpop.permute.xlu0 %2483
    %2485 = vrot.lane.b32.xlu0 %v2481, 64
    %v2486 = vpop.permute.xlu0 %2485
    %2487 = vrot.lane.b32.xlu0 %v2481, 32
    %v2488 = vpop.permute.xlu0 %2487
    %v2489 = vmul.f32 %v2484, %v2394
    %v2491 = vrot.slane %v2486, 6
    %v2493 = vmul.f32 %v2479, %v2491
    %v2495 = vrot.slane %v2493, 2
    %v2497 = vadd.f32 %v2489, %v2495
    %v2498 = vtanh.pop %v2497
    %v2499 = vmul.f32 %v2488, %v2498
    %2500 = vst [vmem:[#allocation2 + $0xa] sm:$0x3] %v2499
    %2501 = vmatprep.subr.mxu0 0.0
    %2502 = vmatpush1.msra.mxu0 %v1891
    %2503 = vmatprep.subr.mxu0 0.0
    %2504 = vmatpush1.msra.mxu0 %v1892
    %2505 = vmatprep.subr.mxu0 0.0
    %2506 = vmatpush1.msra.mxu0 %v1893
    %2507 = vmatprep.subr.mxu0 0.0
    %2508 = vmatpush1.msra.mxu0 %v1894
    %2509 = vmatprep.subr.mxu0 0.0
    %2510 = vmatpush1.msra.mxu0 %v1895
    %2511 = vmatprep.subr.mxu0 0.0
    %2512 = vmatpush1.msra.mxu0 %v1896
    %2513 = vmatprep.subr.mxu0 0.0
    %2514 = vmatpush1.msra.mxu0 %v1897
    %2515 = vmatprep.subr.mxu0 0.0
    %2516 = vmatpush1.msra.mxu0 %v1898
    %2517 = vmatprep.subr.mxu0 0.0
    %2518 = vmatpush1.msra.mxu0 %v1899
    %2519 = vmatprep.subr.mxu0 0.0
    %2520 = vmatpush1.msra.mxu0 %v1900
    %2521 = vmatprep.subr.mxu0 0.0
    %2522 = vmatpush1.msra.mxu0 %v1901
    %2523 = vmatprep.subr.mxu0 0.0
    %2524 = vmatpush1.msra.mxu0 %v1902
    %2525 = vmatprep.subr.mxu0 0.0
    %2526 = vmatpush1.msra.mxu0 %v1903
    %2527 = vmatprep.subr.mxu0 0.0
    %2528 = vmatpush1.msra.mxu0 %v1904
    %2529 = vmatprep.subr.mxu0 0.0
    %2530 = vmatpush1.msra.mxu0 %v1905
    %2531 = vmatprep.subr.mxu0 0.0
    %2532 = vmatpush1.msra.mxu0 %v1906
    %2533 = vmatprep.subr.mxu0 0.0
    %2534 = vmatpush1.msra.mxu0 0.0
    %2535 = vmatprep.subr.mxu0 0.0
    %2536 = vmatpush1.msra.mxu0 0.0
    %2537 = vmatprep.subr.mxu0 0.0
    %2538 = vmatpush1.msra.mxu0 0.0
    %2539 = vmatprep.subr.mxu0 0.0
    %2540 = vmatpush1.msra.mxu0 0.0
    %2541 = vmatprep.subr.mxu0 0.0
    %2542 = vmatpush1.msra.mxu0 0.0
    %2543 = vmatprep.subr.mxu0 0.0
    %2544 = vmatpush1.msra.mxu0 0.0
    %2545 = vmatprep.subr.mxu0 0.0
    %2546 = vmatpush1.msra.mxu0 0.0
    %2547 = vmatprep.subr.mxu0 0.0
    %2548 = vmatpush1.msra.mxu0 0.0
    %2549 = vmatprep.subr.mxu0 0.0
    %2550 = vmatpush1.msra.mxu0 0.0
    %2551 = vmatprep.subr.mxu0 0.0
    %2552 = vmatpush1.msra.mxu0 0.0
    %2553 = vmatprep.subr.mxu0 0.0
    %2554 = vmatpush1.msra.mxu0 0.0
    %2555 = vmatprep.subr.mxu0 0.0
    %2556 = vmatpush1.msra.mxu0 0.0
    %2557 = vmatprep.subr.mxu0 0.0
    %2558 = vmatpush1.msra.mxu0 0.0
    %2559 = vmatprep.subr.mxu0 0.0
    %2560 = vmatpush1.msra.mxu0 0.0
    %2561 = vmatprep.subr.mxu0 0.0
    %2562 = vmatpush1.msra.mxu0 0.0
    %2563 = vmatprep.subr.mxu0 0.0
    %2564 = vmatpush1.msra.mxu0 0.0
    %2565 = vmatprep.mubr.f32.mxu0 0.0
    %2566 = vmatmul.mubr.f32.gmra.mrb[0].mxu0 %v2499
    %v2567 = vpop.f32.mrb[0].mxu0
    %v2568 = vadd.f32 0.0, %v2567
    %v2569 = vpop.f32.mrb[0].mxu0
    %2570 = vdwg.mxu0
    %v2572 = vrot.slane %v2568, 4
    %v2574 = vadd.f32 %v1887, %v2572
    %v2575 = vtanh.pop %v2574
    %v2576 = vxor.u32 %v2574, 2147483648
    %v2577 = vmul.f32 %v2576, 1.442695
    %v2578 = vpow.pop %v2577
    %v2579 = vadd.f32 %v2578, 1.0
    %v2580 = vrcp.pop %v2579
    %v2581 = vmul.f32 1.0, %v2580
    %v2582 = vsel %vm57, %v2575, %v2581
    %v2584 = vrot.slane %v2582, 4
    %2586 = vrot.lane.b32.xlu0 %v2584, 96
    %v2587 = vpop.permute.xlu0 %2586
    %2588 = vrot.lane.b32.xlu0 %v2584, 64
    %v2589 = vpop.permute.xlu0 %2588
    %2590 = vrot.lane.b32.xlu0 %v2584, 32
    %v2591 = vpop.permute.xlu0 %2590
    %v2592 = vmul.f32 %v2587, %v2497
    %v2594 = vrot.slane %v2589, 4
    %v2596 = vmul.f32 %v2582, %v2594
    %v2598 = vrot.slane %v2596, 4
    %v2600 = vadd.f32 %v2592, %v2598
    %v2601 = vtanh.pop %v2600
    %v2602 = vmul.f32 %v2591, %v2601
    %2603 = vst [vmem:[#allocation2 + $0xc] sm:$0x3] %v2602
    %2604 = vmatprep.subr.mxu0 0.0
    %2605 = vmatpush1.msra.mxu0 %v1891
    %2606 = vmatprep.subr.mxu0 0.0
    %2607 = vmatpush1.msra.mxu0 %v1892
    %2608 = vmatprep.subr.mxu0 0.0
    %2609 = vmatpush1.msra.mxu0 %v1893
    %2610 = vmatprep.subr.mxu0 0.0
    %2611 = vmatpush1.msra.mxu0 %v1894
    %2612 = vmatprep.subr.mxu0 0.0
    %2613 = vmatpush1.msra.mxu0 %v1895
    %2614 = vmatprep.subr.mxu0 0.0
    %2615 = vmatpush1.msra.mxu0 %v1896
    %2616 = vmatprep.subr.mxu0 0.0
    %2617 = vmatpush1.msra.mxu0 %v1897
    %2618 = vmatprep.subr.mxu0 0.0
    %2619 = vmatpush1.msra.mxu0 %v1898
    %2620 = vmatprep.subr.mxu0 0.0
    %2621 = vmatpush1.msra.mxu0 %v1899
    %2622 = vmatprep.subr.mxu0 0.0
    %2623 = vmatpush1.msra.mxu0 %v1900
    %2624 = vmatprep.subr.mxu0 0.0
    %2625 = vmatpush1.msra.mxu0 %v1901
    %2626 = vmatprep.subr.mxu0 0.0
    %2627 = vmatpush1.msra.mxu0 %v1902
    %2628 = vmatprep.subr.mxu0 0.0
    %2629 = vmatpush1.msra.mxu0 %v1903
    %2630 = vmatprep.subr.mxu0 0.0
    %2631 = vmatpush1.msra.mxu0 %v1904
    %2632 = vmatprep.subr.mxu0 0.0
    %2633 = vmatpush1.msra.mxu0 %v1905
    %2634 = vmatprep.subr.mxu0 0.0
    %2635 = vmatpush1.msra.mxu0 %v1906
    %2636 = vmatprep.subr.mxu0 0.0
    %2637 = vmatpush1.msra.mxu0 0.0
    %2638 = vmatprep.subr.mxu0 0.0
    %2639 = vmatpush1.msra.mxu0 0.0
    %2640 = vmatprep.subr.mxu0 0.0
    %2641 = vmatpush1.msra.mxu0 0.0
    %2642 = vmatprep.subr.mxu0 0.0
    %2643 = vmatpush1.msra.mxu0 0.0
    %2644 = vmatprep.subr.mxu0 0.0
    %2645 = vmatpush1.msra.mxu0 0.0
    %2646 = vmatprep.subr.mxu0 0.0
    %2647 = vmatpush1.msra.mxu0 0.0
    %2648 = vmatprep.subr.mxu0 0.0
    %2649 = vmatpush1.msra.mxu0 0.0
    %2650 = vmatprep.subr.mxu0 0.0
    %2651 = vmatpush1.msra.mxu0 0.0
    %2652 = vmatprep.subr.mxu0 0.0
    %2653 = vmatpush1.msra.mxu0 0.0
    %2654 = vmatprep.subr.mxu0 0.0
    %2655 = vmatpush1.msra.mxu0 0.0
    %2656 = vmatprep.subr.mxu0 0.0
    %2657 = vmatpush1.msra.mxu0 0.0
    %2658 = vmatprep.subr.mxu0 0.0
    %2659 = vmatpush1.msra.mxu0 0.0
    %2660 = vmatprep.subr.mxu0 0.0
    %2661 = vmatpush1.msra.mxu0 0.0
    %2662 = vmatprep.subr.mxu0 0.0
    %2663 = vmatpush1.msra.mxu0 0.0
    %2664 = vmatprep.subr.mxu0 0.0
    %2665 = vmatpush1.msra.mxu0 0.0
    %2666 = vmatprep.subr.mxu0 0.0
    %2667 = vmatpush1.msra.mxu0 0.0
    %2668 = vmatprep.mubr.f32.mxu0 0.0
    %2669 = vmatmul.mubr.f32.gmra.mrb[0].mxu0 %v2602
    %v2670 = vpop.f32.mrb[0].mxu0
    %v2671 = vadd.f32 0.0, %v2670
    %v2672 = vpop.f32.mrb[0].mxu0
    %2673 = vdwg.mxu0
    %v2675 = vrot.slane %v2671, 2
    %v2677 = vadd.f32 %v1887, %v2675
    %v2678 = vtanh.pop %v2677
    %v2679 = vxor.u32 %v2677, 2147483648
    %v2680 = vmul.f32 %v2679, 1.442695
    %v2681 = vpow.pop %v2680
    %v2682 = vadd.f32 %v2681, 1.0
    %v2683 = vrcp.pop %v2682
    %v2684 = vmul.f32 1.0, %v2683
    %v2685 = vsel %vm57, %v2678, %v2684
    %v2687 = vrot.slane %v2685, 6
    %2689 = vrot.lane.b32.xlu0 %v2687, 96
    %v2690 = vpop.permute.xlu0 %2689
    %2691 = vrot.lane.b32.xlu0 %v2687, 64
    %v2692 = vpop.permute.xlu0 %2691
    %2693 = vrot.lane.b32.xlu0 %v2687, 32
    %v2694 = vpop.permute.xlu0 %2693
    %v2695 = vmul.f32 %v2690, %v2600
    %v2697 = vrot.slane %v2692, 2
    %v2699 = vmul.f32 %v2685, %v2697
    %v2701 = vrot.slane %v2699, 6
    %v2703 = vadd.f32 %v2695, %v2701
    %v2704 = vtanh.pop %v2703
    %v2705 = vmul.f32 %v2694, %v2704
    %2706 = vst [vmem:[#allocation2 + $0xe] sm:$0x3] %v2705
    %v2707 = vld [vmem:[#allocation2] sm:$0xff]
    %v2708 = vld [vmem:[#allocation2 + $0x8] sm:$0xff]
    %s2709 = scalar_lea.vmem [#allocation4], 256
    %v2710 = vld [vmem:[%s2709] sm:$0xff]
    %v2711 = vld [vmem:[%s2709 + $0x8] sm:$0xff]
    %v2712 = vld [vmem:[%s2709 + $0x10] sm:$0xff]
    %v2713 = vld [vmem:[%s2709 + $0x18] sm:$0xff]
    %v2714 = vld [vmem:[%s2709 + $0x20] sm:$0xff]
    %v2715 = vld [vmem:[%s2709 + $0x28] sm:$0xff]
    %v2716 = vld [vmem:[%s2709 + $0x30] sm:$0xff]
    %v2717 = vld [vmem:[%s2709 + $0x38] sm:$0xff]
    %v2718 = vld [vmem:[%s2709 + $0x40] sm:$0xff]
    %v2719 = vld [vmem:[%s2709 + $0x48] sm:$0xff]
    %v2720 = vld [vmem:[%s2709 + $0x50] sm:$0xff]
    %v2721 = vld [vmem:[%s2709 + $0x58] sm:$0xff]
    %v2722 = vld [vmem:[%s2709 + $0x60] sm:$0xff]
    %v2723 = vld [vmem:[%s2709 + $0x68] sm:$0xff]
    %v2724 = vld [vmem:[%s2709 + $0x70] sm:$0xff]
    %v2725 = vld [vmem:[%s2709 + $0x78] sm:$0xff]
    %v2726 = vld [vmem:[%s3 + $0x3] sm:$0x1]
    %v2727 = vlaneseq
    %v2728 = vshrl.u32 %v2727, 7
    %v2729 = vsub.s32 0, %v2728
    %v2730 = vrot.slane %v2726, %v2729
    %2731 = vmatprep.subr.mxu0 0.0
    %2732 = vmatpush1.msra.mxu0 %v2710
    %2733 = vmatprep.subr.mxu0 0.0
    %2734 = vmatpush1.msra.mxu0 %v2711
    %2735 = vmatprep.subr.mxu0 0.0
    %2736 = vmatpush1.msra.mxu0 %v2712
    %2737 = vmatprep.subr.mxu0 0.0
    %2738 = vmatpush1.msra.mxu0 %v2713
    %2739 = vmatprep.subr.mxu0 0.0
    %2740 = vmatpush1.msra.mxu0 %v2714
    %2741 = vmatprep.subr.mxu0 0.0
    %2742 = vmatpush1.msra.mxu0 %v2715
    %2743 = vmatprep.subr.mxu0 0.0
    %2744 = vmatpush1.msra.mxu0 %v2716
    %2745 = vmatprep.subr.mxu0 0.0
    %2746 = vmatpush1.msra.mxu0 %v2717
    %2747 = vmatprep.subr.mxu0 0.0
    %2748 = vmatpush1.msra.mxu0 %v2718
    %2749 = vmatprep.subr.mxu0 0.0
    %2750 = vmatpush1.msra.mxu0 %v2719
    %2751 = vmatprep.subr.mxu0 0.0
    %2752 = vmatpush1.msra.mxu0 %v2720
    %2753 = vmatprep.subr.mxu0 0.0
    %2754 = vmatpush1.msra.mxu0 %v2721
    %2755 = vmatprep.subr.mxu0 0.0
    %2756 = vmatpush1.msra.mxu0 %v2722
    %2757 = vmatprep.subr.mxu0 0.0
    %2758 = vmatpush1.msra.mxu0 %v2723
    %2759 = vmatprep.subr.mxu0 0.0
    %2760 = vmatpush1.msra.mxu0 %v2724
    %2761 = vmatprep.subr.mxu0 0.0
    %2762 = vmatpush1.msra.mxu0 %v2725
    %2763 = vmatprep.subr.mxu0 0.0
    %2764 = vmatpush1.msra.mxu0 0.0
    %2765 = vmatprep.subr.mxu0 0.0
    %2766 = vmatpush1.msra.mxu0 0.0
    %2767 = vmatprep.subr.mxu0 0.0
    %2768 = vmatpush1.msra.mxu0 0.0
    %2769 = vmatprep.subr.mxu0 0.0
    %2770 = vmatpush1.msra.mxu0 0.0
    %2771 = vmatprep.subr.mxu0 0.0
    %2772 = vmatpush1.msra.mxu0 0.0
    %2773 = vmatprep.subr.mxu0 0.0
    %2774 = vmatpush1.msra.mxu0 0.0
    %2775 = vmatprep.subr.mxu0 0.0
    %2776 = vmatpush1.msra.mxu0 0.0
    %2777 = vmatprep.subr.mxu0 0.0
    %2778 = vmatpush1.msra.mxu0 0.0
    %2779 = vmatprep.subr.mxu0 0.0
    %2780 = vmatpush1.msra.mxu0 0.0
    %2781 = vmatprep.subr.mxu0 0.0
    %2782 = vmatpush1.msra.mxu0 0.0
    %2783 = vmatprep.subr.mxu0 0.0
    %2784 = vmatpush1.msra.mxu0 0.0
    %2785 = vmatprep.subr.mxu0 0.0
    %2786 = vmatpush1.msra.mxu0 0.0
    %2787 = vmatprep.subr.mxu0 0.0
    %2788 = vmatpush1.msra.mxu0 0.0
    %2789 = vmatprep.subr.mxu0 0.0
    %2790 = vmatpush1.msra.mxu0 0.0
    %2791 = vmatprep.subr.mxu0 0.0
    %2792 = vmatpush1.msra.mxu0 0.0
    %2793 = vmatprep.subr.mxu0 0.0
    %2794 = vmatpush1.msra.mxu0 0.0
    %2795 = vmatprep.mubr.f32.mxu0 0.0
    %2796 = vmatmul.mubr.f32.gmra.mrb[0].mxu0 %v2707
    %v2797 = vpop.f32.mrb[0].mxu0
    %v2798 = vadd.f32 %v2730, %v2797
    %v2799 = vpop.f32.mrb[0].mxu0
    %2800 = vmatprep.mubr.f32.mxu0 0.0
    %2801 = vmatmul.mubr.f32.gmra.mrb[0].mxu0 %v2708
    %v2802 = vpop.f32.mrb[0].mxu0
    %v2803 = vadd.f32 %v2730, %v2802
    %v2804 = vpop.f32.mrb[0].mxu0
    %2805 = vdwg.mxu0
    %s2806 = scalar_lea.vmem [#allocation6], 384
    %v2807 = vld [vmem:[%s2806] sm:$0xff]
    %v2808 = vld [vmem:[%s2806 + $0x8] sm:$0xff]
    %v2809 = vld [vmem:[%s2806 + $0x10] sm:$0xff]
    %v2810 = vld [vmem:[%s2806 + $0x18] sm:$0xff]
    %v2811 = vld [vmem:[%s2806 + $0x20] sm:$0xff]
    %v2812 = vld [vmem:[%s2806 + $0x28] sm:$0xff]
    %v2813 = vld [vmem:[%s2806 + $0x30] sm:$0xff]
    %v2814 = vld [vmem:[%s2806 + $0x38] sm:$0xff]
    %v2815 = vld [vmem:[%s2806 + $0x40] sm:$0xff]
    %v2816 = vld [vmem:[%s2806 + $0x48] sm:$0xff]
    %v2817 = vld [vmem:[%s2806 + $0x50] sm:$0xff]
    %v2818 = vld [vmem:[%s2806 + $0x58] sm:$0xff]
    %v2819 = vld [vmem:[%s2806 + $0x60] sm:$0xff]
    %v2820 = vld [vmem:[%s2806 + $0x68] sm:$0xff]
    %v2821 = vld [vmem:[%s2806 + $0x70] sm:$0xff]
    %v2822 = vld [vmem:[%s2806 + $0x78] sm:$0xff]
    %2823 = vmatprep.subr.mxu0 0.0
    %2824 = vmatpush1.msra.mxu0 %v2807
    %2825 = vmatprep.subr.mxu0 0.0
    %2826 = vmatpush1.msra.mxu0 %v2808
    %2827 = vmatprep.subr.mxu0 0.0
    %2828 = vmatpush1.msra.mxu0 %v2809
    %2829 = vmatprep.subr.mxu0 0.0
    %2830 = vmatpush1.msra.mxu0 %v2810
    %2831 = vmatprep.subr.mxu0 0.0
    %2832 = vmatpush1.msra.mxu0 %v2811
    %2833 = vmatprep.subr.mxu0 0.0
    %2834 = vmatpush1.msra.mxu0 %v2812
    %2835 = vmatprep.subr.mxu0 0.0
    %2836 = vmatpush1.msra.mxu0 %v2813
    %2837 = vmatprep.subr.mxu0 0.0
    %2838 = vmatpush1.msra.mxu0 %v2814
    %2839 = vmatprep.subr.mxu0 0.0
    %2840 = vmatpush1.msra.mxu0 %v2815
    %2841 = vmatprep.subr.mxu0 0.0
    %2842 = vmatpush1.msra.mxu0 %v2816
    %2843 = vmatprep.subr.mxu0 0.0
    %2844 = vmatpush1.msra.mxu0 %v2817
    %2845 = vmatprep.subr.mxu0 0.0
    %2846 = vmatpush1.msra.mxu0 %v2818
    %2847 = vmatprep.subr.mxu0 0.0
    %2848 = vmatpush1.msra.mxu0 %v2819
    %2849 = vmatprep.subr.mxu0 0.0
    %2850 = vmatpush1.msra.mxu0 %v2820
    %2851 = vmatprep.subr.mxu0 0.0
    %2852 = vmatpush1.msra.mxu0 %v2821
    %2853 = vmatprep.subr.mxu0 0.0
    %2854 = vmatpush1.msra.mxu0 %v2822
    %2855 = vmatprep.subr.mxu0 0.0
    %2856 = vmatpush1.msra.mxu0 0.0
    %2857 = vmatprep.subr.mxu0 0.0
    %2858 = vmatpush1.msra.mxu0 0.0
    %2859 = vmatprep.subr.mxu0 0.0
    %2860 = vmatpush1.msra.mxu0 0.0
    %2861 = vmatprep.subr.mxu0 0.0
    %2862 = vmatpush1.msra.mxu0 0.0
    %2863 = vmatprep.subr.mxu0 0.0
    %2864 = vmatpush1.msra.mxu0 0.0
    %2865 = vmatprep.subr.mxu0 0.0
    %2866 = vmatpush1.msra.mxu0 0.0
    %2867 = vmatprep.subr.mxu0 0.0
    %2868 = vmatpush1.msra.mxu0 0.0
    %2869 = vmatprep.subr.mxu0 0.0
    %2870 = vmatpush1.msra.mxu0 0.0
    %2871 = vmatprep.subr.mxu0 0.0
    %2872 = vmatpush1.msra.mxu0 0.0
    %2873 = vmatprep.subr.mxu0 0.0
    %2874 = vmatpush1.msra.mxu0 0.0
    %2875 = vmatprep.subr.mxu0 0.0
    %2876 = vmatpush1.msra.mxu0 0.0
    %2877 = vmatprep.subr.mxu0 0.0
    %2878 = vmatpush1.msra.mxu0 0.0
    %2879 = vmatprep.subr.mxu0 0.0
    %2880 = vmatpush1.msra.mxu0 0.0
    %2881 = vmatprep.subr.mxu0 0.0
    %2882 = vmatpush1.msra.mxu0 0.0
    %2883 = vmatprep.subr.mxu0 0.0
    %2884 = vmatpush1.msra.mxu0 0.0
    %2885 = vmatprep.subr.mxu0 0.0
    %2886 = vmatpush1.msra.mxu0 0.0
    %2887 = vmatprep.mubr.f32.mxu0 0.0
    %2888 = vmatmul.mubr.f32.gmra.mrb[0].mxu0 0.0
    %v2889 = vpop.f32.mrb[0].mxu0
    %v2890 = vadd.f32 0.0, %v2889
    %v2891 = vpop.f32.mrb[0].mxu0
    %2892 = vdwg.mxu0
    %v2893 = vadd.f32 %v2798, %v2890
    %v2894 = vtanh.pop %v2893
    %v2895 = vxor.u32 %v2893, 2147483648
    %v2896 = vmul.f32 %v2895, 1.442695
    %v2897 = vpow.pop %v2896
    %v2898 = vadd.f32 %v2897, 1.0
    %v2899 = vrcp.pop %v2898
    %v2900 = vmul.f32 1.0, %v2899
    %v2901 = vsel %vm57, %v2894, %v2900
    %2902 = vrot.lane.b32.xlu0 %v2901, 96
    %v2903 = vpop.permute.xlu0 %2902
    %2904 = vrot.lane.b32.xlu0 %v2901, 64
    %v2905 = vpop.permute.xlu0 %2904
    %2906 = vrot.lane.b32.xlu0 %v2901, 32
    %v2907 = vpop.permute.xlu0 %2906
    %v2908 = vmul.f32 %v2903, 0.0
    %v2909 = vmul.f32 %v2901, %v2905
    %v2910 = vadd.f32 %v2908, %v2909
    %v2911 = vtanh.pop %v2910
    %v2912 = vmul.f32 %v2907, %v2911
    %2913 = vmatprep.subr.mxu0 0.0
    %2914 = vmatpush1.msra.mxu0 %v2807
    %2915 = vmatprep.subr.mxu0 0.0
    %2916 = vmatpush1.msra.mxu0 %v2808
    %2917 = vmatprep.subr.mxu0 0.0
    %2918 = vmatpush1.msra.mxu0 %v2809
    %2919 = vmatprep.subr.mxu0 0.0
    %2920 = vmatpush1.msra.mxu0 %v2810
    %2921 = vmatprep.subr.mxu0 0.0
    %2922 = vmatpush1.msra.mxu0 %v2811
    %2923 = vmatprep.subr.mxu0 0.0
    %2924 = vmatpush1.msra.mxu0 %v2812
    %2925 = vmatprep.subr.mxu0 0.0
    %2926 = vmatpush1.msra.mxu0 %v2813
    %2927 = vmatprep.subr.mxu0 0.0
    %2928 = vmatpush1.msra.mxu0 %v2814
    %2929 = vmatprep.subr.mxu0 0.0
    %2930 = vmatpush1.msra.mxu0 %v2815
    %2931 = vmatprep.subr.mxu0 0.0
    %2932 = vmatpush1.msra.mxu0 %v2816
    %2933 = vmatprep.subr.mxu0 0.0
    %2934 = vmatpush1.msra.mxu0 %v2817
    %2935 = vmatprep.subr.mxu0 0.0
    %2936 = vmatpush1.msra.mxu0 %v2818
    %2937 = vmatprep.subr.mxu0 0.0
    %2938 = vmatpush1.msra.mxu0 %v2819
    %2939 = vmatprep.subr.mxu0 0.0
    %2940 = vmatpush1.msra.mxu0 %v2820
    %2941 = vmatprep.subr.mxu0 0.0
    %2942 = vmatpush1.msra.mxu0 %v2821
    %2943 = vmatprep.subr.mxu0 0.0
    %2944 = vmatpush1.msra.mxu0 %v2822
    %2945 = vmatprep.subr.mxu0 0.0
    %2946 = vmatpush1.msra.mxu0 0.0
    %2947 = vmatprep.subr.mxu0 0.0
    %2948 = vmatpush1.msra.mxu0 0.0
    %2949 = vmatprep.subr.mxu0 0.0
    %2950 = vmatpush1.msra.mxu0 0.0
    %2951 = vmatprep.subr.mxu0 0.0
    %2952 = vmatpush1.msra.mxu0 0.0
    %2953 = vmatprep.subr.mxu0 0.0
    %2954 = vmatpush1.msra.mxu0 0.0
    %2955 = vmatprep.subr.mxu0 0.0
    %2956 = vmatpush1.msra.mxu0 0.0
    %2957 = vmatprep.subr.mxu0 0.0
    %2958 = vmatpush1.msra.mxu0 0.0
    %2959 = vmatprep.subr.mxu0 0.0
    %2960 = vmatpush1.msra.mxu0 0.0
    %2961 = vmatprep.subr.mxu0 0.0
    %2962 = vmatpush1.msra.mxu0 0.0
    %2963 = vmatprep.subr.mxu0 0.0
    %2964 = vmatpush1.msra.mxu0 0.0
    %2965 = vmatprep.subr.mxu0 0.0
    %2966 = vmatpush1.msra.mxu0 0.0
    %2967 = vmatprep.subr.mxu0 0.0
    %2968 = vmatpush1.msra.mxu0 0.0
    %2969 = vmatprep.subr.mxu0 0.0
    %2970 = vmatpush1.msra.mxu0 0.0
    %2971 = vmatprep.subr.mxu0 0.0
    %2972 = vmatpush1.msra.mxu0 0.0
    %2973 = vmatprep.subr.mxu0 0.0
    %2974 = vmatpush1.msra.mxu0 0.0
    %2975 = vmatprep.subr.mxu0 0.0
    %2976 = vmatpush1.msra.mxu0 0.0
    %2977 = vmatprep.mubr.f32.mxu0 0.0
    %2978 = vmatmul.mubr.f32.gmra.mrb[0].mxu0 %v2912
    %v2979 = vpop.f32.mrb[0].mxu0
    %v2980 = vadd.f32 0.0, %v2979
    %v2981 = vpop.f32.mrb[0].mxu0
    %2982 = vdwg.mxu0
    %v2984 = vrot.slane %v2980, 6
    %v2986 = vadd.f32 %v2798, %v2984
    %v2987 = vtanh.pop %v2986
    %v2988 = vxor.u32 %v2986, 2147483648
    %v2989 = vmul.f32 %v2988, 1.442695
    %v2990 = vpow.pop %v2989
    %v2991 = vadd.f32 %v2990, 1.0
    %v2992 = vrcp.pop %v2991
    %v2993 = vmul.f32 1.0, %v2992
    %v2994 = vsel %vm57, %v2987, %v2993
    %v2996 = vrot.slane %v2994, 2
    %2998 = vrot.lane.b32.xlu0 %v2996, 96
    %v2999 = vpop.permute.xlu0 %2998
    %3000 = vrot.lane.b32.xlu0 %v2996, 64
    %v3001 = vpop.permute.xlu0 %3000
    %3002 = vrot.lane.b32.xlu0 %v2996, 32
    %v3003 = vpop.permute.xlu0 %3002
    %v3004 = vmul.f32 %v2999, %v2910
    %v3006 = vrot.slane %v3001, 6
    %v3008 = vmul.f32 %v2994, %v3006
    %v3010 = vrot.slane %v3008, 2
    %v3012 = vadd.f32 %v3004, %v3010
    %v3013 = vtanh.pop %v3012
    %v3014 = vmul.f32 %v3003, %v3013
    %3015 = vmatprep.subr.mxu0 0.0
    %3016 = vmatpush1.msra.mxu0 %v2807
    %3017 = vmatprep.subr.mxu0 0.0
    %3018 = vmatpush1.msra.mxu0 %v2808
    %3019 = vmatprep.subr.mxu0 0.0
    %3020 = vmatpush1.msra.mxu0 %v2809
    %3021 = vmatprep.subr.mxu0 0.0
    %3022 = vmatpush1.msra.mxu0 %v2810
    %3023 = vmatprep.subr.mxu0 0.0
    %3024 = vmatpush1.msra.mxu0 %v2811
    %3025 = vmatprep.subr.mxu0 0.0
    %3026 = vmatpush1.msra.mxu0 %v2812
    %3027 = vmatprep.subr.mxu0 0.0
    %3028 = vmatpush1.msra.mxu0 %v2813
    %3029 = vmatprep.subr.mxu0 0.0
    %3030 = vmatpush1.msra.mxu0 %v2814
    %3031 = vmatprep.subr.mxu0 0.0
    %3032 = vmatpush1.msra.mxu0 %v2815
    %3033 = vmatprep.subr.mxu0 0.0
    %3034 = vmatpush1.msra.mxu0 %v2816
    %3035 = vmatprep.subr.mxu0 0.0
    %3036 = vmatpush1.msra.mxu0 %v2817
    %3037 = vmatprep.subr.mxu0 0.0
    %3038 = vmatpush1.msra.mxu0 %v2818
    %3039 = vmatprep.subr.mxu0 0.0
    %3040 = vmatpush1.msra.mxu0 %v2819
    %3041 = vmatprep.subr.mxu0 0.0
    %3042 = vmatpush1.msra.mxu0 %v2820
    %3043 = vmatprep.subr.mxu0 0.0
    %3044 = vmatpush1.msra.mxu0 %v2821
    %3045 = vmatprep.subr.mxu0 0.0
    %3046 = vmatpush1.msra.mxu0 %v2822
    %3047 = vmatprep.subr.mxu0 0.0
    %3048 = vmatpush1.msra.mxu0 0.0
    %3049 = vmatprep.subr.mxu0 0.0
    %3050 = vmatpush1.msra.mxu0 0.0
    %3051 = vmatprep.subr.mxu0 0.0
    %3052 = vmatpush1.msra.mxu0 0.0
    %3053 = vmatprep.subr.mxu0 0.0
    %3054 = vmatpush1.msra.mxu0 0.0
    %3055 = vmatprep.subr.mxu0 0.0
    %3056 = vmatpush1.msra.mxu0 0.0
    %3057 = vmatprep.subr.mxu0 0.0
    %3058 = vmatpush1.msra.mxu0 0.0
    %3059 = vmatprep.subr.mxu0 0.0
    %3060 = vmatpush1.msra.mxu0 0.0
    %3061 = vmatprep.subr.mxu0 0.0
    %3062 = vmatpush1.msra.mxu0 0.0
    %3063 = vmatprep.subr.mxu0 0.0
    %3064 = vmatpush1.msra.mxu0 0.0
    %3065 = vmatprep.subr.mxu0 0.0
    %3066 = vmatpush1.msra.mxu0 0.0
    %3067 = vmatprep.subr.mxu0 0.0
    %3068 = vmatpush1.msra.mxu0 0.0
    %3069 = vmatprep.subr.mxu0 0.0
    %3070 = vmatpush1.msra.mxu0 0.0
    %3071 = vmatprep.subr.mxu0 0.0
    %3072 = vmatpush1.msra.mxu0 0.0
    %3073 = vmatprep.subr.mxu0 0.0
    %3074 = vmatpush1.msra.mxu0 0.0
    %3075 = vmatprep.subr.mxu0 0.0
    %3076 = vmatpush1.msra.mxu0 0.0
    %3077 = vmatprep.subr.mxu0 0.0
    %3078 = vmatpush1.msra.mxu0 0.0
    %3079 = vmatprep.mubr.f32.mxu0 0.0
    %3080 = vmatmul.mubr.f32.gmra.mrb[0].mxu0 %v3014
    %v3081 = vpop.f32.mrb[0].mxu0
    %v3082 = vadd.f32 0.0, %v3081
    %v3083 = vpop.f32.mrb[0].mxu0
    %3084 = vdwg.mxu0
    %v3086 = vrot.slane %v3082, 4
    %v3088 = vadd.f32 %v2798, %v3086
    %v3089 = vtanh.pop %v3088
    %v3090 = vxor.u32 %v3088, 2147483648
    %v3091 = vmul.f32 %v3090, 1.442695
    %v3092 = vpow.pop %v3091
    %v3093 = vadd.f32 %v3092, 1.0
    %v3094 = vrcp.pop %v3093
    %v3095 = vmul.f32 1.0, %v3094
    %v3096 = vsel %vm57, %v3089, %v3095
    %v3098 = vrot.slane %v3096, 4
    %3100 = vrot.lane.b32.xlu0 %v3098, 96
    %v3101 = vpop.permute.xlu0 %3100
    %3102 = vrot.lane.b32.xlu0 %v3098, 64
    %v3103 = vpop.permute.xlu0 %3102
    %3104 = vrot.lane.b32.xlu0 %v3098, 32
    %v3105 = vpop.permute.xlu0 %3104
    %v3106 = vmul.f32 %v3101, %v3012
    %v3108 = vrot.slane %v3103, 4
    %v3110 = vmul.f32 %v3096, %v3108
    %v3112 = vrot.slane %v3110, 4
    %v3114 = vadd.f32 %v3106, %v3112
    %v3115 = vtanh.pop %v3114
    %v3116 = vmul.f32 %v3105, %v3115
    %3117 = vmatprep.subr.mxu0 0.0
    %3118 = vmatpush1.msra.mxu0 %v2807
    %3119 = vmatprep.subr.mxu0 0.0
    %3120 = vmatpush1.msra.mxu0 %v2808
    %3121 = vmatprep.subr.mxu0 0.0
    %3122 = vmatpush1.msra.mxu0 %v2809
    %3123 = vmatprep.subr.mxu0 0.0
    %3124 = vmatpush1.msra.mxu0 %v2810
    %3125 = vmatprep.subr.mxu0 0.0
    %3126 = vmatpush1.msra.mxu0 %v2811
    %3127 = vmatprep.subr.mxu0 0.0
    %3128 = vmatpush1.msra.mxu0 %v2812
    %3129 = vmatprep.subr.mxu0 0.0
    %3130 = vmatpush1.msra.mxu0 %v2813
    %3131 = vmatprep.subr.mxu0 0.0
    %3132 = vmatpush1.msra.mxu0 %v2814
    %3133 = vmatprep.subr.mxu0 0.0
    %3134 = vmatpush1.msra.mxu0 %v2815
    %3135 = vmatprep.subr.mxu0 0.0
    %3136 = vmatpush1.msra.mxu0 %v2816
    %3137 = vmatprep.subr.mxu0 0.0
    %3138 = vmatpush1.msra.mxu0 %v2817
    %3139 = vmatprep.subr.mxu0 0.0
    %3140 = vmatpush1.msra.mxu0 %v2818
    %3141 = vmatprep.subr.mxu0 0.0
    %3142 = vmatpush1.msra.mxu0 %v2819
    %3143 = vmatprep.subr.mxu0 0.0
    %3144 = vmatpush1.msra.mxu0 %v2820
    %3145 = vmatprep.subr.mxu0 0.0
    %3146 = vmatpush1.msra.mxu0 %v2821
    %3147 = vmatprep.subr.mxu0 0.0
    %3148 = vmatpush1.msra.mxu0 %v2822
    %3149 = vmatprep.subr.mxu0 0.0
    %3150 = vmatpush1.msra.mxu0 0.0
    %3151 = vmatprep.subr.mxu0 0.0
    %3152 = vmatpush1.msra.mxu0 0.0
    %3153 = vmatprep.subr.mxu0 0.0
    %3154 = vmatpush1.msra.mxu0 0.0
    %3155 = vmatprep.subr.mxu0 0.0
    %3156 = vmatpush1.msra.mxu0 0.0
    %3157 = vmatprep.subr.mxu0 0.0
    %3158 = vmatpush1.msra.mxu0 0.0
    %3159 = vmatprep.subr.mxu0 0.0
    %3160 = vmatpush1.msra.mxu0 0.0
    %3161 = vmatprep.subr.mxu0 0.0
    %3162 = vmatpush1.msra.mxu0 0.0
    %3163 = vmatprep.subr.mxu0 0.0
    %3164 = vmatpush1.msra.mxu0 0.0
    %3165 = vmatprep.subr.mxu0 0.0
    %3166 = vmatpush1.msra.mxu0 0.0
    %3167 = vmatprep.subr.mxu0 0.0
    %3168 = vmatpush1.msra.mxu0 0.0
    %3169 = vmatprep.subr.mxu0 0.0
    %3170 = vmatpush1.msra.mxu0 0.0
    %3171 = vmatprep.subr.mxu0 0.0
    %3172 = vmatpush1.msra.mxu0 0.0
    %3173 = vmatprep.subr.mxu0 0.0
    %3174 = vmatpush1.msra.mxu0 0.0
    %3175 = vmatprep.subr.mxu0 0.0
    %3176 = vmatpush1.msra.mxu0 0.0
    %3177 = vmatprep.subr.mxu0 0.0
    %3178 = vmatpush1.msra.mxu0 0.0
    %3179 = vmatprep.subr.mxu0 0.0
    %3180 = vmatpush1.msra.mxu0 0.0
    %3181 = vmatprep.mubr.f32.mxu0 0.0
    %3182 = vmatmul.mubr.f32.gmra.mrb[0].mxu0 %v3116
    %v3183 = vpop.f32.mrb[0].mxu0
    %v3184 = vadd.f32 0.0, %v3183
    %v3185 = vpop.f32.mrb[0].mxu0
    %3186 = vdwg.mxu0
    %v3188 = vrot.slane %v3184, 2
    %v3190 = vadd.f32 %v2798, %v3188
    %v3191 = vtanh.pop %v3190
    %v3192 = vxor.u32 %v3190, 2147483648
    %v3193 = vmul.f32 %v3192, 1.442695
    %v3194 = vpow.pop %v3193
    %v3195 = vadd.f32 %v3194, 1.0
    %v3196 = vrcp.pop %v3195
    %v3197 = vmul.f32 1.0, %v3196
    %v3198 = vsel %vm57, %v3191, %v3197
    %v3200 = vrot.slane %v3198, 6
    %3202 = vrot.lane.b32.xlu0 %v3200, 96
    %v3203 = vpop.permute.xlu0 %3202
    %3204 = vrot.lane.b32.xlu0 %v3200, 64
    %v3205 = vpop.permute.xlu0 %3204
    %3206 = vrot.lane.b32.xlu0 %v3200, 32
    %v3207 = vpop.permute.xlu0 %3206
    %v3208 = vmul.f32 %v3203, %v3114
    %v3210 = vrot.slane %v3205, 2
    %v3212 = vmul.f32 %v3198, %v3210
    %v3214 = vrot.slane %v3212, 6
    %v3216 = vadd.f32 %v3208, %v3214
    %v3217 = vtanh.pop %v3216
    %v3218 = vmul.f32 %v3207, %v3217
    %3219 = vmatprep.subr.mxu0 0.0
    %3220 = vmatpush1.msra.mxu0 %v2807
    %3221 = vmatprep.subr.mxu0 0.0
    %3222 = vmatpush1.msra.mxu0 %v2808
    %3223 = vmatprep.subr.mxu0 0.0
    %3224 = vmatpush1.msra.mxu0 %v2809
    %3225 = vmatprep.subr.mxu0 0.0
    %3226 = vmatpush1.msra.mxu0 %v2810
    %3227 = vmatprep.subr.mxu0 0.0
    %3228 = vmatpush1.msra.mxu0 %v2811
    %3229 = vmatprep.subr.mxu0 0.0
    %3230 = vmatpush1.msra.mxu0 %v2812
    %3231 = vmatprep.subr.mxu0 0.0
    %3232 = vmatpush1.msra.mxu0 %v2813
    %3233 = vmatprep.subr.mxu0 0.0
    %3234 = vmatpush1.msra.mxu0 %v2814
    %3235 = vmatprep.subr.mxu0 0.0
    %3236 = vmatpush1.msra.mxu0 %v2815
    %3237 = vmatprep.subr.mxu0 0.0
    %3238 = vmatpush1.msra.mxu0 %v2816
    %3239 = vmatprep.subr.mxu0 0.0
    %3240 = vmatpush1.msra.mxu0 %v2817
    %3241 = vmatprep.subr.mxu0 0.0
    %3242 = vmatpush1.msra.mxu0 %v2818
    %3243 = vmatprep.subr.mxu0 0.0
    %3244 = vmatpush1.msra.mxu0 %v2819
    %3245 = vmatprep.subr.mxu0 0.0
    %3246 = vmatpush1.msra.mxu0 %v2820
    %3247 = vmatprep.subr.mxu0 0.0
    %3248 = vmatpush1.msra.mxu0 %v2821
    %3249 = vmatprep.subr.mxu0 0.0
    %3250 = vmatpush1.msra.mxu0 %v2822
    %3251 = vmatprep.subr.mxu0 0.0
    %3252 = vmatpush1.msra.mxu0 0.0
    %3253 = vmatprep.subr.mxu0 0.0
    %3254 = vmatpush1.msra.mxu0 0.0
    %3255 = vmatprep.subr.mxu0 0.0
    %3256 = vmatpush1.msra.mxu0 0.0
    %3257 = vmatprep.subr.mxu0 0.0
    %3258 = vmatpush1.msra.mxu0 0.0
    %3259 = vmatprep.subr.mxu0 0.0
    %3260 = vmatpush1.msra.mxu0 0.0
    %3261 = vmatprep.subr.mxu0 0.0
    %3262 = vmatpush1.msra.mxu0 0.0
    %3263 = vmatprep.subr.mxu0 0.0
    %3264 = vmatpush1.msra.mxu0 0.0
    %3265 = vmatprep.subr.mxu0 0.0
    %3266 = vmatpush1.msra.mxu0 0.0
    %3267 = vmatprep.subr.mxu0 0.0
    %3268 = vmatpush1.msra.mxu0 0.0
    %3269 = vmatprep.subr.mxu0 0.0
    %3270 = vmatpush1.msra.mxu0 0.0
    %3271 = vmatprep.subr.mxu0 0.0
    %3272 = vmatpush1.msra.mxu0 0.0
    %3273 = vmatprep.subr.mxu0 0.0
    %3274 = vmatpush1.msra.mxu0 0.0
    %3275 = vmatprep.subr.mxu0 0.0
    %3276 = vmatpush1.msra.mxu0 0.0
    %3277 = vmatprep.subr.mxu0 0.0
    %3278 = vmatpush1.msra.mxu0 0.0
    %3279 = vmatprep.subr.mxu0 0.0
    %3280 = vmatpush1.msra.mxu0 0.0
    %3281 = vmatprep.subr.mxu0 0.0
    %3282 = vmatpush1.msra.mxu0 0.0
    %3283 = vmatprep.mubr.f32.mxu0 0.0
    %3284 = vmatmul.mubr.f32.gmra.mrb[0].mxu0 %v3218
    %v3285 = vpop.f32.mrb[0].mxu0
    %v3286 = vadd.f32 0.0, %v3285
    %v3287 = vpop.f32.mrb[0].mxu0
    %3288 = vdwg.mxu0
    %v3289 = vadd.f32 %v2803, %v3286
    %v3290 = vtanh.pop %v3289
    %v3291 = vxor.u32 %v3289, 2147483648
    %v3292 = vmul.f32 %v3291, 1.442695
    %v3293 = vpow.pop %v3292
    %v3294 = vadd.f32 %v3293, 1.0
    %v3295 = vrcp.pop %v3294
    %v3296 = vmul.f32 1.0, %v3295
    %v3297 = vsel %vm57, %v3290, %v3296
    %3298 = vrot.lane.b32.xlu0 %v3297, 96
    %v3299 = vpop.permute.xlu0 %3298
    %3300 = vrot.lane.b32.xlu0 %v3297, 64
    %v3301 = vpop.permute.xlu0 %3300
    %3302 = vrot.lane.b32.xlu0 %v3297, 32
    %v3303 = vpop.permute.xlu0 %3302
    %v3304 = vmul.f32 %v3299, %v3216
    %v3305 = vmul.f32 %v3297, %v3301
    %v3306 = vadd.f32 %v3304, %v3305
    %v3307 = vtanh.pop %v3306
    %v3308 = vmul.f32 %v3303, %v3307
    %3309 = vmatprep.subr.mxu0 0.0
    %3310 = vmatpush1.msra.mxu0 %v2807
    %3311 = vmatprep.subr.mxu0 0.0
    %3312 = vmatpush1.msra.mxu0 %v2808
    %3313 = vmatprep.subr.mxu0 0.0
    %3314 = vmatpush1.msra.mxu0 %v2809
    %3315 = vmatprep.subr.mxu0 0.0
    %3316 = vmatpush1.msra.mxu0 %v2810
    %3317 = vmatprep.subr.mxu0 0.0
    %3318 = vmatpush1.msra.mxu0 %v2811
    %3319 = vmatprep.subr.mxu0 0.0
    %3320 = vmatpush1.msra.mxu0 %v2812
    %3321 = vmatprep.subr.mxu0 0.0
    %3322 = vmatpush1.msra.mxu0 %v2813
    %3323 = vmatprep.subr.mxu0 0.0
    %3324 = vmatpush1.msra.mxu0 %v2814
    %3325 = vmatprep.subr.mxu0 0.0
    %3326 = vmatpush1.msra.mxu0 %v2815
    %3327 = vmatprep.subr.mxu0 0.0
    %3328 = vmatpush1.msra.mxu0 %v2816
    %3329 = vmatprep.subr.mxu0 0.0
    %3330 = vmatpush1.msra.mxu0 %v2817
    %3331 = vmatprep.subr.mxu0 0.0
    %3332 = vmatpush1.msra.mxu0 %v2818
    %3333 = vmatprep.subr.mxu0 0.0
    %3334 = vmatpush1.msra.mxu0 %v2819
    %3335 = vmatprep.subr.mxu0 0.0
    %3336 = vmatpush1.msra.mxu0 %v2820
    %3337 = vmatprep.subr.mxu0 0.0
    %3338 = vmatpush1.msra.mxu0 %v2821
    %3339 = vmatprep.subr.mxu0 0.0
    %3340 = vmatpush1.msra.mxu0 %v2822
    %3341 = vmatprep.subr.mxu0 0.0
    %3342 = vmatpush1.msra.mxu0 0.0
    %3343 = vmatprep.subr.mxu0 0.0
    %3344 = vmatpush1.msra.mxu0 0.0
    %3345 = vmatprep.subr.mxu0 0.0
    %3346 = vmatpush1.msra.mxu0 0.0
    %3347 = vmatprep.subr.mxu0 0.0
    %3348 = vmatpush1.msra.mxu0 0.0
    %3349 = vmatprep.subr.mxu0 0.0
    %3350 = vmatpush1.msra.mxu0 0.0
    %3351 = vmatprep.subr.mxu0 0.0
    %3352 = vmatpush1.msra.mxu0 0.0
    %3353 = vmatprep.subr.mxu0 0.0
    %3354 = vmatpush1.msra.mxu0 0.0
    %3355 = vmatprep.subr.mxu0 0.0
    %3356 = vmatpush1.msra.mxu0 0.0
    %3357 = vmatprep.subr.mxu0 0.0
    %3358 = vmatpush1.msra.mxu0 0.0
    %3359 = vmatprep.subr.mxu0 0.0
    %3360 = vmatpush1.msra.mxu0 0.0
    %3361 = vmatprep.subr.mxu0 0.0
    %3362 = vmatpush1.msra.mxu0 0.0
    %3363 = vmatprep.subr.mxu0 0.0
    %3364 = vmatpush1.msra.mxu0 0.0
    %3365 = vmatprep.subr.mxu0 0.0
    %3366 = vmatpush1.msra.mxu0 0.0
    %3367 = vmatprep.subr.mxu0 0.0
    %3368 = vmatpush1.msra.mxu0 0.0
    %3369 = vmatprep.subr.mxu0 0.0
    %3370 = vmatpush1.msra.mxu0 0.0
    %3371 = vmatprep.subr.mxu0 0.0
    %3372 = vmatpush1.msra.mxu0 0.0
    %3373 = vmatprep.mubr.f32.mxu0 0.0
    %3374 = vmatmul.mubr.f32.gmra.mrb[0].mxu0 %v3308
    %v3375 = vpop.f32.mrb[0].mxu0
    %v3376 = vadd.f32 0.0, %v3375
    %v3377 = vpop.f32.mrb[0].mxu0
    %3378 = vdwg.mxu0
    %v3380 = vrot.slane %v3376, 6
    %v3382 = vadd.f32 %v2803, %v3380
    %v3383 = vtanh.pop %v3382
    %v3384 = vxor.u32 %v3382, 2147483648
    %v3385 = vmul.f32 %v3384, 1.442695
    %v3386 = vpow.pop %v3385
    %v3387 = vadd.f32 %v3386, 1.0
    %v3388 = vrcp.pop %v3387
    %v3389 = vmul.f32 1.0, %v3388
    %v3390 = vsel %vm57, %v3383, %v3389
    %v3392 = vrot.slane %v3390, 2
    %3394 = vrot.lane.b32.xlu0 %v3392, 96
    %v3395 = vpop.permute.xlu0 %3394
    %3396 = vrot.lane.b32.xlu0 %v3392, 64
    %v3397 = vpop.permute.xlu0 %3396
    %3398 = vrot.lane.b32.xlu0 %v3392, 32
    %v3399 = vpop.permute.xlu0 %3398
    %v3400 = vmul.f32 %v3395, %v3306
    %v3402 = vrot.slane %v3397, 6
    %v3404 = vmul.f32 %v3390, %v3402
    %v3406 = vrot.slane %v3404, 2
    %v3408 = vadd.f32 %v3400, %v3406
    %v3409 = vtanh.pop %v3408
    %v3410 = vmul.f32 %v3399, %v3409
    %3411 = vmatprep.subr.mxu0 0.0
    %3412 = vmatpush1.msra.mxu0 %v2807
    %3413 = vmatprep.subr.mxu0 0.0
    %3414 = vmatpush1.msra.mxu0 %v2808
    %3415 = vmatprep.subr.mxu0 0.0
    %3416 = vmatpush1.msra.mxu0 %v2809
    %3417 = vmatprep.subr.mxu0 0.0
    %3418 = vmatpush1.msra.mxu0 %v2810
    %3419 = vmatprep.subr.mxu0 0.0
    %3420 = vmatpush1.msra.mxu0 %v2811
    %3421 = vmatprep.subr.mxu0 0.0
    %3422 = vmatpush1.msra.mxu0 %v2812
    %3423 = vmatprep.subr.mxu0 0.0
    %3424 = vmatpush1.msra.mxu0 %v2813
    %3425 = vmatprep.subr.mxu0 0.0
    %3426 = vmatpush1.msra.mxu0 %v2814
    %3427 = vmatprep.subr.mxu0 0.0
    %3428 = vmatpush1.msra.mxu0 %v2815
    %3429 = vmatprep.subr.mxu0 0.0
    %3430 = vmatpush1.msra.mxu0 %v2816
    %3431 = vmatprep.subr.mxu0 0.0
    %3432 = vmatpush1.msra.mxu0 %v2817
    %3433 = vmatprep.subr.mxu0 0.0
    %3434 = vmatpush1.msra.mxu0 %v2818
    %3435 = vmatprep.subr.mxu0 0.0
    %3436 = vmatpush1.msra.mxu0 %v2819
    %3437 = vmatprep.subr.mxu0 0.0
    %3438 = vmatpush1.msra.mxu0 %v2820
    %3439 = vmatprep.subr.mxu0 0.0
    %3440 = vmatpush1.msra.mxu0 %v2821
    %3441 = vmatprep.subr.mxu0 0.0
    %3442 = vmatpush1.msra.mxu0 %v2822
    %3443 = vmatprep.subr.mxu0 0.0
    %3444 = vmatpush1.msra.mxu0 0.0
    %3445 = vmatprep.subr.mxu0 0.0
    %3446 = vmatpush1.msra.mxu0 0.0
    %3447 = vmatprep.subr.mxu0 0.0
    %3448 = vmatpush1.msra.mxu0 0.0
    %3449 = vmatprep.subr.mxu0 0.0
    %3450 = vmatpush1.msra.mxu0 0.0
    %3451 = vmatprep.subr.mxu0 0.0
    %3452 = vmatpush1.msra.mxu0 0.0
    %3453 = vmatprep.subr.mxu0 0.0
    %3454 = vmatpush1.msra.mxu0 0.0
    %3455 = vmatprep.subr.mxu0 0.0
    %3456 = vmatpush1.msra.mxu0 0.0
    %3457 = vmatprep.subr.mxu0 0.0
    %3458 = vmatpush1.msra.mxu0 0.0
    %3459 = vmatprep.subr.mxu0 0.0
    %3460 = vmatpush1.msra.mxu0 0.0
    %3461 = vmatprep.subr.mxu0 0.0
    %3462 = vmatpush1.msra.mxu0 0.0
    %3463 = vmatprep.subr.mxu0 0.0
    %3464 = vmatpush1.msra.mxu0 0.0
    %3465 = vmatprep.subr.mxu0 0.0
    %3466 = vmatpush1.msra.mxu0 0.0
    %3467 = vmatprep.subr.mxu0 0.0
    %3468 = vmatpush1.msra.mxu0 0.0
    %3469 = vmatprep.subr.mxu0 0.0
    %3470 = vmatpush1.msra.mxu0 0.0
    %3471 = vmatprep.subr.mxu0 0.0
    %3472 = vmatpush1.msra.mxu0 0.0
    %3473 = vmatprep.subr.mxu0 0.0
    %3474 = vmatpush1.msra.mxu0 0.0
    %3475 = vmatprep.mubr.f32.mxu0 0.0
    %3476 = vmatmul.mubr.f32.gmra.mrb[0].mxu0 %v3410
    %v3477 = vpop.f32.mrb[0].mxu0
    %v3478 = vadd.f32 0.0, %v3477
    %v3479 = vpop.f32.mrb[0].mxu0
    %3480 = vdwg.mxu0
    %v3482 = vrot.slane %v3478, 4
    %v3484 = vadd.f32 %v2803, %v3482
    %v3485 = vtanh.pop %v3484
    %v3486 = vxor.u32 %v3484, 2147483648
    %v3487 = vmul.f32 %v3486, 1.442695
    %v3488 = vpow.pop %v3487
    %v3489 = vadd.f32 %v3488, 1.0
    %v3490 = vrcp.pop %v3489
    %v3491 = vmul.f32 1.0, %v3490
    %v3492 = vsel %vm57, %v3485, %v3491
    %v3494 = vrot.slane %v3492, 4
    %3496 = vrot.lane.b32.xlu0 %v3494, 96
    %v3497 = vpop.permute.xlu0 %3496
    %3498 = vrot.lane.b32.xlu0 %v3494, 64
    %v3499 = vpop.permute.xlu0 %3498
    %3500 = vrot.lane.b32.xlu0 %v3494, 32
    %v3501 = vpop.permute.xlu0 %3500
    %v3502 = vmul.f32 %v3497, %v3408
    %v3504 = vrot.slane %v3499, 4
    %v3506 = vmul.f32 %v3492, %v3504
    %v3508 = vrot.slane %v3506, 4
    %v3510 = vadd.f32 %v3502, %v3508
    %v3511 = vtanh.pop %v3510
    %v3512 = vmul.f32 %v3501, %v3511
    %3513 = vmatprep.subr.mxu0 0.0
    %3514 = vmatpush1.msra.mxu0 %v2807
    %3515 = vmatprep.subr.mxu0 0.0
    %3516 = vmatpush1.msra.mxu0 %v2808
    %3517 = vmatprep.subr.mxu0 0.0
    %3518 = vmatpush1.msra.mxu0 %v2809
    %3519 = vmatprep.subr.mxu0 0.0
    %3520 = vmatpush1.msra.mxu0 %v2810
    %3521 = vmatprep.subr.mxu0 0.0
    %3522 = vmatpush1.msra.mxu0 %v2811
    %3523 = vmatprep.subr.mxu0 0.0
    %3524 = vmatpush1.msra.mxu0 %v2812
    %3525 = vmatprep.subr.mxu0 0.0
    %3526 = vmatpush1.msra.mxu0 %v2813
    %3527 = vmatprep.subr.mxu0 0.0
    %3528 = vmatpush1.msra.mxu0 %v2814
    %3529 = vmatprep.subr.mxu0 0.0
    %3530 = vmatpush1.msra.mxu0 %v2815
    %3531 = vmatprep.subr.mxu0 0.0
    %3532 = vmatpush1.msra.mxu0 %v2816
    %3533 = vmatprep.subr.mxu0 0.0
    %3534 = vmatpush1.msra.mxu0 %v2817
    %3535 = vmatprep.subr.mxu0 0.0
    %3536 = vmatpush1.msra.mxu0 %v2818
    %3537 = vmatprep.subr.mxu0 0.0
    %3538 = vmatpush1.msra.mxu0 %v2819
    %3539 = vmatprep.subr.mxu0 0.0
    %3540 = vmatpush1.msra.mxu0 %v2820
    %3541 = vmatprep.subr.mxu0 0.0
    %3542 = vmatpush1.msra.mxu0 %v2821
    %3543 = vmatprep.subr.mxu0 0.0
    %3544 = vmatpush1.msra.mxu0 %v2822
    %3545 = vmatprep.subr.mxu0 0.0
    %3546 = vmatpush1.msra.mxu0 0.0
    %3547 = vmatprep.subr.mxu0 0.0
    %3548 = vmatpush1.msra.mxu0 0.0
    %3549 = vmatprep.subr.mxu0 0.0
    %3550 = vmatpush1.msra.mxu0 0.0
    %3551 = vmatprep.subr.mxu0 0.0
    %3552 = vmatpush1.msra.mxu0 0.0
    %3553 = vmatprep.subr.mxu0 0.0
    %3554 = vmatpush1.msra.mxu0 0.0
    %3555 = vmatprep.subr.mxu0 0.0
    %3556 = vmatpush1.msra.mxu0 0.0
    %3557 = vmatprep.subr.mxu0 0.0
    %3558 = vmatpush1.msra.mxu0 0.0
    %3559 = vmatprep.subr.mxu0 0.0
    %3560 = vmatpush1.msra.mxu0 0.0
    %3561 = vmatprep.subr.mxu0 0.0
    %3562 = vmatpush1.msra.mxu0 0.0
    %3563 = vmatprep.subr.mxu0 0.0
    %3564 = vmatpush1.msra.mxu0 0.0
    %3565 = vmatprep.subr.mxu0 0.0
    %3566 = vmatpush1.msra.mxu0 0.0
    %3567 = vmatprep.subr.mxu0 0.0
    %3568 = vmatpush1.msra.mxu0 0.0
    %3569 = vmatprep.subr.mxu0 0.0
    %3570 = vmatpush1.msra.mxu0 0.0
    %3571 = vmatprep.subr.mxu0 0.0
    %3572 = vmatpush1.msra.mxu0 0.0
    %3573 = vmatprep.subr.mxu0 0.0
    %3574 = vmatpush1.msra.mxu0 0.0
    %3575 = vmatprep.subr.mxu0 0.0
    %3576 = vmatpush1.msra.mxu0 0.0
    %3577 = vmatprep.mubr.f32.mxu0 0.0
    %3578 = vmatmul.mubr.f32.gmra.mrb[0].mxu0 %v3512
    %v3579 = vpop.f32.mrb[0].mxu0
    %v3580 = vadd.f32 0.0, %v3579
    %v3581 = vpop.f32.mrb[0].mxu0
    %3582 = vdwg.mxu0
    %v3584 = vrot.slane %v3580, 2
    %v3586 = vadd.f32 %v2803, %v3584
    %v3587 = vtanh.pop %v3586
    %v3588 = vxor.u32 %v3586, 2147483648
    %v3589 = vmul.f32 %v3588, 1.442695
    %v3590 = vpow.pop %v3589
    %v3591 = vadd.f32 %v3590, 1.0
    %v3592 = vrcp.pop %v3591
    %v3593 = vmul.f32 1.0, %v3592
    %v3594 = vsel %vm57, %v3587, %v3593
    %v3596 = vrot.slane %v3594, 6
    %3598 = vrot.lane.b32.xlu0 %v3596, 96
    %v3599 = vpop.permute.xlu0 %3598
    %3600 = vrot.lane.b32.xlu0 %v3596, 64
    %v3601 = vpop.permute.xlu0 %3600
    %3602 = vrot.lane.b32.xlu0 %v3596, 32
    %v3603 = vpop.permute.xlu0 %3602
    %v3604 = vmul.f32 %v3599, %v3510
    %v3606 = vrot.slane %v3601, 2
    %v3608 = vmul.f32 %v3594, %v3606
    %v3610 = vrot.slane %v3608, 6
    %v3612 = vadd.f32 %v3604, %v3610
    %v3613 = vtanh.pop %v3612
    %v3614 = vmul.f32 %v3603, %v3613
    %v3615 = vld [vmem:[%s4] sm:$0x1]
    %v3617 = vlaneseq
    %v3618 = vshrl.u32 %v3617, 7
    %v3619 = vsub.s32 0, %v3618
    %v3620 = vrot.slane %v3615, %v3619
    %v3622 = vmul.f32 %v3614, %v3620
    %vm3623 = vcmask 1041408
    %v3624 = vsel %vm3623, %v3622, 0.0
    %3625 = vadd.xlane.f32.xlu0 %v3624
    %v3626 = vpop.xlane.xlu0 %3625
    %v3627 = vld [vmem:[#allocation3] sm:$0x1]
    %v3629 = vlaneseq
    %v3630 = vshrl.u32 %v3629, 7
    %v3631 = vsub.s32 0, %v3630
    %v3632 = vrot.slane %v3627, %v3631
    %v3634 = vadd.f32 %v3626, %v3632
    %v3635 = vmax.f32 %v3634, 0.0
    %vm3636 = vcmask 1024
    %3637 = vst.msk [vmem:[%s6] sm:$0x3] %vm3636, %v3635
    // Predicated region
    $region34: #{lstm_deep_predictor.1} parent=1 // pred_check
      _
    $region35: #{lstm_deep_predictor.1} parent=1 // pred_check_branch
      %3639 = sbr.rel (0) target = $region37
    $region36: #{lstm_deep_predictor.1} parent=1 // pred_region
      _
    $region37: #{lstm_deep_predictor.1} parent=1 // pred_fallthru
      _
    // Predicated region
    $region38: #{lstm_deep_predictor.1} parent=1 // pred_check
      _
    $region39: #{lstm_deep_predictor.1} parent=1 // pred_check_branch
      %3641 = sbr.rel (0) target = $region41
    $region40: #{lstm_deep_predictor.1} parent=1 // pred_region
      _
    $region41: #{lstm_deep_predictor.1} parent=1 // pred_fallthru
      _
    %3642 = vsyncpa [#allocation5], 1
    %3643 = vsyncpa [#allocation7], 1

</llo_original>
